<compile_context>
chip_gen: v7x
topology: tpu7x:2x2x1
jax: 0.10.0
libtpu: 0.0.40
codegen_flags: <defaults>
</compile_context>

<pallas_src>
import functools

import jax
import jax.numpy as jnp
from jax.experimental import pallas as pl
from jax.experimental.pallas import tpu as pltpu


# ----------------------------- Pallas kernel --------------------------------
def _conv_bn_relu_kernel(x_ref, w_ref, shift_ref, o_ref, *, kh, kw, width, hw,
                         relu):
    """One batch element per grid step.

    x_ref:     (1, HWp, Cp)      bf16  spatially-flattened, tail-padded image
    w_ref:     (KH*KW, Cp, OCp)  bf16  conv weights with BN scale folded in
    shift_ref: (1, OCp)          f32   fused BN shift
    o_ref:     (1, HW, OCp)      f32   conv output indexed by input position
    """
    ocp = o_ref.shape[-1]
    acc = jnp.zeros((hw, ocp), jnp.float32)
    # Static unroll over the KH*KW taps: each tap is a contiguous row shift of
    # the flattened image, i.e. a plain 2-D matmul on the MXU (no im2col).
    for r in range(kh * kw):
        ih, iw = divmod(r, kw)
        off = ih * width + iw                       # row shift of this tap
        xs = x_ref[0, off:off + hw, :]              # (HW, Cp) bf16
        acc = acc + jnp.dot(xs, w_ref[r], preferred_element_type=jnp.float32)
    y = acc + shift_ref[...]                        # broadcast (1, OCp)
    if relu:
        y = jnp.maximum(y, 0.0)
    o_ref[0] = y.astype(o_ref.dtype)


# ------------------------------- wrapper -------------------------------------
def conv2d_bn_relu(x_nchw, weight_ochw, bn_gamma, bn_beta, bn_mean, bn_var,
                   *, stride=1, relu=True, eps=1e-5):
    """Forward of Conv2d(in_c, out_c, k, stride, relu=True, bn=True) with BN in
    inference form.  x_nchw: (N, C, H, W) float32, VALID padding."""
    n, c, h, w = x_nchw.shape
    oc, wc, kh, kw = weight_ochw.shape
    assert wc == c
    oh = (h - kh) // stride + 1
    ow = (w - kw) // stride + 1
    assert oh > 0 and ow > 0

    # ---- fold BN (inference): scale goes into the weights, shift stays ----
    scale = bn_gamma / jnp.sqrt(bn_var + eps)                      # (OC,)
    shift = bn_beta - bn_mean * scale                              # (OC,)
    w_scaled = weight_ochw * scale[:, None, None, None]            # (OC,C,KH,KW)

    # ---- channel padding: OC -> multiple of 128 (lane-dense output stores),
    #      C -> multiple of 8 (clean contraction tiles) ----
    ocp = pl.cdiv(max(oc, 128), 128) * 128
    cp = pl.cdiv(c, 8) * 8

    w_k = jnp.transpose(w_scaled, (2, 3, 1, 0))                    # (KH,KW,C,OC)
    w_k = jnp.pad(w_k, ((0, 0), (0, 0), (0, cp - c), (0, ocp - oc)))
    w_k = w_k.reshape(kh * kw, cp, ocp).astype(jnp.bfloat16)
    shift_p = jnp.pad(shift, (0, ocp - oc)).reshape(1, ocp).astype(jnp.float32)

    # ---- flatten spatial dims so every (ih, iw) tap is a contiguous row shift
    #      of one (H*W, C) matrix: no im2col in HBM, x is DMA'd once ----
    hw = h * w
    max_off = (kh - 1) * w + (kw - 1)
    hwp = pl.cdiv(hw + max_off, 8) * 8
    x_flat = jnp.transpose(x_nchw, (0, 2, 3, 1)).reshape(n, hw, c)
    x_flat = jnp.pad(x_flat, ((0, 0), (0, hwp - hw), (0, cp - c)))
    x_flat = x_flat.astype(jnp.bfloat16)

    kernel = functools.partial(_conv_bn_relu_kernel, kh=kh, kw=kw,
                               width=w, hw=hw, relu=relu)
    out = pl.pallas_call(
        kernel,
        out_shape=jax.ShapeDtypeStruct((n, hw, ocp), jnp.float32),
        grid_spec=pltpu.PrefetchScalarGridSpec(
            num_scalar_prefetch=0,
            grid=(n,),                                   # one image per step
            in_specs=[
                pl.BlockSpec((1, hwp, cp), lambda b: (b, 0, 0)),
                pl.BlockSpec((kh * kw, cp, ocp), lambda b: (0, 0, 0)),
                pl.BlockSpec((1, ocp), lambda b: (0, 0)),
            ],
            out_specs=pl.BlockSpec((1, hw, ocp), lambda b: (b, 0, 0)),
        ),
        compiler_params=pltpu.CompilerParams(
            dimension_semantics=("parallel",),           # shards over 2 TCs on v7x
            vmem_limit_bytes=32 * 1024 * 1024),
    )(x_flat, w_k, shift_p)

    # Row q of `out` holds the conv result whose receptive field starts at
    # input pixel (q // W, q % W); pick the stride grid, drop channel padding.
    out = out.reshape(n, h, w, ocp)
    out = out[:, 0:(oh - 1) * stride + 1:stride,
              0:(ow - 1) * stride + 1:stride, :oc]
    # TODO(synk): stride > 1 computes the dense (stride-1) position map and
    # subsamples; an efficient strided path would subsample inside the kernel.
    return jnp.transpose(out, (0, 3, 1, 2))                        # NCHW


# ------------------------------ parameters ----------------------------------
def xavier_uniform_conv_weight(key, out_c, in_c, kh, kw):
    fan_in = in_c * kh * kw
    fan_out = out_c * kh * kw
    bound = (6.0 / (fan_in + fan_out)) ** 0.5
    return jax.random.uniform(key, (out_c, in_c, kh, kw), jnp.float32,
                              minval=-bound, maxval=bound)


if __name__ == "__main__":
    # Module config: Conv2d(in_channels=4, out_channels=8, kernel_size=3,
    #                       stride=1, relu=True, bn=True)  -> conv has no bias.
    N, C, H, W = 2, 4, 16, 16
    OC, KH, KW, STRIDE = 8, 3, 3, 1

    key = jax.random.PRNGKey(0)
    k_x, k_w = jax.random.split(key)
    x = jax.random.normal(k_x, (N, C, H, W), jnp.float32)
    weight = xavier_uniform_conv_weight(k_w, OC, C, KH, KW)

    # BatchNorm2d params as produced by init_bn(): gamma=1, beta=0,
    # running_mean=0, running_var=1 (inference form).
    gamma = jnp.ones((OC,), jnp.float32)
    beta = jnp.zeros((OC,), jnp.float32)
    running_mean = jnp.zeros((OC,), jnp.float32)
    running_var = jnp.ones((OC,), jnp.float32)

    y = conv2d_bn_relu(x, weight, gamma, beta, running_mean, running_var,
                       stride=STRIDE, relu=True)
    y = jax.block_until_ready(y)
    assert y.shape == (N, OC, 14, 14), y.shape

    # Reference 1 (module semantics, f32): loose tolerance because the kernel
    # uses bf16 MXU operands with f32 accumulation.
    scale = gamma / jnp.sqrt(running_var + 1e-5)
    shift = beta - running_mean * scale
    ref32 = jax.lax.conv_general_dilated(
        x, weight, window_strides=(STRIDE, STRIDE), padding="VALID",
        dimension_numbers=("NCHW", "OIHW", "NCHW"))
    ref32 = jnp.maximum(ref32 * scale.reshape(1, OC, 1, 1)
                        + shift.reshape(1, OC, 1, 1), 0.0)
    assert jnp.allclose(y, ref32, atol=5e-2, rtol=5e-2), \
        float(jnp.max(jnp.abs(y - ref32)))

    # Reference 2 (same bf16-rounded operands, f32 conv): tight tolerance —
    # validates the shifted-matmul indexing / BN fusion exactly.
    w_bf = (weight * scale.reshape(OC, 1, 1, 1)).astype(jnp.bfloat16) \
                                                .astype(jnp.float32)
    x_bf = x.astype(jnp.bfloat16).astype(jnp.float32)
    refbf = jax.lax.conv_general_dilated(
        x_bf, w_bf, window_strides=(STRIDE, STRIDE), padding="VALID",
        dimension_numbers=("NCHW", "OIHW", "NCHW"),
        precision=jax.lax.Precision.HIGHEST)
    refbf = jnp.maximum(refbf + shift.reshape(1, OC, 1, 1), 0.0)
    assert jnp.allclose(y, refbf, atol=2e-3, rtol=2e-3), \
        float(jnp.max(jnp.abs(y - refbf)))

    print("KERNEL_OK")
</pallas_src>

<mosaic_0001>
module attributes {stable_mosaic.version = 11 : i64} {
  func.func @_conv_bn_relu_kernel(%arg0: i32, %arg1: memref<1x296x8xbf16, #tpu.memory_space<vmem>>, %arg2: memref<9x8x128xbf16, #tpu.memory_space<vmem>>, %arg3: memref<1x128xf32, #tpu.memory_space<vmem>>, %arg4: memref<1x256x128xf32, #tpu.memory_space<vmem>>) attributes {dimension_semantics = [#tpu.dimension_semantics<parallel>], iteration_bounds = array<i64: 2>, scalar_prefetch = 0 : i64, scratch_operands = 0 : i64, tpu.core_type = #tpu.core_type<tc>, window_params = [{transform_indices = @transform_0, window_bounds = array<i64: 1, 296, 8>}, {pipeline_mode = #tpu.pipeline_mode<synchronous>, transform_indices = @transform_1, window_bounds = array<i64: 9, 8, 128>}, {pipeline_mode = #tpu.pipeline_mode<synchronous>, transform_indices = @transform_2, window_bounds = array<i64: 1, 128>}, {transform_indices = @transform_3, window_bounds = array<i64: 1, 256, 128>}]} {
    %cst = arith.constant 0.000000e+00 : f32
    %0 = vector.broadcast %cst : f32 to vector<256x128xf32>
    %c0 = arith.constant 0 : index
    %c0_0 = arith.constant 0 : index
    %c0_1 = arith.constant 0 : index
    %1 = vector.load %arg1[%c0, %c0_0, %c0_1] : memref<1x296x8xbf16, #tpu.memory_space<vmem>>, vector<1x256x8xbf16>
    %2 = vector.shape_cast %1 : vector<1x256x8xbf16> to vector<256x8xbf16>
    %c0_2 = arith.constant 0 : index
    %c0_3 = arith.constant 0 : index
    %c0_4 = arith.constant 0 : index
    %3 = vector.load %arg2[%c0_2, %c0_3, %c0_4] : memref<9x8x128xbf16, #tpu.memory_space<vmem>>, vector<1x8x128xbf16>
    %4 = vector.shape_cast %3 : vector<1x8x128xbf16> to vector<8x128xbf16>
    %cst_5 = arith.constant dense<0.000000e+00> : vector<256x128xf32>
    %5 = tpu.matmul %2, %4, %cst_5 {dimension_numbers = #tpu.dot_dimension_numbers<[1], [0], [0], [1], [0, 0, 1, 1], [], []>} : vector<256x8xbf16>, vector<8x128xbf16>, vector<256x128xf32> -> vector<256x128xf32>
    %6 = arith.addf %0, %5 : vector<256x128xf32>
    %c0_6 = arith.constant 0 : index
    %c1 = arith.constant 1 : index
    %c0_7 = arith.constant 0 : index
    %7 = vector.load %arg1[%c0_6, %c1, %c0_7] : memref<1x296x8xbf16, #tpu.memory_space<vmem>>, vector<1x256x8xbf16>
    %8 = vector.shape_cast %7 : vector<1x256x8xbf16> to vector<256x8xbf16>
    %c1_8 = arith.constant 1 : index
    %c0_9 = arith.constant 0 : index
    %c0_10 = arith.constant 0 : index
    %9 = vector.load %arg2[%c1_8, %c0_9, %c0_10] : memref<9x8x128xbf16, #tpu.memory_space<vmem>>, vector<1x8x128xbf16>
    %10 = vector.shape_cast %9 : vector<1x8x128xbf16> to vector<8x128xbf16>
    %cst_11 = arith.constant dense<0.000000e+00> : vector<256x128xf32>
    %11 = tpu.matmul %8, %10, %cst_11 {dimension_numbers = #tpu.dot_dimension_numbers<[1], [0], [0], [1], [0, 0, 1, 1], [], []>} : vector<256x8xbf16>, vector<8x128xbf16>, vector<256x128xf32> -> vector<256x128xf32>
    %12 = arith.addf %6, %11 : vector<256x128xf32>
    %c0_12 = arith.constant 0 : index
    %c2 = arith.constant 2 : index
    %c0_13 = arith.constant 0 : index
    %13 = vector.load %arg1[%c0_12, %c2, %c0_13] : memref<1x296x8xbf16, #tpu.memory_space<vmem>>, vector<1x256x8xbf16>
    %14 = vector.shape_cast %13 : vector<1x256x8xbf16> to vector<256x8xbf16>
    %c2_14 = arith.constant 2 : index
    %c0_15 = arith.constant 0 : index
    %c0_16 = arith.constant 0 : index
    %15 = vector.load %arg2[%c2_14, %c0_15, %c0_16] : memref<9x8x128xbf16, #tpu.memory_space<vmem>>, vector<1x8x128xbf16>
    %16 = vector.shape_cast %15 : vector<1x8x128xbf16> to vector<8x128xbf16>
    %cst_17 = arith.constant dense<0.000000e+00> : vector<256x128xf32>
    %17 = tpu.matmul %14, %16, %cst_17 {dimension_numbers = #tpu.dot_dimension_numbers<[1], [0], [0], [1], [0, 0, 1, 1], [], []>} : vector<256x8xbf16>, vector<8x128xbf16>, vector<256x128xf32> -> vector<256x128xf32>
    %18 = arith.addf %12, %17 : vector<256x128xf32>
    %c0_18 = arith.constant 0 : index
    %c16 = arith.constant 16 : index
    %c0_19 = arith.constant 0 : index
    %19 = vector.load %arg1[%c0_18, %c16, %c0_19] : memref<1x296x8xbf16, #tpu.memory_space<vmem>>, vector<1x256x8xbf16>
    %20 = vector.shape_cast %19 : vector<1x256x8xbf16> to vector<256x8xbf16>
    %c3 = arith.constant 3 : index
    %c0_20 = arith.constant 0 : index
    %c0_21 = arith.constant 0 : index
    %21 = vector.load %arg2[%c3, %c0_20, %c0_21] : memref<9x8x128xbf16, #tpu.memory_space<vmem>>, vector<1x8x128xbf16>
    %22 = vector.shape_cast %21 : vector<1x8x128xbf16> to vector<8x128xbf16>
    %cst_22 = arith.constant dense<0.000000e+00> : vector<256x128xf32>
    %23 = tpu.matmul %20, %22, %cst_22 {dimension_numbers = #tpu.dot_dimension_numbers<[1], [0], [0], [1], [0, 0, 1, 1], [], []>} : vector<256x8xbf16>, vector<8x128xbf16>, vector<256x128xf32> -> vector<256x128xf32>
    %24 = arith.addf %18, %23 : vector<256x128xf32>
    %c0_23 = arith.constant 0 : index
    %c17 = arith.constant 17 : index
    %c0_24 = arith.constant 0 : index
    %25 = vector.load %arg1[%c0_23, %c17, %c0_24] : memref<1x296x8xbf16, #tpu.memory_space<vmem>>, vector<1x256x8xbf16>
    %26 = vector.shape_cast %25 : vector<1x256x8xbf16> to vector<256x8xbf16>
    %c4 = arith.constant 4 : index
    %c0_25 = arith.constant 0 : index
    %c0_26 = arith.constant 0 : index
    %27 = vector.load %arg2[%c4, %c0_25, %c0_26] : memref<9x8x128xbf16, #tpu.memory_space<vmem>>, vector<1x8x128xbf16>
    %28 = vector.shape_cast %27 : vector<1x8x128xbf16> to vector<8x128xbf16>
    %cst_27 = arith.constant dense<0.000000e+00> : vector<256x128xf32>
    %29 = tpu.matmul %26, %28, %cst_27 {dimension_numbers = #tpu.dot_dimension_numbers<[1], [0], [0], [1], [0, 0, 1, 1], [], []>} : vector<256x8xbf16>, vector<8x128xbf16>, vector<256x128xf32> -> vector<256x128xf32>
    %30 = arith.addf %24, %29 : vector<256x128xf32>
    %c0_28 = arith.constant 0 : index
    %c18 = arith.constant 18 : index
    %c0_29 = arith.constant 0 : index
    %31 = vector.load %arg1[%c0_28, %c18, %c0_29] : memref<1x296x8xbf16, #tpu.memory_space<vmem>>, vector<1x256x8xbf16>
    %32 = vector.shape_cast %31 : vector<1x256x8xbf16> to vector<256x8xbf16>
    %c5 = arith.constant 5 : index
    %c0_30 = arith.constant 0 : index
    %c0_31 = arith.constant 0 : index
    %33 = vector.load %arg2[%c5, %c0_30, %c0_31] : memref<9x8x128xbf16, #tpu.memory_space<vmem>>, vector<1x8x128xbf16>
    %34 = vector.shape_cast %33 : vector<1x8x128xbf16> to vector<8x128xbf16>
    %cst_32 = arith.constant dense<0.000000e+00> : vector<256x128xf32>
    %35 = tpu.matmul %32, %34, %cst_32 {dimension_numbers = #tpu.dot_dimension_numbers<[1], [0], [0], [1], [0, 0, 1, 1], [], []>} : vector<256x8xbf16>, vector<8x128xbf16>, vector<256x128xf32> -> vector<256x128xf32>
    %36 = arith.addf %30, %35 : vector<256x128xf32>
    %c0_33 = arith.constant 0 : index
    %c32 = arith.constant 32 : index
    %c0_34 = arith.constant 0 : index
    %37 = vector.load %arg1[%c0_33, %c32, %c0_34] : memref<1x296x8xbf16, #tpu.memory_space<vmem>>, vector<1x256x8xbf16>
    %38 = vector.shape_cast %37 : vector<1x256x8xbf16> to vector<256x8xbf16>
    %c6 = arith.constant 6 : index
    %c0_35 = arith.constant 0 : index
    %c0_36 = arith.constant 0 : index
    %39 = vector.load %arg2[%c6, %c0_35, %c0_36] : memref<9x8x128xbf16, #tpu.memory_space<vmem>>, vector<1x8x128xbf16>
    %40 = vector.shape_cast %39 : vector<1x8x128xbf16> to vector<8x128xbf16>
    %cst_37 = arith.constant dense<0.000000e+00> : vector<256x128xf32>
    %41 = tpu.matmul %38, %40, %cst_37 {dimension_numbers = #tpu.dot_dimension_numbers<[1], [0], [0], [1], [0, 0, 1, 1], [], []>} : vector<256x8xbf16>, vector<8x128xbf16>, vector<256x128xf32> -> vector<256x128xf32>
    %42 = arith.addf %36, %41 : vector<256x128xf32>
    %c0_38 = arith.constant 0 : index
    %c33 = arith.constant 33 : index
    %c0_39 = arith.constant 0 : index
    %43 = vector.load %arg1[%c0_38, %c33, %c0_39] : memref<1x296x8xbf16, #tpu.memory_space<vmem>>, vector<1x256x8xbf16>
    %44 = vector.shape_cast %43 : vector<1x256x8xbf16> to vector<256x8xbf16>
    %c7 = arith.constant 7 : index
    %c0_40 = arith.constant 0 : index
    %c0_41 = arith.constant 0 : index
    %45 = vector.load %arg2[%c7, %c0_40, %c0_41] : memref<9x8x128xbf16, #tpu.memory_space<vmem>>, vector<1x8x128xbf16>
    %46 = vector.shape_cast %45 : vector<1x8x128xbf16> to vector<8x128xbf16>
    %cst_42 = arith.constant dense<0.000000e+00> : vector<256x128xf32>
    %47 = tpu.matmul %44, %46, %cst_42 {dimension_numbers = #tpu.dot_dimension_numbers<[1], [0], [0], [1], [0, 0, 1, 1], [], []>} : vector<256x8xbf16>, vector<8x128xbf16>, vector<256x128xf32> -> vector<256x128xf32>
    %48 = arith.addf %42, %47 : vector<256x128xf32>
    %c0_43 = arith.constant 0 : index
    %c34 = arith.constant 34 : index
    %c0_44 = arith.constant 0 : index
    %49 = vector.load %arg1[%c0_43, %c34, %c0_44] : memref<1x296x8xbf16, #tpu.memory_space<vmem>>, vector<1x256x8xbf16>
    %50 = vector.shape_cast %49 : vector<1x256x8xbf16> to vector<256x8xbf16>
    %c8 = arith.constant 8 : index
    %c0_45 = arith.constant 0 : index
    %c0_46 = arith.constant 0 : index
    %51 = vector.load %arg2[%c8, %c0_45, %c0_46] : memref<9x8x128xbf16, #tpu.memory_space<vmem>>, vector<1x8x128xbf16>
    %52 = vector.shape_cast %51 : vector<1x8x128xbf16> to vector<8x128xbf16>
    %cst_47 = arith.constant dense<0.000000e+00> : vector<256x128xf32>
    %53 = tpu.matmul %50, %52, %cst_47 {dimension_numbers = #tpu.dot_dimension_numbers<[1], [0], [0], [1], [0, 0, 1, 1], [], []>} : vector<256x8xbf16>, vector<8x128xbf16>, vector<256x128xf32> -> vector<256x128xf32>
    %54 = arith.addf %48, %53 : vector<256x128xf32>
    %c0_48 = arith.constant 0 : index
    %c0_49 = arith.constant 0 : index
    %55 = vector.load %arg3[%c0_48, %c0_49] : memref<1x128xf32, #tpu.memory_space<vmem>>, vector<1x128xf32>
    %56 = vector.broadcast %55 : vector<1x128xf32> to vector<256x128xf32>
    %57 = arith.addf %54, %56 : vector<256x128xf32>
    %cst_50 = arith.constant 0.000000e+00 : f32
    %58 = vector.broadcast %cst_50 : f32 to vector<256x128xf32>
    %59 = arith.maximumf %57, %58 : vector<256x128xf32>
    %c0_51 = arith.constant 0 : index
    %c0_52 = arith.constant 0 : index
    %c0_53 = arith.constant 0 : index
    %60 = vector.load %arg4[%c0_51, %c0_52, %c0_53] : memref<1x256x128xf32, #tpu.memory_space<vmem>>, vector<1x256x128xf32>
    %61 = vector.shape_cast %60 : vector<1x256x128xf32> to vector<256x128xf32>
    %62 = vector.shape_cast %59 : vector<256x128xf32> to vector<1x256x128xf32>
    tpu.vector_store %arg4[%c0_51, %c0_52, %c0_53], %62 {strides = array<i32>} : memref<1x256x128xf32, #tpu.memory_space<vmem>>, vector<1x256x128xf32>,
    return
  }
  func.func @transform_0(%arg0: i32) -> (i32, i32, i32) {
    %c0_i32 = arith.constant 0 : i32
    %c0_i32_0 = arith.constant 0 : i32
    %c0_i32_1 = arith.constant 0 : i32
    return %arg0, %c0_i32, %c0_i32_0 : i32, i32, i32
  }
  func.func @transform_1(%arg0: i32) -> (i32, i32, i32) {
    %c0_i32 = arith.constant 0 : i32
    %c0_i32_0 = arith.constant 0 : i32
    %c0_i32_1 = arith.constant 0 : i32
    %c0_i32_2 = arith.constant 0 : i32
    return %c0_i32, %c0_i32_0, %c0_i32_1 : i32, i32, i32
  }
  func.func @transform_2(%arg0: i32) -> (i32, i32) {
    %c0_i32 = arith.constant 0 : i32
    %c0_i32_0 = arith.constant 0 : i32
    %c0_i32_1 = arith.constant 0 : i32
    return %c0_i32, %c0_i32_0 : i32, i32
  }
  func.func @transform_3(%arg0: i32) -> (i32, i32, i32) {
    %c0_i32 = arith.constant 0 : i32
    %c0_i32_0 = arith.constant 0 : i32
    %c0_i32_1 = arith.constant 0 : i32
    return %arg0, %c0_i32, %c0_i32_0 : i32, i32, i32
  }
}

</mosaic_0001>

<llo_original>
// kernel: tpu_custom_call.1
$region0: #{tpu_custom_call.1}
  #allocation0 [shape = 'u32[]', space=smem, size = 0x4, offset = 0x4, fixed_abs, tag = 'smem constant byte address 0x4 - core index']
  #allocation1 [shape = 'u32[144,128]{1,0:T(1,128)}', space=vmem, size = 0x12000, scoped, tag = 'internal scratch']
  %s0 = inlined_call_operand.vmem [shape: bf16[2,296,8], index: 0, kind: input, shape index: {}]
  %s1 = inlined_call_operand.vmem [shape: bf16[9,8,128], index: 1, kind: input, shape index: {}]
  %s2 = inlined_call_operand.vmem [shape: f32[1,128], index: 2, kind: input, shape index: {}]
  %s3 = inlined_call_operand.hbm [shape: f32[2,256,128], index: 3, kind: output, shape index: {}]
  %s4 = sld [smem:[#allocation0]]
  $region45: #{tpu_custom_call.1} parent=0
    _
  %s6 = ssub.s32 1, %s4
  %s7 = scalar_select 0, %s6, %s4
  $region1: #{tpu_custom_call.1} parent=0
    #allocation2 [shape = 'u8[262144]{0}', space=vmem, size = 0x40000, scoped, tag = 'output window, operand 0']
    #allocation3 [shape = 's32[2]{0}', space=sflag, size = 0x8, scoped, tag = 'scoped memory for tpu_custom_call.1']
    %8 = vsyncpa [#allocation3], 0
    %s9 = scalar_lea.sflag [#allocation3], 1
    %10 = vsyncpa %s9, 0
    loop: start=0, step=1, limit=4
    $region2: #{tpu_custom_call.1} parent=1 // loop_pre_header
      _
    $region3: #{tpu_custom_call.1} parent=1 // loop_header
      %s12 = sphi 0, %s16
      %p13 = scmp.ge.s32.totalorder %s12, 4
      %s22 = sphi 0, %s24
      %s25 = sphi 0, %s22
      %s26 = sphi 0, %s25
      %s42 = sphi 0, %s26
      %s46 = sphi 0, %s46
      %s48 = sphi 0, %s46
      %s49 = sphi 0, %s48
      %s63 = sphi 0, %s49
      %s67 = sphi 0, %s67
      %s69 = sphi 0, %s67
      %s70 = sphi 0, %s69
      %s84 = sphi 0, %s70
      %s90 = sphi 0, %s92
      %s93 = sphi 0, %s90
      %s94 = sphi 0, %s93
      %s110 = sphi 0, %s94
    $region4: #{tpu_custom_call.1} parent=1 // loop_header_branch
      %15 = sbr.rel (%p13) target = $region8
    $region5: #{tpu_custom_call.1} parent=1 // loop_body
      %s17 = ssub.s32 %s12, 1
      %s18 = ssub.s32 %s12, 2
      %s19 = sadd.s32 %s12, 1
      %s20 = ssub.s32 %s12, %s19
      %p21 = scmp.eq.s32.totalorder %s20, 0
      %s23 = sadd.s32 %s22, 1
      %s24 = scalar_select %p21, %s22, %s23
      %p27 = pneg %p21
      %p28 = scmp.eq.s32.totalorder %s12, 1
      %p29 = por %p27, %p28
      %p30 = scmp.ne.s32.totalorder %s22, %s25
      %p31 = scmp.eq.s32.totalorder %s12, 0
      %p32 = por %p30, %p31
      %p33 = scmp.ne.s32.totalorder %s22, %s25
      %p34 = scmp.eq.s32.totalorder %s17, 1
      %p35 = por %p33, %p34
      %p36 = scmp.ne.s32.totalorder %s25, %s26
      %p37 = scmp.eq.s32.totalorder %s17, 0
      %p38 = por %p36, %p37
      %p39 = scmp.ne.s32.totalorder %s25, %s26
      %p40 = scmp.eq.s32.totalorder %s18, 1
      %p41 = por %p39, %p40
      %p43 = scmp.ne.s32.totalorder %s26, %s42
      %p44 = scmp.eq.s32.totalorder %s18, 0
      %p45 = por %p43, %p44
      %s47 = sadd.s32 %s46, 1
      %p50 = scmp.eq.s32.totalorder %s12, 1
      %p51 = scmp.ne.s32.totalorder %s46, %s48
      %p52 = scmp.eq.s32.totalorder %s12, 0
      %p53 = por %p51, %p52
      %p54 = scmp.ne.s32.totalorder %s46, %s48
      %p55 = scmp.eq.s32.totalorder %s17, 1
      %p56 = por %p54, %p55
      %p57 = scmp.ne.s32.totalorder %s48, %s49
      %p58 = scmp.eq.s32.totalorder %s17, 0
      %p59 = por %p57, %p58
      %p60 = scmp.ne.s32.totalorder %s48, %s49
      %p61 = scmp.eq.s32.totalorder %s18, 1
      %p62 = por %p60, %p61
      %p64 = scmp.ne.s32.totalorder %s49, %s63
      %p65 = scmp.eq.s32.totalorder %s18, 0
      %p66 = por %p64, %p65
      %s68 = sadd.s32 %s67, 1
      %p71 = scmp.eq.s32.totalorder %s12, 1
      %p72 = scmp.ne.s32.totalorder %s67, %s69
      %p73 = scmp.eq.s32.totalorder %s12, 0
      %p74 = por %p72, %p73
      %p75 = scmp.ne.s32.totalorder %s67, %s69
      %p76 = scmp.eq.s32.totalorder %s17, 1
      %p77 = por %p75, %p76
      %p78 = scmp.ne.s32.totalorder %s69, %s70
      %p79 = scmp.eq.s32.totalorder %s17, 0
      %p80 = por %p78, %p79
      %p81 = scmp.ne.s32.totalorder %s69, %s70
      %p82 = scmp.eq.s32.totalorder %s18, 1
      %p83 = por %p81, %p82
      %p85 = scmp.ne.s32.totalorder %s70, %s84
      %p86 = scmp.eq.s32.totalorder %s18, 0
      %p87 = por %p85, %p86
      %s88 = ssub.s32 %s12, %s19
      %p89 = scmp.eq.s32.totalorder %s88, 0
      %s91 = sadd.s32 %s90, 1
      %s92 = scalar_select %p89, %s90, %s91
      %p95 = pneg %p89
      %p96 = scmp.eq.s32.totalorder %s12, 1
      %p97 = por %p95, %p96
      %p98 = scmp.ne.s32.totalorder %s90, %s93
      %p99 = scmp.eq.s32.totalorder %s12, 0
      %p100 = por %p98, %p99
      %p101 = scmp.ne.s32.totalorder %s90, %s93
      %p102 = scmp.eq.s32.totalorder %s17, 1
      %p103 = por %p101, %p102
      %p104 = scmp.ne.s32.totalorder %s93, %s94
      %p105 = scmp.eq.s32.totalorder %s17, 0
      %p106 = por %p104, %p105
      %p107 = scmp.ne.s32.totalorder %s93, %s94
      %p108 = scmp.eq.s32.totalorder %s18, 1
      %p109 = por %p107, %p108
      %p111 = scmp.ne.s32.totalorder %s94, %s110
      %p112 = scmp.eq.s32.totalorder %s18, 0
      %p113 = por %p111, %p112
      %p114 = scmp.le.s32.totalorder 1, %s12
      %p115 = scmp.lt.s32.totalorder %s12, 3
      %p116 = pnand %p114, %p115
      %p117 = pneg %p116
      // Predicated region
      $region9: #{tpu_custom_call.1} parent=5 // pred_check
        _
      $region10: #{tpu_custom_call.1} parent=5 // pred_check_branch
        %119 = sbr.rel (%p116) target = $region12
      $region11: #{tpu_custom_call.1} parent=5 // pred_region
        %s120 = ssub.s32 %s12, 1
        // Predicated region
        $region13: #{tpu_custom_call.1} parent=11 // pred_check
          %p121 = pneg %p59
        $region14: #{tpu_custom_call.1} parent=11 // pred_check_branch
          %123 = sbr.rel (%p121) target = $region16
        $region15: #{tpu_custom_call.1} parent=11 // pred_region
          _
        $region16: #{tpu_custom_call.1} parent=11 // pred_fallthru
          _
        // Predicated region
        $region17: #{tpu_custom_call.1} parent=11 // pred_check
          %p124 = pneg %p80
        $region18: #{tpu_custom_call.1} parent=11 // pred_check_branch
          %126 = sbr.rel (%p124) target = $region20
        $region19: #{tpu_custom_call.1} parent=11 // pred_region
          _
        $region20: #{tpu_custom_call.1} parent=11 // pred_fallthru
          _
      $region12: #{tpu_custom_call.1} parent=5 // pred_fallthru
        _
      %p127 = scmp.lt.s32.totalorder %s12, 2
      // Predicated region
      $region21: #{tpu_custom_call.1} parent=5 // pred_check
        %p128 = pneg %p127
      $region22: #{tpu_custom_call.1} parent=5 // pred_check_branch
        %130 = sbr.rel (%p128) target = $region24
      $region23: #{tpu_custom_call.1} parent=5 // pred_region
        // Predicated region
        $region25: #{tpu_custom_call.1} parent=23 // pred_check
          %p131 = pneg %p32
        $region26: #{tpu_custom_call.1} parent=23 // pred_check_branch
          %133 = sbr.rel (%p131) target = $region28
        $region27: #{tpu_custom_call.1} parent=23 // pred_region
          %p134 = scmp.lt.s32.totalorder %s12, 1
          %s135 = scalar_select %p134, %s12, 1
          %s136 = smul.addr %s135, 37
          %s137 = smul.addr %s136, 4
          %s138 = scalar_lea.vmem %s0, %s137
        $region28: #{tpu_custom_call.1} parent=23 // pred_fallthru
          _
      $region24: #{tpu_custom_call.1} parent=5 // pred_fallthru
        _
      %p139 = scmp.le.s32.totalorder 1, %s12
      %p140 = scmp.lt.s32.totalorder %s12, 3
      %p141 = pnand %p139, %p140
      %p142 = pneg %p141
      // Predicated region
      $region29: #{tpu_custom_call.1} parent=5 // pred_check
        _
      $region30: #{tpu_custom_call.1} parent=5 // pred_check_branch
        %144 = sbr.rel (%p141) target = $region32
      $region31: #{tpu_custom_call.1} parent=5 // pred_region
        %s145 = ssub.s32 %s12, 1
        %p146 = scmp.lt.s32.totalorder %s17, 1
        %s147 = scalar_select %p146, %s17, 1
        %s148 = smul.addr %s147, 37
        %s149 = smul.addr %s148, 4
        %s150 = scalar_lea.vmem %s0, %s149
        %p151 = pneg %p38
        %p152 = pneg %p35
        %p153 = pneg %p59
        %p154 = pneg %p56
        %p155 = pneg %p80
        %p156 = pneg %p77
        %p157 = pneg %p106
        %p158 = pneg %p103
        %s159 = sand.u32 %s93, 1
        %s160 = scalar_lea.sflag [#allocation3], %s159
        %s161 = sand.u32 %s93, 1
        %s162 = smul.addr %s161, 256
        %s163 = scalar_lea.vmem [#allocation2], %s162
        %p164 = scmp.lt.s32.totalorder %s17, 1
        %s165 = scalar_select %p164, %s17, 1
        %s166 = smul.addr %s165, 37
        %s167 = smul.addr %s166, 4
        %s168 = scalar_lea.vmem %s0, %s167
        %v170 = vld [vmem:[%s168] sm:$0xf]
        %v171 = vld [vmem:[%s168 + $0x4] sm:$0xf]
        %v172 = vld [vmem:[%s168 + $0x8] sm:$0xf]
        %v173 = vld [vmem:[%s168 + $0xc] sm:$0xf]
        %v174 = vld [vmem:[%s168 + $0x10] sm:$0xf]
        %v175 = vld [vmem:[%s168 + $0x14] sm:$0xf]
        %v176 = vld [vmem:[%s168 + $0x18] sm:$0xf]
        %v177 = vld [vmem:[%s168 + $0x1c] sm:$0xf]
        %v178 = vld [vmem:[%s168 + $0x20] sm:$0xf]
        %v179 = vld [vmem:[%s168 + $0x24] sm:$0xf]
        %v180 = vld [vmem:[%s168 + $0x28] sm:$0xf]
        %v181 = vld [vmem:[%s168 + $0x2c] sm:$0xf]
        %v182 = vld [vmem:[%s168 + $0x30] sm:$0xf]
        %v183 = vld [vmem:[%s168 + $0x34] sm:$0xf]
        %v184 = vld [vmem:[%s168 + $0x38] sm:$0xf]
        %v185 = vld [vmem:[%s168 + $0x3c] sm:$0xf]
        %v186 = vld [vmem:[%s168 + $0x40] sm:$0xf]
        %v187 = vld [vmem:[%s168 + $0x44] sm:$0xf]
        %v188 = vld [vmem:[%s168 + $0x48] sm:$0xf]
        %v189 = vld [vmem:[%s168 + $0x4c] sm:$0xf]
        %v190 = vld [vmem:[%s168 + $0x50] sm:$0xf]
        %v191 = vld [vmem:[%s168 + $0x54] sm:$0xf]
        %v192 = vld [vmem:[%s168 + $0x58] sm:$0xf]
        %v193 = vld [vmem:[%s168 + $0x5c] sm:$0xf]
        %v194 = vld [vmem:[%s168 + $0x60] sm:$0xf]
        %v195 = vld [vmem:[%s168 + $0x64] sm:$0xf]
        %v196 = vld [vmem:[%s168 + $0x68] sm:$0xf]
        %v197 = vld [vmem:[%s168 + $0x6c] sm:$0xf]
        %v198 = vld [vmem:[%s168 + $0x70] sm:$0xf]
        %v199 = vld [vmem:[%s168 + $0x74] sm:$0xf]
        %v200 = vld [vmem:[%s168 + $0x78] sm:$0xf]
        %v201 = vld [vmem:[%s168 + $0x7c] sm:$0xf]
        %v202 = vld [vmem:[%s1] sm:$0xf]
        %v203 = vld [vmem:[%s168 + $0x80] sm:$0x1]
        %s204 = scalar_lea.vmem %s1, 4
        %v205 = vld [vmem:[%s204] sm:$0xf]
        %v239 = vunpack.c.l.b16 %v170
        %v240 = vunpack.c.l.b16 %v171
        %v241 = vunpack.c.l.b16 %v172
        %v242 = vunpack.c.l.b16 %v173
        %v243 = vunpack.c.l.b16 %v174
        %v244 = vunpack.c.l.b16 %v175
        %v245 = vunpack.c.l.b16 %v176
        %v246 = vunpack.c.l.b16 %v177
        %v247 = vunpack.c.l.b16 %v178
        %v248 = vunpack.c.l.b16 %v179
        %v249 = vunpack.c.l.b16 %v180
        %v250 = vunpack.c.l.b16 %v181
        %v251 = vunpack.c.l.b16 %v182
        %v252 = vunpack.c.l.b16 %v183
        %v253 = vunpack.c.l.b16 %v184
        %v254 = vunpack.c.l.b16 %v185
        %v255 = vunpack.c.l.b16 %v186
        %v256 = vunpack.c.l.b16 %v187
        %v257 = vunpack.c.l.b16 %v188
        %v258 = vunpack.c.l.b16 %v189
        %v259 = vunpack.c.l.b16 %v190
        %v260 = vunpack.c.l.b16 %v191
        %v261 = vunpack.c.l.b16 %v192
        %v262 = vunpack.c.l.b16 %v193
        %v263 = vunpack.c.l.b16 %v194
        %v264 = vunpack.c.l.b16 %v195
        %v265 = vunpack.c.l.b16 %v196
        %v266 = vunpack.c.l.b16 %v197
        %v267 = vunpack.c.l.b16 %v198
        %v268 = vunpack.c.l.b16 %v199
        %v269 = vunpack.c.l.b16 %v200
        %v270 = vunpack.c.l.b16 %v201
        %v271 = vunpack.c.l.b16 %v203
        %v272 = vpack.c.b16 %v240, %v239
        %v273 = vpack.c.b16 %v242, %v241
        %v274 = vpack.c.b16 %v244, %v243
        %v275 = vpack.c.b16 %v246, %v245
        %v276 = vpack.c.b16 %v248, %v247
        %v277 = vpack.c.b16 %v250, %v249
        %v278 = vpack.c.b16 %v252, %v251
        %v279 = vpack.c.b16 %v254, %v253
        %v280 = vpack.c.b16 %v256, %v255
        %v281 = vpack.c.b16 %v258, %v257
        %v282 = vpack.c.b16 %v260, %v259
        %v283 = vpack.c.b16 %v262, %v261
        %v284 = vpack.c.b16 %v264, %v263
        %v285 = vpack.c.b16 %v266, %v265
        %v286 = vpack.c.b16 %v268, %v267
        %v287 = vpack.c.b16 %v270, %v269
        %v288 = vpack.c.b16 %v271, %v271
        %vm289 = vsmask.f32 7424
        %v291 = vshrl.u32 %v272, 16
        %v293 = vshll.u32 %v272, 16
        %v295 = vrot.slane %v293, 1
        %v296 = vor.u32 %v291, %v295
        %v298 = vshll.u32 %v273, 16
        %v300 = vrot.slane %v298, 1
        %v301 = vsel %vm289, %v296, %v300
        %v302 = vshrl.u32 %v273, 16
        %v304 = vor.u32 %v302, %v300
        %v306 = vshll.u32 %v274, 16
        %v308 = vrot.slane %v306, 1
        %v309 = vsel %vm289, %v304, %v308
        %v310 = vshrl.u32 %v274, 16
        %v312 = vor.u32 %v310, %v308
        %v314 = vshll.u32 %v275, 16
        %v316 = vrot.slane %v314, 1
        %v317 = vsel %vm289, %v312, %v316
        %v318 = vshrl.u32 %v275, 16
        %v320 = vor.u32 %v318, %v316
        %v322 = vshll.u32 %v276, 16
        %v324 = vrot.slane %v322, 1
        %v325 = vsel %vm289, %v320, %v324
        %v326 = vshrl.u32 %v276, 16
        %v328 = vor.u32 %v326, %v324
        %v330 = vshll.u32 %v277, 16
        %v332 = vrot.slane %v330, 1
        %v333 = vsel %vm289, %v328, %v332
        %v334 = vshrl.u32 %v277, 16
        %v336 = vor.u32 %v334, %v332
        %v338 = vshll.u32 %v278, 16
        %v340 = vrot.slane %v338, 1
        %v341 = vsel %vm289, %v336, %v340
        %v342 = vshrl.u32 %v278, 16
        %v344 = vor.u32 %v342, %v340
        %v346 = vshll.u32 %v279, 16
        %v348 = vrot.slane %v346, 1
        %v349 = vsel %vm289, %v344, %v348
        %v350 = vshrl.u32 %v279, 16
        %v352 = vor.u32 %v350, %v348
        %v354 = vshll.u32 %v280, 16
        %v356 = vrot.slane %v354, 1
        %v357 = vsel %vm289, %v352, %v356
        %v358 = vshrl.u32 %v280, 16
        %v360 = vor.u32 %v358, %v356
        %v362 = vshll.u32 %v281, 16
        %v364 = vrot.slane %v362, 1
        %v365 = vsel %vm289, %v360, %v364
        %v366 = vshrl.u32 %v281, 16
        %v368 = vor.u32 %v366, %v364
        %v370 = vshll.u32 %v282, 16
        %v372 = vrot.slane %v370, 1
        %v373 = vsel %vm289, %v368, %v372
        %v374 = vshrl.u32 %v282, 16
        %v376 = vor.u32 %v374, %v372
        %v378 = vshll.u32 %v283, 16
        %v380 = vrot.slane %v378, 1
        %v381 = vsel %vm289, %v376, %v380
        %v382 = vshrl.u32 %v283, 16
        %v384 = vor.u32 %v382, %v380
        %v386 = vshll.u32 %v284, 16
        %v388 = vrot.slane %v386, 1
        %v389 = vsel %vm289, %v384, %v388
        %v390 = vshrl.u32 %v284, 16
        %v392 = vor.u32 %v390, %v388
        %v394 = vshll.u32 %v285, 16
        %v396 = vrot.slane %v394, 1
        %v397 = vsel %vm289, %v392, %v396
        %v398 = vshrl.u32 %v285, 16
        %v400 = vor.u32 %v398, %v396
        %v402 = vshll.u32 %v286, 16
        %v404 = vrot.slane %v402, 1
        %v405 = vsel %vm289, %v400, %v404
        %v406 = vshrl.u32 %v286, 16
        %v408 = vor.u32 %v406, %v404
        %v410 = vshll.u32 %v287, 16
        %v412 = vrot.slane %v410, 1
        %v413 = vsel %vm289, %v408, %v412
        %v414 = vshrl.u32 %v287, 16
        %v416 = vor.u32 %v414, %v412
        %v418 = vshll.u32 %v288, 16
        %v420 = vrot.slane %v418, 1
        %v421 = vsel %vm289, %v416, %v420
        %vm422 = vcmask 64512
        %v424 = vsel %vm422, %v301, 0
        %v427 = vsel %vm422, %v309, 0
        %v430 = vsel %vm422, %v317, 0
        %v433 = vsel %vm422, %v325, 0
        %v436 = vsel %vm422, %v333, 0
        %v439 = vsel %vm422, %v341, 0
        %v442 = vsel %vm422, %v349, 0
        %v445 = vsel %vm422, %v357, 0
        %v448 = vsel %vm422, %v365, 0
        %v451 = vsel %vm422, %v373, 0
        %v454 = vsel %vm422, %v381, 0
        %v457 = vsel %vm422, %v389, 0
        %v460 = vsel %vm422, %v397, 0
        %v463 = vsel %vm422, %v405, 0
        %v466 = vsel %vm422, %v413, 0
        %v469 = vsel %vm422, %v421, 0
        %vm471 = vcmask 1043456
        %v473 = vsel %vm471, %v205, 0
        %475 = vmatprep.subr.bf16.mxu0 0
        %476 = vmatpush1.bf16.msra.mxu0 %v473
        %477 = vmatprep.subr.bf16.mxu0 0
        %478 = vmatpush1.bf16.msra.mxu0 0
        %479 = vmatprep.subr.bf16.mxu0 0
        %480 = vmatpush1.bf16.msra.mxu0 0
        %481 = vmatprep.subr.bf16.mxu0 0
        %482 = vmatpush1.bf16.msra.mxu0 0
        %483 = vmatprep.subr.bf16.mxu0 0
        %484 = vmatpush1.bf16.msra.mxu0 0
        %485 = vmatprep.subr.bf16.mxu0 0
        %486 = vmatpush1.bf16.msra.mxu0 0
        %487 = vmatprep.subr.bf16.mxu0 0
        %488 = vmatpush1.bf16.msra.mxu0 0
        %489 = vmatprep.subr.bf16.mxu0 0
        %490 = vmatpush1.bf16.msra.mxu0 0
        %491 = vmatprep.subr.bf16.mxu0 0
        %492 = vmatpush1.bf16.msra.mxu0 0
        %493 = vmatprep.subr.bf16.mxu0 0
        %494 = vmatpush1.bf16.msra.mxu0 0
        %495 = vmatprep.subr.bf16.mxu0 0
        %496 = vmatpush1.bf16.msra.mxu0 0
        %497 = vmatprep.subr.bf16.mxu0 0
        %498 = vmatpush1.bf16.msra.mxu0 0
        %499 = vmatprep.subr.bf16.mxu0 0
        %500 = vmatpush1.bf16.msra.mxu0 0
        %501 = vmatprep.subr.bf16.mxu0 0
        %502 = vmatpush1.bf16.msra.mxu0 0
        %503 = vmatprep.subr.bf16.mxu0 0
        %504 = vmatpush1.bf16.msra.mxu0 0
        %505 = vmatprep.subr.bf16.mxu0 0
        %506 = vmatpush1.bf16.msra.mxu0 0
        %507 = vmatprep.mubr.bf16.mxu0 0
        %508 = vmatmul.mubr.bf16.gmra.mrb[0].mxu0 %v424
        %v509 = vpop.f32.mrb[0].mxu0
        %v510 = vadd.f32 0.0, %v509
        %v511 = vpop.f32.mrb[0].mxu0
        %v512 = vpop.f32.mrb[0].mxu0
        %v513 = vadd.f32 0.0, %v512
        %v514 = vpop.f32.mrb[0].mxu0
        %515 = vmatprep.mubr.bf16.mxu0 0
        %516 = vmatmul.mubr.bf16.gmra.mrb[0].mxu0 %v427
        %v517 = vpop.f32.mrb[0].mxu0
        %v518 = vadd.f32 0.0, %v517
        %v519 = vpop.f32.mrb[0].mxu0
        %v520 = vpop.f32.mrb[0].mxu0
        %v521 = vadd.f32 0.0, %v520
        %v522 = vpop.f32.mrb[0].mxu0
        %523 = vmatprep.mubr.bf16.mxu0 0
        %524 = vmatmul.mubr.bf16.gmra.mrb[0].mxu0 %v430
        %v525 = vpop.f32.mrb[0].mxu0
        %v526 = vadd.f32 0.0, %v525
        %v527 = vpop.f32.mrb[0].mxu0
        %v528 = vpop.f32.mrb[0].mxu0
        %v529 = vadd.f32 0.0, %v528
        %v530 = vpop.f32.mrb[0].mxu0
        %531 = vmatprep.mubr.bf16.mxu0 0
        %532 = vmatmul.mubr.bf16.gmra.mrb[0].mxu0 %v433
        %v533 = vpop.f32.mrb[0].mxu0
        %v534 = vadd.f32 0.0, %v533
        %v535 = vpop.f32.mrb[0].mxu0
        %v536 = vpop.f32.mrb[0].mxu0
        %v537 = vadd.f32 0.0, %v536
        %v538 = vpop.f32.mrb[0].mxu0
        %539 = vmatprep.mubr.bf16.mxu0 0
        %540 = vmatmul.mubr.bf16.gmra.mrb[0].mxu0 %v436
        %v541 = vpop.f32.mrb[0].mxu0
        %v542 = vadd.f32 0.0, %v541
        %v543 = vpop.f32.mrb[0].mxu0
        %v544 = vpop.f32.mrb[0].mxu0
        %v545 = vadd.f32 0.0, %v544
        %v546 = vpop.f32.mrb[0].mxu0
        %547 = vmatprep.mubr.bf16.mxu0 0
        %548 = vmatmul.mubr.bf16.gmra.mrb[0].mxu0 %v439
        %v549 = vpop.f32.mrb[0].mxu0
        %v550 = vadd.f32 0.0, %v549
        %v551 = vpop.f32.mrb[0].mxu0
        %v552 = vpop.f32.mrb[0].mxu0
        %v553 = vadd.f32 0.0, %v552
        %v554 = vpop.f32.mrb[0].mxu0
        %555 = vmatprep.mubr.bf16.mxu0 0
        %556 = vmatmul.mubr.bf16.gmra.mrb[0].mxu0 %v442
        %v557 = vpop.f32.mrb[0].mxu0
        %v558 = vadd.f32 0.0, %v557
        %v559 = vpop.f32.mrb[0].mxu0
        %v560 = vpop.f32.mrb[0].mxu0
        %v561 = vadd.f32 0.0, %v560
        %v562 = vpop.f32.mrb[0].mxu0
        %563 = vmatprep.mubr.bf16.mxu0 0
        %564 = vmatmul.mubr.bf16.gmra.mrb[0].mxu0 %v445
        %v565 = vpop.f32.mrb[0].mxu0
        %v566 = vadd.f32 0.0, %v565
        %v567 = vpop.f32.mrb[0].mxu0
        %v568 = vpop.f32.mrb[0].mxu0
        %v569 = vadd.f32 0.0, %v568
        %v570 = vpop.f32.mrb[0].mxu0
        %571 = vmatprep.mubr.bf16.mxu0 0
        %572 = vmatmul.mubr.bf16.gmra.mrb[0].mxu0 %v448
        %v573 = vpop.f32.mrb[0].mxu0
        %v574 = vadd.f32 0.0, %v573
        %v575 = vpop.f32.mrb[0].mxu0
        %v576 = vpop.f32.mrb[0].mxu0
        %v577 = vadd.f32 0.0, %v576
        %v578 = vpop.f32.mrb[0].mxu0
        %579 = vmatprep.mubr.bf16.mxu0 0
        %580 = vmatmul.mubr.bf16.gmra.mrb[0].mxu0 %v451
        %v581 = vpop.f32.mrb[0].mxu0
        %v582 = vadd.f32 0.0, %v581
        %v583 = vpop.f32.mrb[0].mxu0
        %v584 = vpop.f32.mrb[0].mxu0
        %v585 = vadd.f32 0.0, %v584
        %v586 = vpop.f32.mrb[0].mxu0
        %587 = vmatprep.mubr.bf16.mxu0 0
        %588 = vmatmul.mubr.bf16.gmra.mrb[0].mxu0 %v454
        %v589 = vpop.f32.mrb[0].mxu0
        %v590 = vadd.f32 0.0, %v589
        %v591 = vpop.f32.mrb[0].mxu0
        %v592 = vpop.f32.mrb[0].mxu0
        %v593 = vadd.f32 0.0, %v592
        %v594 = vpop.f32.mrb[0].mxu0
        %595 = vmatprep.mubr.bf16.mxu0 0
        %596 = vmatmul.mubr.bf16.gmra.mrb[0].mxu0 %v457
        %v597 = vpop.f32.mrb[0].mxu0
        %v598 = vadd.f32 0.0, %v597
        %v599 = vpop.f32.mrb[0].mxu0
        %v600 = vpop.f32.mrb[0].mxu0
        %v601 = vadd.f32 0.0, %v600
        %v602 = vpop.f32.mrb[0].mxu0
        %603 = vmatprep.mubr.bf16.mxu0 0
        %604 = vmatmul.mubr.bf16.gmra.mrb[0].mxu0 %v460
        %v605 = vpop.f32.mrb[0].mxu0
        %v606 = vadd.f32 0.0, %v605
        %v607 = vpop.f32.mrb[0].mxu0
        %v608 = vpop.f32.mrb[0].mxu0
        %v609 = vadd.f32 0.0, %v608
        %v610 = vpop.f32.mrb[0].mxu0
        %611 = vmatprep.mubr.bf16.mxu0 0
        %612 = vmatmul.mubr.bf16.gmra.mrb[0].mxu0 %v463
        %v613 = vpop.f32.mrb[0].mxu0
        %v614 = vadd.f32 0.0, %v613
        %v615 = vpop.f32.mrb[0].mxu0
        %v616 = vpop.f32.mrb[0].mxu0
        %v617 = vadd.f32 0.0, %v616
        %v618 = vpop.f32.mrb[0].mxu0
        %619 = vmatprep.mubr.bf16.mxu0 0
        %620 = vmatmul.mubr.bf16.gmra.mrb[0].mxu0 %v466
        %v621 = vpop.f32.mrb[0].mxu0
        %v622 = vadd.f32 0.0, %v621
        %v623 = vpop.f32.mrb[0].mxu0
        %v624 = vpop.f32.mrb[0].mxu0
        %v625 = vadd.f32 0.0, %v624
        %v626 = vpop.f32.mrb[0].mxu0
        %627 = vmatprep.mubr.bf16.mxu0 0
        %628 = vmatmul.mubr.bf16.gmra.mrb[0].mxu0 %v469
        %v629 = vpop.f32.mrb[0].mxu0
        %v630 = vadd.f32 0.0, %v629
        %v631 = vpop.f32.mrb[0].mxu0
        %v632 = vpop.f32.mrb[0].mxu0
        %v633 = vadd.f32 0.0, %v632
        %v634 = vpop.f32.mrb[0].mxu0
        %635 = vdwg.mxu0
        %v636 = vsel %vm422, %v272, 0
        %v638 = vsel %vm422, %v273, 0
        %v640 = vsel %vm422, %v274, 0
        %v642 = vsel %vm422, %v275, 0
        %v644 = vsel %vm422, %v276, 0
        %v646 = vsel %vm422, %v277, 0
        %v648 = vsel %vm422, %v278, 0
        %v650 = vsel %vm422, %v279, 0
        %v652 = vsel %vm422, %v280, 0
        %v654 = vsel %vm422, %v281, 0
        %v656 = vsel %vm422, %v282, 0
        %v658 = vsel %vm422, %v283, 0
        %v660 = vsel %vm422, %v284, 0
        %v662 = vsel %vm422, %v285, 0
        %v664 = vsel %vm422, %v286, 0
        %v666 = vsel %vm422, %v287, 0
        %v669 = vsel %vm471, %v202, 0
        %671 = vmatprep.subr.bf16.mxu0 0
        %672 = vmatpush1.bf16.msra.mxu0 %v669
        %673 = vmatprep.subr.bf16.mxu0 0
        %674 = vmatpush1.bf16.msra.mxu0 0
        %675 = vmatprep.subr.bf16.mxu0 0
        %676 = vmatpush1.bf16.msra.mxu0 0
        %677 = vmatprep.subr.bf16.mxu0 0
        %678 = vmatpush1.bf16.msra.mxu0 0
        %679 = vmatprep.subr.bf16.mxu0 0
        %680 = vmatpush1.bf16.msra.mxu0 0
        %681 = vmatprep.subr.bf16.mxu0 0
        %682 = vmatpush1.bf16.msra.mxu0 0
        %683 = vmatprep.subr.bf16.mxu0 0
        %684 = vmatpush1.bf16.msra.mxu0 0
        %685 = vmatprep.subr.bf16.mxu0 0
        %686 = vmatpush1.bf16.msra.mxu0 0
        %687 = vmatprep.subr.bf16.mxu0 0
        %688 = vmatpush1.bf16.msra.mxu0 0
        %689 = vmatprep.subr.bf16.mxu0 0
        %690 = vmatpush1.bf16.msra.mxu0 0
        %691 = vmatprep.subr.bf16.mxu0 0
        %692 = vmatpush1.bf16.msra.mxu0 0
        %693 = vmatprep.subr.bf16.mxu0 0
        %694 = vmatpush1.bf16.msra.mxu0 0
        %695 = vmatprep.subr.bf16.mxu0 0
        %696 = vmatpush1.bf16.msra.mxu0 0
        %697 = vmatprep.subr.bf16.mxu0 0
        %698 = vmatpush1.bf16.msra.mxu0 0
        %699 = vmatprep.subr.bf16.mxu0 0
        %700 = vmatpush1.bf16.msra.mxu0 0
        %701 = vmatprep.subr.bf16.mxu0 0
        %702 = vmatpush1.bf16.msra.mxu0 0
        %703 = vmatprep.mubr.bf16.mxu0 0
        %704 = vmatmul.mubr.bf16.gmra.mrb[0].mxu0 %v636
        %v705 = vpop.f32.mrb[0].mxu0
        %v706 = vadd.f32 %v510, %v705
        %v707 = vpop.f32.mrb[0].mxu0
        %v708 = vpop.f32.mrb[0].mxu0
        %v709 = vadd.f32 %v513, %v708
        %v710 = vpop.f32.mrb[0].mxu0
        %711 = vmatprep.mubr.bf16.mxu0 0
        %712 = vmatmul.mubr.bf16.gmra.mrb[0].mxu0 %v638
        %v713 = vpop.f32.mrb[0].mxu0
        %v714 = vadd.f32 %v518, %v713
        %v715 = vpop.f32.mrb[0].mxu0
        %v716 = vpop.f32.mrb[0].mxu0
        %v717 = vadd.f32 %v521, %v716
        %v718 = vpop.f32.mrb[0].mxu0
        %719 = vmatprep.mubr.bf16.mxu0 0
        %720 = vmatmul.mubr.bf16.gmra.mrb[0].mxu0 %v640
        %v721 = vpop.f32.mrb[0].mxu0
        %v722 = vadd.f32 %v526, %v721
        %v723 = vpop.f32.mrb[0].mxu0
        %v724 = vpop.f32.mrb[0].mxu0
        %v725 = vadd.f32 %v529, %v724
        %v726 = vpop.f32.mrb[0].mxu0
        %727 = vmatprep.mubr.bf16.mxu0 0
        %728 = vmatmul.mubr.bf16.gmra.mrb[0].mxu0 %v642
        %v729 = vpop.f32.mrb[0].mxu0
        %v730 = vadd.f32 %v534, %v729
        %v731 = vpop.f32.mrb[0].mxu0
        %v732 = vpop.f32.mrb[0].mxu0
        %v733 = vadd.f32 %v537, %v732
        %v734 = vpop.f32.mrb[0].mxu0
        %735 = vmatprep.mubr.bf16.mxu0 0
        %736 = vmatmul.mubr.bf16.gmra.mrb[0].mxu0 %v644
        %v737 = vpop.f32.mrb[0].mxu0
        %v738 = vadd.f32 %v542, %v737
        %v739 = vpop.f32.mrb[0].mxu0
        %v740 = vpop.f32.mrb[0].mxu0
        %v741 = vadd.f32 %v545, %v740
        %v742 = vpop.f32.mrb[0].mxu0
        %743 = vmatprep.mubr.bf16.mxu0 0
        %744 = vmatmul.mubr.bf16.gmra.mrb[0].mxu0 %v646
        %v745 = vpop.f32.mrb[0].mxu0
        %v746 = vadd.f32 %v550, %v745
        %v747 = vpop.f32.mrb[0].mxu0
        %v748 = vpop.f32.mrb[0].mxu0
        %v749 = vadd.f32 %v553, %v748
        %v750 = vpop.f32.mrb[0].mxu0
        %751 = vmatprep.mubr.bf16.mxu0 0
        %752 = vmatmul.mubr.bf16.gmra.mrb[0].mxu0 %v648
        %v753 = vpop.f32.mrb[0].mxu0
        %v754 = vadd.f32 %v558, %v753
        %v755 = vpop.f32.mrb[0].mxu0
        %v756 = vpop.f32.mrb[0].mxu0
        %v757 = vadd.f32 %v561, %v756
        %v758 = vpop.f32.mrb[0].mxu0
        %759 = vmatprep.mubr.bf16.mxu0 0
        %760 = vmatmul.mubr.bf16.gmra.mrb[0].mxu0 %v650
        %v761 = vpop.f32.mrb[0].mxu0
        %v762 = vadd.f32 %v566, %v761
        %v763 = vpop.f32.mrb[0].mxu0
        %v764 = vpop.f32.mrb[0].mxu0
        %v765 = vadd.f32 %v569, %v764
        %v766 = vpop.f32.mrb[0].mxu0
        %767 = vmatprep.mubr.bf16.mxu0 0
        %768 = vmatmul.mubr.bf16.gmra.mrb[0].mxu0 %v652
        %v769 = vpop.f32.mrb[0].mxu0
        %v770 = vadd.f32 %v574, %v769
        %v771 = vpop.f32.mrb[0].mxu0
        %v772 = vpop.f32.mrb[0].mxu0
        %v773 = vadd.f32 %v577, %v772
        %v774 = vpop.f32.mrb[0].mxu0
        %775 = vmatprep.mubr.bf16.mxu0 0
        %776 = vmatmul.mubr.bf16.gmra.mrb[0].mxu0 %v654
        %v777 = vpop.f32.mrb[0].mxu0
        %v778 = vadd.f32 %v582, %v777
        %v779 = vpop.f32.mrb[0].mxu0
        %v780 = vpop.f32.mrb[0].mxu0
        %v781 = vadd.f32 %v585, %v780
        %v782 = vpop.f32.mrb[0].mxu0
        %783 = vmatprep.mubr.bf16.mxu0 0
        %784 = vmatmul.mubr.bf16.gmra.mrb[0].mxu0 %v656
        %v785 = vpop.f32.mrb[0].mxu0
        %v786 = vadd.f32 %v590, %v785
        %v787 = vpop.f32.mrb[0].mxu0
        %v788 = vpop.f32.mrb[0].mxu0
        %v789 = vadd.f32 %v593, %v788
        %v790 = vpop.f32.mrb[0].mxu0
        %791 = vmatprep.mubr.bf16.mxu0 0
        %792 = vmatmul.mubr.bf16.gmra.mrb[0].mxu0 %v658
        %v793 = vpop.f32.mrb[0].mxu0
        %v794 = vadd.f32 %v598, %v793
        %v795 = vpop.f32.mrb[0].mxu0
        %v796 = vpop.f32.mrb[0].mxu0
        %v797 = vadd.f32 %v601, %v796
        %v798 = vpop.f32.mrb[0].mxu0
        %799 = vmatprep.mubr.bf16.mxu0 0
        %800 = vmatmul.mubr.bf16.gmra.mrb[0].mxu0 %v660
        %v801 = vpop.f32.mrb[0].mxu0
        %v802 = vadd.f32 %v606, %v801
        %v803 = vpop.f32.mrb[0].mxu0
        %v804 = vpop.f32.mrb[0].mxu0
        %v805 = vadd.f32 %v609, %v804
        %v806 = vpop.f32.mrb[0].mxu0
        %807 = vmatprep.mubr.bf16.mxu0 0
        %808 = vmatmul.mubr.bf16.gmra.mrb[0].mxu0 %v662
        %v809 = vpop.f32.mrb[0].mxu0
        %v810 = vadd.f32 %v614, %v809
        %v811 = vpop.f32.mrb[0].mxu0
        %v812 = vpop.f32.mrb[0].mxu0
        %v813 = vadd.f32 %v617, %v812
        %v814 = vpop.f32.mrb[0].mxu0
        %815 = vmatprep.mubr.bf16.mxu0 0
        %816 = vmatmul.mubr.bf16.gmra.mrb[0].mxu0 %v664
        %v817 = vpop.f32.mrb[0].mxu0
        %v818 = vadd.f32 %v622, %v817
        %v819 = vpop.f32.mrb[0].mxu0
        %v820 = vpop.f32.mrb[0].mxu0
        %v821 = vadd.f32 %v625, %v820
        %v822 = vpop.f32.mrb[0].mxu0
        %823 = vmatprep.mubr.bf16.mxu0 0
        %824 = vmatmul.mubr.bf16.gmra.mrb[0].mxu0 %v666
        %v825 = vpop.f32.mrb[0].mxu0
        %v826 = vadd.f32 %v630, %v825
        %v827 = vpop.f32.mrb[0].mxu0
        %v828 = vpop.f32.mrb[0].mxu0
        %v829 = vadd.f32 %v633, %v828
        %v830 = vpop.f32.mrb[0].mxu0
        %831 = vdwg.mxu0
        %v832 = vld [vmem:[%s168] sm:$0xe]
        %s833 = scalar_lea.vmem %s1, 8
        %v834 = vld [vmem:[%s833] sm:$0xf]
        %v836 = vunpack.c.l.b16 %v832
        %v837 = vpack.c.b16 %v240, %v836
        %vm838 = vcmask 1046528
        %v839 = vrot.slane %v837, 1
        %v840 = vrot.slane %v273, 1
        %v841 = vsel %vm838, %v839, %v840
        %v842 = vrot.slane %v274, 1
        %v843 = vsel %vm838, %v840, %v842
        %v844 = vrot.slane %v275, 1
        %v845 = vsel %vm838, %v842, %v844
        %v846 = vrot.slane %v276, 1
        %v847 = vsel %vm838, %v844, %v846
        %v848 = vrot.slane %v277, 1
        %v849 = vsel %vm838, %v846, %v848
        %v850 = vrot.slane %v278, 1
        %v851 = vsel %vm838, %v848, %v850
        %v852 = vrot.slane %v279, 1
        %v853 = vsel %vm838, %v850, %v852
        %v854 = vrot.slane %v280, 1
        %v855 = vsel %vm838, %v852, %v854
        %v856 = vrot.slane %v281, 1
        %v857 = vsel %vm838, %v854, %v856
        %v858 = vrot.slane %v282, 1
        %v859 = vsel %vm838, %v856, %v858
        %v860 = vrot.slane %v283, 1
        %v861 = vsel %vm838, %v858, %v860
        %v862 = vrot.slane %v284, 1
        %v863 = vsel %vm838, %v860, %v862
        %v864 = vrot.slane %v285, 1
        %v865 = vsel %vm838, %v862, %v864
        %v866 = vrot.slane %v286, 1
        %v867 = vsel %vm838, %v864, %v866
        %v868 = vrot.slane %v287, 1
        %v869 = vsel %vm838, %v866, %v868
        %v870 = vrot.slane %v288, 1
        %v871 = vsel %vm838, %v868, %v870
        %v873 = vsel %vm422, %v841, 0
        %v876 = vsel %vm422, %v843, 0
        %v879 = vsel %vm422, %v845, 0
        %v882 = vsel %vm422, %v847, 0
        %v885 = vsel %vm422, %v849, 0
        %v888 = vsel %vm422, %v851, 0
        %v891 = vsel %vm422, %v853, 0
        %v894 = vsel %vm422, %v855, 0
        %v897 = vsel %vm422, %v857, 0
        %v900 = vsel %vm422, %v859, 0
        %v903 = vsel %vm422, %v861, 0
        %v906 = vsel %vm422, %v863, 0
        %v909 = vsel %vm422, %v865, 0
        %v912 = vsel %vm422, %v867, 0
        %v915 = vsel %vm422, %v869, 0
        %v918 = vsel %vm422, %v871, 0
        %v921 = vsel %vm471, %v834, 0
        %923 = vmatprep.subr.bf16.mxu0 0
        %924 = vmatpush1.bf16.msra.mxu0 %v921
        %925 = vmatprep.subr.bf16.mxu0 0
        %926 = vmatpush1.bf16.msra.mxu0 0
        %927 = vmatprep.subr.bf16.mxu0 0
        %928 = vmatpush1.bf16.msra.mxu0 0
        %929 = vmatprep.subr.bf16.mxu0 0
        %930 = vmatpush1.bf16.msra.mxu0 0
        %931 = vmatprep.subr.bf16.mxu0 0
        %932 = vmatpush1.bf16.msra.mxu0 0
        %933 = vmatprep.subr.bf16.mxu0 0
        %934 = vmatpush1.bf16.msra.mxu0 0
        %935 = vmatprep.subr.bf16.mxu0 0
        %936 = vmatpush1.bf16.msra.mxu0 0
        %937 = vmatprep.subr.bf16.mxu0 0
        %938 = vmatpush1.bf16.msra.mxu0 0
        %939 = vmatprep.subr.bf16.mxu0 0
        %940 = vmatpush1.bf16.msra.mxu0 0
        %941 = vmatprep.subr.bf16.mxu0 0
        %942 = vmatpush1.bf16.msra.mxu0 0
        %943 = vmatprep.subr.bf16.mxu0 0
        %944 = vmatpush1.bf16.msra.mxu0 0
        %945 = vmatprep.subr.bf16.mxu0 0
        %946 = vmatpush1.bf16.msra.mxu0 0
        %947 = vmatprep.subr.bf16.mxu0 0
        %948 = vmatpush1.bf16.msra.mxu0 0
        %949 = vmatprep.subr.bf16.mxu0 0
        %950 = vmatpush1.bf16.msra.mxu0 0
        %951 = vmatprep.subr.bf16.mxu0 0
        %952 = vmatpush1.bf16.msra.mxu0 0
        %953 = vmatprep.subr.bf16.mxu0 0
        %954 = vmatpush1.bf16.msra.mxu0 0
        %955 = vmatprep.mubr.bf16.mxu0 0
        %956 = vmatmul.mubr.bf16.gmra.mrb[0].mxu0 %v873
        %v957 = vpop.f32.mrb[0].mxu0
        %v958 = vadd.f32 0.0, %v957
        %v959 = vpop.f32.mrb[0].mxu0
        %v960 = vpop.f32.mrb[0].mxu0
        %v961 = vadd.f32 0.0, %v960
        %v962 = vpop.f32.mrb[0].mxu0
        %963 = vmatprep.mubr.bf16.mxu0 0
        %964 = vmatmul.mubr.bf16.gmra.mrb[0].mxu0 %v876
        %v965 = vpop.f32.mrb[0].mxu0
        %v966 = vadd.f32 0.0, %v965
        %v967 = vpop.f32.mrb[0].mxu0
        %v968 = vpop.f32.mrb[0].mxu0
        %v969 = vadd.f32 0.0, %v968
        %v970 = vpop.f32.mrb[0].mxu0
        %971 = vmatprep.mubr.bf16.mxu0 0
        %972 = vmatmul.mubr.bf16.gmra.mrb[0].mxu0 %v879
        %v973 = vpop.f32.mrb[0].mxu0
        %v974 = vadd.f32 0.0, %v973
        %v975 = vpop.f32.mrb[0].mxu0
        %v976 = vpop.f32.mrb[0].mxu0
        %v977 = vadd.f32 0.0, %v976
        %v978 = vpop.f32.mrb[0].mxu0
        %979 = vmatprep.mubr.bf16.mxu0 0
        %980 = vmatmul.mubr.bf16.gmra.mrb[0].mxu0 %v882
        %v981 = vpop.f32.mrb[0].mxu0
        %v982 = vadd.f32 0.0, %v981
        %v983 = vpop.f32.mrb[0].mxu0
        %v984 = vpop.f32.mrb[0].mxu0
        %v985 = vadd.f32 0.0, %v984
        %v986 = vpop.f32.mrb[0].mxu0
        %987 = vmatprep.mubr.bf16.mxu0 0
        %988 = vmatmul.mubr.bf16.gmra.mrb[0].mxu0 %v885
        %v989 = vpop.f32.mrb[0].mxu0
        %v990 = vadd.f32 0.0, %v989
        %v991 = vpop.f32.mrb[0].mxu0
        %v992 = vpop.f32.mrb[0].mxu0
        %v993 = vadd.f32 0.0, %v992
        %v994 = vpop.f32.mrb[0].mxu0
        %995 = vmatprep.mubr.bf16.mxu0 0
        %996 = vmatmul.mubr.bf16.gmra.mrb[0].mxu0 %v888
        %v997 = vpop.f32.mrb[0].mxu0
        %v998 = vadd.f32 0.0, %v997
        %v999 = vpop.f32.mrb[0].mxu0
        %v1000 = vpop.f32.mrb[0].mxu0
        %v1001 = vadd.f32 0.0, %v1000
        %v1002 = vpop.f32.mrb[0].mxu0
        %1003 = vmatprep.mubr.bf16.mxu0 0
        %1004 = vmatmul.mubr.bf16.gmra.mrb[0].mxu0 %v891
        %v1005 = vpop.f32.mrb[0].mxu0
        %v1006 = vadd.f32 0.0, %v1005
        %v1007 = vpop.f32.mrb[0].mxu0
        %v1008 = vpop.f32.mrb[0].mxu0
        %v1009 = vadd.f32 0.0, %v1008
        %v1010 = vpop.f32.mrb[0].mxu0
        %1011 = vmatprep.mubr.bf16.mxu0 0
        %1012 = vmatmul.mubr.bf16.gmra.mrb[0].mxu0 %v894
        %v1013 = vpop.f32.mrb[0].mxu0
        %v1014 = vadd.f32 0.0, %v1013
        %v1015 = vpop.f32.mrb[0].mxu0
        %v1016 = vpop.f32.mrb[0].mxu0
        %v1017 = vadd.f32 0.0, %v1016
        %v1018 = vpop.f32.mrb[0].mxu0
        %1019 = vmatprep.mubr.bf16.mxu0 0
        %1020 = vmatmul.mubr.bf16.gmra.mrb[0].mxu0 %v897
        %v1021 = vpop.f32.mrb[0].mxu0
        %v1022 = vadd.f32 0.0, %v1021
        %v1023 = vpop.f32.mrb[0].mxu0
        %v1024 = vpop.f32.mrb[0].mxu0
        %v1025 = vadd.f32 0.0, %v1024
        %v1026 = vpop.f32.mrb[0].mxu0
        %1027 = vmatprep.mubr.bf16.mxu0 0
        %1028 = vmatmul.mubr.bf16.gmra.mrb[0].mxu0 %v900
        %v1029 = vpop.f32.mrb[0].mxu0
        %v1030 = vadd.f32 0.0, %v1029
        %v1031 = vpop.f32.mrb[0].mxu0
        %v1032 = vpop.f32.mrb[0].mxu0
        %v1033 = vadd.f32 0.0, %v1032
        %v1034 = vpop.f32.mrb[0].mxu0
        %1035 = vmatprep.mubr.bf16.mxu0 0
        %1036 = vmatmul.mubr.bf16.gmra.mrb[0].mxu0 %v903
        %v1037 = vpop.f32.mrb[0].mxu0
        %v1038 = vadd.f32 0.0, %v1037
        %v1039 = vpop.f32.mrb[0].mxu0
        %v1040 = vpop.f32.mrb[0].mxu0
        %v1041 = vadd.f32 0.0, %v1040
        %v1042 = vpop.f32.mrb[0].mxu0
        %1043 = vmatprep.mubr.bf16.mxu0 0
        %1044 = vmatmul.mubr.bf16.gmra.mrb[0].mxu0 %v906
        %v1045 = vpop.f32.mrb[0].mxu0
        %v1046 = vadd.f32 0.0, %v1045
        %v1047 = vpop.f32.mrb[0].mxu0
        %v1048 = vpop.f32.mrb[0].mxu0
        %v1049 = vadd.f32 0.0, %v1048
        %v1050 = vpop.f32.mrb[0].mxu0
        %1051 = vmatprep.mubr.bf16.mxu0 0
        %1052 = vmatmul.mubr.bf16.gmra.mrb[0].mxu0 %v909
        %v1053 = vpop.f32.mrb[0].mxu0
        %v1054 = vadd.f32 0.0, %v1053
        %v1055 = vpop.f32.mrb[0].mxu0
        %v1056 = vpop.f32.mrb[0].mxu0
        %v1057 = vadd.f32 0.0, %v1056
        %v1058 = vpop.f32.mrb[0].mxu0
        %1059 = vmatprep.mubr.bf16.mxu0 0
        %1060 = vmatmul.mubr.bf16.gmra.mrb[0].mxu0 %v912
        %v1061 = vpop.f32.mrb[0].mxu0
        %v1062 = vadd.f32 0.0, %v1061
        %v1063 = vpop.f32.mrb[0].mxu0
        %v1064 = vpop.f32.mrb[0].mxu0
        %v1065 = vadd.f32 0.0, %v1064
        %v1066 = vpop.f32.mrb[0].mxu0
        %1067 = vmatprep.mubr.bf16.mxu0 0
        %1068 = vmatmul.mubr.bf16.gmra.mrb[0].mxu0 %v915
        %v1069 = vpop.f32.mrb[0].mxu0
        %v1070 = vadd.f32 0.0, %v1069
        %v1071 = vpop.f32.mrb[0].mxu0
        %v1072 = vpop.f32.mrb[0].mxu0
        %v1073 = vadd.f32 0.0, %v1072
        %v1074 = vpop.f32.mrb[0].mxu0
        %1075 = vmatprep.mubr.bf16.mxu0 0
        %1076 = vmatmul.mubr.bf16.gmra.mrb[0].mxu0 %v918
        %v1077 = vpop.f32.mrb[0].mxu0
        %v1078 = vadd.f32 0.0, %v1077
        %v1079 = vpop.f32.mrb[0].mxu0
        %v1080 = vpop.f32.mrb[0].mxu0
        %v1081 = vadd.f32 0.0, %v1080
        %v1082 = vpop.f32.mrb[0].mxu0
        %1083 = vdwg.mxu0
        %v1084 = vadd.f32 %v706, %v958
        %v1085 = vadd.f32 %v709, %v961
        %v1086 = vadd.f32 %v714, %v966
        %v1087 = vadd.f32 %v717, %v969
        %v1088 = vadd.f32 %v722, %v974
        %v1089 = vadd.f32 %v725, %v977
        %v1090 = vadd.f32 %v730, %v982
        %v1091 = vadd.f32 %v733, %v985
        %v1092 = vadd.f32 %v738, %v990
        %v1093 = vadd.f32 %v741, %v993
        %v1094 = vadd.f32 %v746, %v998
        %v1095 = vadd.f32 %v749, %v1001
        %v1096 = vadd.f32 %v754, %v1006
        %v1097 = vadd.f32 %v757, %v1009
        %v1098 = vadd.f32 %v762, %v1014
        %v1099 = vadd.f32 %v765, %v1017
        %v1100 = vadd.f32 %v770, %v1022
        %v1101 = vadd.f32 %v773, %v1025
        %v1102 = vadd.f32 %v778, %v1030
        %v1103 = vadd.f32 %v781, %v1033
        %v1104 = vadd.f32 %v786, %v1038
        %v1105 = vadd.f32 %v789, %v1041
        %v1106 = vadd.f32 %v794, %v1046
        %v1107 = vadd.f32 %v797, %v1049
        %v1108 = vadd.f32 %v802, %v1054
        %v1109 = vadd.f32 %v805, %v1057
        %v1110 = vadd.f32 %v810, %v1062
        %v1111 = vadd.f32 %v813, %v1065
        %v1112 = vadd.f32 %v818, %v1070
        %v1113 = vadd.f32 %v821, %v1073
        %v1114 = vadd.f32 %v826, %v1078
        %v1115 = vadd.f32 %v829, %v1081
        %v1116 = vld [vmem:[%s168 + $0x8] sm:$0xf]
        %v1117 = vld [vmem:[%s168 + $0xc] sm:$0xf]
        %v1118 = vld [vmem:[%s168 + $0x10] sm:$0xf]
        %v1119 = vld [vmem:[%s168 + $0x14] sm:$0xf]
        %v1120 = vld [vmem:[%s168 + $0x18] sm:$0xf]
        %v1121 = vld [vmem:[%s168 + $0x1c] sm:$0xf]
        %v1122 = vld [vmem:[%s168 + $0x20] sm:$0xf]
        %v1123 = vld [vmem:[%s168 + $0x24] sm:$0xf]
        %v1124 = vld [vmem:[%s168 + $0x28] sm:$0xf]
        %v1125 = vld [vmem:[%s168 + $0x2c] sm:$0xf]
        %v1126 = vld [vmem:[%s168 + $0x30] sm:$0xf]
        %v1127 = vld [vmem:[%s168 + $0x34] sm:$0xf]
        %v1128 = vld [vmem:[%s168 + $0x38] sm:$0xf]
        %v1129 = vld [vmem:[%s168 + $0x3c] sm:$0xf]
        %v1130 = vld [vmem:[%s168 + $0x40] sm:$0xf]
        %v1131 = vld [vmem:[%s168 + $0x44] sm:$0xf]
        %v1132 = vld [vmem:[%s168 + $0x48] sm:$0xf]
        %v1133 = vld [vmem:[%s168 + $0x4c] sm:$0xf]
        %v1134 = vld [vmem:[%s168 + $0x50] sm:$0xf]
        %v1135 = vld [vmem:[%s168 + $0x54] sm:$0xf]
        %v1136 = vld [vmem:[%s168 + $0x58] sm:$0xf]
        %v1137 = vld [vmem:[%s168 + $0x5c] sm:$0xf]
        %v1138 = vld [vmem:[%s168 + $0x60] sm:$0xf]
        %v1139 = vld [vmem:[%s168 + $0x64] sm:$0xf]
        %v1140 = vld [vmem:[%s168 + $0x68] sm:$0xf]
        %v1141 = vld [vmem:[%s168 + $0x6c] sm:$0xf]
        %v1142 = vld [vmem:[%s168 + $0x70] sm:$0xf]
        %v1143 = vld [vmem:[%s168 + $0x74] sm:$0xf]
        %v1144 = vld [vmem:[%s168 + $0x78] sm:$0xf]
        %v1145 = vld [vmem:[%s168 + $0x7c] sm:$0xf]
        %v1146 = vld [vmem:[%s168 + $0x80] sm:$0xf]
        %v1147 = vld [vmem:[%s168 + $0x84] sm:$0xf]
        %s1148 = scalar_lea.vmem %s1, 12
        %v1149 = vld [vmem:[%s1148] sm:$0xf]
        %v1182 = vunpack.c.l.b16 %v1116
        %v1183 = vunpack.c.l.b16 %v1117
        %v1184 = vunpack.c.l.b16 %v1118
        %v1185 = vunpack.c.l.b16 %v1119
        %v1186 = vunpack.c.l.b16 %v1120
        %v1187 = vunpack.c.l.b16 %v1121
        %v1188 = vunpack.c.l.b16 %v1122
        %v1189 = vunpack.c.l.b16 %v1123
        %v1190 = vunpack.c.l.b16 %v1124
        %v1191 = vunpack.c.l.b16 %v1125
        %v1192 = vunpack.c.l.b16 %v1126
        %v1193 = vunpack.c.l.b16 %v1127
        %v1194 = vunpack.c.l.b16 %v1128
        %v1195 = vunpack.c.l.b16 %v1129
        %v1196 = vunpack.c.l.b16 %v1130
        %v1197 = vunpack.c.l.b16 %v1131
        %v1198 = vunpack.c.l.b16 %v1132
        %v1199 = vunpack.c.l.b16 %v1133
        %v1200 = vunpack.c.l.b16 %v1134
        %v1201 = vunpack.c.l.b16 %v1135
        %v1202 = vunpack.c.l.b16 %v1136
        %v1203 = vunpack.c.l.b16 %v1137
        %v1204 = vunpack.c.l.b16 %v1138
        %v1205 = vunpack.c.l.b16 %v1139
        %v1206 = vunpack.c.l.b16 %v1140
        %v1207 = vunpack.c.l.b16 %v1141
        %v1208 = vunpack.c.l.b16 %v1142
        %v1209 = vunpack.c.l.b16 %v1143
        %v1210 = vunpack.c.l.b16 %v1144
        %v1211 = vunpack.c.l.b16 %v1145
        %v1212 = vunpack.c.l.b16 %v1146
        %v1213 = vunpack.c.l.b16 %v1147
        %v1214 = vpack.c.b16 %v1183, %v1182
        %v1215 = vpack.c.b16 %v1185, %v1184
        %v1216 = vpack.c.b16 %v1187, %v1186
        %v1217 = vpack.c.b16 %v1189, %v1188
        %v1218 = vpack.c.b16 %v1191, %v1190
        %v1219 = vpack.c.b16 %v1193, %v1192
        %v1220 = vpack.c.b16 %v1195, %v1194
        %v1221 = vpack.c.b16 %v1197, %v1196
        %v1222 = vpack.c.b16 %v1199, %v1198
        %v1223 = vpack.c.b16 %v1201, %v1200
        %v1224 = vpack.c.b16 %v1203, %v1202
        %v1225 = vpack.c.b16 %v1205, %v1204
        %v1226 = vpack.c.b16 %v1207, %v1206
        %v1227 = vpack.c.b16 %v1209, %v1208
        %v1228 = vpack.c.b16 %v1211, %v1210
        %v1229 = vpack.c.b16 %v1213, %v1212
        %v1231 = vsel %vm422, %v1214, 0
        %v1234 = vsel %vm422, %v1215, 0
        %v1237 = vsel %vm422, %v1216, 0
        %v1240 = vsel %vm422, %v1217, 0
        %v1243 = vsel %vm422, %v1218, 0
        %v1246 = vsel %vm422, %v1219, 0
        %v1249 = vsel %vm422, %v1220, 0
        %v1252 = vsel %vm422, %v1221, 0
        %v1255 = vsel %vm422, %v1222, 0
        %v1258 = vsel %vm422, %v1223, 0
        %v1261 = vsel %vm422, %v1224, 0
        %v1264 = vsel %vm422, %v1225, 0
        %v1267 = vsel %vm422, %v1226, 0
        %v1270 = vsel %vm422, %v1227, 0
        %v1273 = vsel %vm422, %v1228, 0
        %v1276 = vsel %vm422, %v1229, 0
        %v1279 = vsel %vm471, %v1149, 0
        %1281 = vmatprep.subr.bf16.mxu0 0
        %1282 = vmatpush1.bf16.msra.mxu0 %v1279
        %1283 = vmatprep.subr.bf16.mxu0 0
        %1284 = vmatpush1.bf16.msra.mxu0 0
        %1285 = vmatprep.subr.bf16.mxu0 0
        %1286 = vmatpush1.bf16.msra.mxu0 0
        %1287 = vmatprep.subr.bf16.mxu0 0
        %1288 = vmatpush1.bf16.msra.mxu0 0
        %1289 = vmatprep.subr.bf16.mxu0 0
        %1290 = vmatpush1.bf16.msra.mxu0 0
        %1291 = vmatprep.subr.bf16.mxu0 0
        %1292 = vmatpush1.bf16.msra.mxu0 0
        %1293 = vmatprep.subr.bf16.mxu0 0
        %1294 = vmatpush1.bf16.msra.mxu0 0
        %1295 = vmatprep.subr.bf16.mxu0 0
        %1296 = vmatpush1.bf16.msra.mxu0 0
        %1297 = vmatprep.subr.bf16.mxu0 0
        %1298 = vmatpush1.bf16.msra.mxu0 0
        %1299 = vmatprep.subr.bf16.mxu0 0
        %1300 = vmatpush1.bf16.msra.mxu0 0
        %1301 = vmatprep.subr.bf16.mxu0 0
        %1302 = vmatpush1.bf16.msra.mxu0 0
        %1303 = vmatprep.subr.bf16.mxu0 0
        %1304 = vmatpush1.bf16.msra.mxu0 0
        %1305 = vmatprep.subr.bf16.mxu0 0
        %1306 = vmatpush1.bf16.msra.mxu0 0
        %1307 = vmatprep.subr.bf16.mxu0 0
        %1308 = vmatpush1.bf16.msra.mxu0 0
        %1309 = vmatprep.subr.bf16.mxu0 0
        %1310 = vmatpush1.bf16.msra.mxu0 0
        %1311 = vmatprep.subr.bf16.mxu0 0
        %1312 = vmatpush1.bf16.msra.mxu0 0
        %1313 = vmatprep.mubr.bf16.mxu0 0
        %1314 = vmatmul.mubr.bf16.gmra.mrb[0].mxu0 %v1231
        %v1315 = vpop.f32.mrb[0].mxu0
        %v1316 = vadd.f32 0.0, %v1315
        %v1317 = vpop.f32.mrb[0].mxu0
        %v1318 = vpop.f32.mrb[0].mxu0
        %v1319 = vadd.f32 0.0, %v1318
        %v1320 = vpop.f32.mrb[0].mxu0
        %1321 = vmatprep.mubr.bf16.mxu0 0
        %1322 = vmatmul.mubr.bf16.gmra.mrb[0].mxu0 %v1234
        %v1323 = vpop.f32.mrb[0].mxu0
        %v1324 = vadd.f32 0.0, %v1323
        %v1325 = vpop.f32.mrb[0].mxu0
        %v1326 = vpop.f32.mrb[0].mxu0
        %v1327 = vadd.f32 0.0, %v1326
        %v1328 = vpop.f32.mrb[0].mxu0
        %1329 = vmatprep.mubr.bf16.mxu0 0
        %1330 = vmatmul.mubr.bf16.gmra.mrb[0].mxu0 %v1237
        %v1331 = vpop.f32.mrb[0].mxu0
        %v1332 = vadd.f32 0.0, %v1331
        %v1333 = vpop.f32.mrb[0].mxu0
        %v1334 = vpop.f32.mrb[0].mxu0
        %v1335 = vadd.f32 0.0, %v1334
        %v1336 = vpop.f32.mrb[0].mxu0
        %1337 = vmatprep.mubr.bf16.mxu0 0
        %1338 = vmatmul.mubr.bf16.gmra.mrb[0].mxu0 %v1240
        %v1339 = vpop.f32.mrb[0].mxu0
        %v1340 = vadd.f32 0.0, %v1339
        %v1341 = vpop.f32.mrb[0].mxu0
        %v1342 = vpop.f32.mrb[0].mxu0
        %v1343 = vadd.f32 0.0, %v1342
        %v1344 = vpop.f32.mrb[0].mxu0
        %1345 = vmatprep.mubr.bf16.mxu0 0
        %1346 = vmatmul.mubr.bf16.gmra.mrb[0].mxu0 %v1243
        %v1347 = vpop.f32.mrb[0].mxu0
        %v1348 = vadd.f32 0.0, %v1347
        %v1349 = vpop.f32.mrb[0].mxu0
        %v1350 = vpop.f32.mrb[0].mxu0
        %v1351 = vadd.f32 0.0, %v1350
        %v1352 = vpop.f32.mrb[0].mxu0
        %1353 = vmatprep.mubr.bf16.mxu0 0
        %1354 = vmatmul.mubr.bf16.gmra.mrb[0].mxu0 %v1246
        %v1355 = vpop.f32.mrb[0].mxu0
        %v1356 = vadd.f32 0.0, %v1355
        %v1357 = vpop.f32.mrb[0].mxu0
        %v1358 = vpop.f32.mrb[0].mxu0
        %v1359 = vadd.f32 0.0, %v1358
        %v1360 = vpop.f32.mrb[0].mxu0
        %1361 = vmatprep.mubr.bf16.mxu0 0
        %1362 = vmatmul.mubr.bf16.gmra.mrb[0].mxu0 %v1249
        %v1363 = vpop.f32.mrb[0].mxu0
        %v1364 = vadd.f32 0.0, %v1363
        %v1365 = vpop.f32.mrb[0].mxu0
        %v1366 = vpop.f32.mrb[0].mxu0
        %v1367 = vadd.f32 0.0, %v1366
        %v1368 = vpop.f32.mrb[0].mxu0
        %1369 = vmatprep.mubr.bf16.mxu0 0
        %1370 = vmatmul.mubr.bf16.gmra.mrb[0].mxu0 %v1252
        %v1371 = vpop.f32.mrb[0].mxu0
        %v1372 = vadd.f32 0.0, %v1371
        %v1373 = vpop.f32.mrb[0].mxu0
        %v1374 = vpop.f32.mrb[0].mxu0
        %v1375 = vadd.f32 0.0, %v1374
        %v1376 = vpop.f32.mrb[0].mxu0
        %1377 = vmatprep.mubr.bf16.mxu0 0
        %1378 = vmatmul.mubr.bf16.gmra.mrb[0].mxu0 %v1255
        %v1379 = vpop.f32.mrb[0].mxu0
        %v1380 = vadd.f32 0.0, %v1379
        %v1381 = vpop.f32.mrb[0].mxu0
        %v1382 = vpop.f32.mrb[0].mxu0
        %v1383 = vadd.f32 0.0, %v1382
        %v1384 = vpop.f32.mrb[0].mxu0
        %1385 = vmatprep.mubr.bf16.mxu0 0
        %1386 = vmatmul.mubr.bf16.gmra.mrb[0].mxu0 %v1258
        %v1387 = vpop.f32.mrb[0].mxu0
        %v1388 = vadd.f32 0.0, %v1387
        %v1389 = vpop.f32.mrb[0].mxu0
        %v1390 = vpop.f32.mrb[0].mxu0
        %v1391 = vadd.f32 0.0, %v1390
        %v1392 = vpop.f32.mrb[0].mxu0
        %1393 = vmatprep.mubr.bf16.mxu0 0
        %1394 = vmatmul.mubr.bf16.gmra.mrb[0].mxu0 %v1261
        %v1395 = vpop.f32.mrb[0].mxu0
        %v1396 = vadd.f32 0.0, %v1395
        %v1397 = vpop.f32.mrb[0].mxu0
        %v1398 = vpop.f32.mrb[0].mxu0
        %v1399 = vadd.f32 0.0, %v1398
        %v1400 = vpop.f32.mrb[0].mxu0
        %1401 = vmatprep.mubr.bf16.mxu0 0
        %1402 = vmatmul.mubr.bf16.gmra.mrb[0].mxu0 %v1264
        %v1403 = vpop.f32.mrb[0].mxu0
        %v1404 = vadd.f32 0.0, %v1403
        %v1405 = vpop.f32.mrb[0].mxu0
        %v1406 = vpop.f32.mrb[0].mxu0
        %v1407 = vadd.f32 0.0, %v1406
        %v1408 = vpop.f32.mrb[0].mxu0
        %1409 = vmatprep.mubr.bf16.mxu0 0
        %1410 = vmatmul.mubr.bf16.gmra.mrb[0].mxu0 %v1267
        %v1411 = vpop.f32.mrb[0].mxu0
        %v1412 = vadd.f32 0.0, %v1411
        %v1413 = vpop.f32.mrb[0].mxu0
        %v1414 = vpop.f32.mrb[0].mxu0
        %v1415 = vadd.f32 0.0, %v1414
        %v1416 = vpop.f32.mrb[0].mxu0
        %1417 = vmatprep.mubr.bf16.mxu0 0
        %1418 = vmatmul.mubr.bf16.gmra.mrb[0].mxu0 %v1270
        %v1419 = vpop.f32.mrb[0].mxu0
        %v1420 = vadd.f32 0.0, %v1419
        %v1421 = vpop.f32.mrb[0].mxu0
        %v1422 = vpop.f32.mrb[0].mxu0
        %v1423 = vadd.f32 0.0, %v1422
        %v1424 = vpop.f32.mrb[0].mxu0
        %1425 = vmatprep.mubr.bf16.mxu0 0
        %1426 = vmatmul.mubr.bf16.gmra.mrb[0].mxu0 %v1273
        %v1427 = vpop.f32.mrb[0].mxu0
        %v1428 = vadd.f32 0.0, %v1427
        %v1429 = vpop.f32.mrb[0].mxu0
        %v1430 = vpop.f32.mrb[0].mxu0
        %v1431 = vadd.f32 0.0, %v1430
        %v1432 = vpop.f32.mrb[0].mxu0
        %1433 = vmatprep.mubr.bf16.mxu0 0
        %1434 = vmatmul.mubr.bf16.gmra.mrb[0].mxu0 %v1276
        %v1435 = vpop.f32.mrb[0].mxu0
        %v1436 = vadd.f32 0.0, %v1435
        %v1437 = vpop.f32.mrb[0].mxu0
        %v1438 = vpop.f32.mrb[0].mxu0
        %v1439 = vadd.f32 0.0, %v1438
        %v1440 = vpop.f32.mrb[0].mxu0
        %1441 = vdwg.mxu0
        %v1442 = vadd.f32 %v1084, %v1316
        %v1443 = vadd.f32 %v1085, %v1319
        %v1444 = vadd.f32 %v1086, %v1324
        %v1445 = vadd.f32 %v1087, %v1327
        %v1446 = vadd.f32 %v1088, %v1332
        %v1447 = vadd.f32 %v1089, %v1335
        %v1448 = vadd.f32 %v1090, %v1340
        %v1449 = vadd.f32 %v1091, %v1343
        %v1450 = vadd.f32 %v1092, %v1348
        %v1451 = vadd.f32 %v1093, %v1351
        %v1452 = vadd.f32 %v1094, %v1356
        %v1453 = vadd.f32 %v1095, %v1359
        %v1454 = vadd.f32 %v1096, %v1364
        %v1455 = vadd.f32 %v1097, %v1367
        %v1456 = vadd.f32 %v1098, %v1372
        %v1457 = vadd.f32 %v1099, %v1375
        %v1458 = vadd.f32 %v1100, %v1380
        %v1459 = vadd.f32 %v1101, %v1383
        %v1460 = vadd.f32 %v1102, %v1388
        %v1461 = vadd.f32 %v1103, %v1391
        %v1462 = vadd.f32 %v1104, %v1396
        %v1463 = vadd.f32 %v1105, %v1399
        %v1464 = vadd.f32 %v1106, %v1404
        %v1465 = vadd.f32 %v1107, %v1407
        %v1466 = vadd.f32 %v1108, %v1412
        %v1467 = vadd.f32 %v1109, %v1415
        %v1468 = vadd.f32 %v1110, %v1420
        %v1469 = vadd.f32 %v1111, %v1423
        %v1470 = vadd.f32 %v1112, %v1428
        %v1471 = vadd.f32 %v1113, %v1431
        %v1472 = vadd.f32 %v1114, %v1436
        %v1473 = vadd.f32 %v1115, %v1439
        %v1474 = vld [vmem:[%s168 + $0x8] sm:$0xf]
        %v1475 = vld [vmem:[%s168 + $0xc] sm:$0xf]
        %v1476 = vld [vmem:[%s168 + $0x10] sm:$0xf]
        %v1477 = vld [vmem:[%s168 + $0x14] sm:$0xf]
        %v1478 = vld [vmem:[%s168 + $0x18] sm:$0xf]
        %v1479 = vld [vmem:[%s168 + $0x1c] sm:$0xf]
        %v1480 = vld [vmem:[%s168 + $0x20] sm:$0xf]
        %v1481 = vld [vmem:[%s168 + $0x24] sm:$0xf]
        %v1482 = vld [vmem:[%s168 + $0x28] sm:$0xf]
        %v1483 = vld [vmem:[%s168 + $0x2c] sm:$0xf]
        %v1484 = vld [vmem:[%s168 + $0x30] sm:$0xf]
        %v1485 = vld [vmem:[%s168 + $0x34] sm:$0xf]
        %v1486 = vld [vmem:[%s168 + $0x38] sm:$0xf]
        %v1487 = vld [vmem:[%s168 + $0x3c] sm:$0xf]
        %v1488 = vld [vmem:[%s168 + $0x40] sm:$0xf]
        %v1489 = vld [vmem:[%s168 + $0x44] sm:$0xf]
        %v1490 = vld [vmem:[%s168 + $0x48] sm:$0xf]
        %v1491 = vld [vmem:[%s168 + $0x4c] sm:$0xf]
        %v1492 = vld [vmem:[%s168 + $0x50] sm:$0xf]
        %v1493 = vld [vmem:[%s168 + $0x54] sm:$0xf]
        %v1494 = vld [vmem:[%s168 + $0x58] sm:$0xf]
        %v1495 = vld [vmem:[%s168 + $0x5c] sm:$0xf]
        %v1496 = vld [vmem:[%s168 + $0x60] sm:$0xf]
        %v1497 = vld [vmem:[%s168 + $0x64] sm:$0xf]
        %v1498 = vld [vmem:[%s168 + $0x68] sm:$0xf]
        %v1499 = vld [vmem:[%s168 + $0x6c] sm:$0xf]
        %v1500 = vld [vmem:[%s168 + $0x70] sm:$0xf]
        %v1501 = vld [vmem:[%s168 + $0x74] sm:$0xf]
        %v1502 = vld [vmem:[%s168 + $0x78] sm:$0xf]
        %v1503 = vld [vmem:[%s168 + $0x7c] sm:$0xf]
        %v1504 = vld [vmem:[%s168 + $0x80] sm:$0xf]
        %v1505 = vld [vmem:[%s168 + $0x84] sm:$0xf]
        %v1506 = vld [vmem:[%s168 + $0x88] sm:$0x1]
        %s1507 = scalar_lea.vmem %s1, 16
        %v1508 = vld [vmem:[%s1507] sm:$0xf]
        %v1542 = vunpack.c.l.b16 %v1474
        %v1543 = vunpack.c.l.b16 %v1475
        %v1544 = vunpack.c.l.b16 %v1476
        %v1545 = vunpack.c.l.b16 %v1477
        %v1546 = vunpack.c.l.b16 %v1478
        %v1547 = vunpack.c.l.b16 %v1479
        %v1548 = vunpack.c.l.b16 %v1480
        %v1549 = vunpack.c.l.b16 %v1481
        %v1550 = vunpack.c.l.b16 %v1482
        %v1551 = vunpack.c.l.b16 %v1483
        %v1552 = vunpack.c.l.b16 %v1484
        %v1553 = vunpack.c.l.b16 %v1485
        %v1554 = vunpack.c.l.b16 %v1486
        %v1555 = vunpack.c.l.b16 %v1487
        %v1556 = vunpack.c.l.b16 %v1488
        %v1557 = vunpack.c.l.b16 %v1489
        %v1558 = vunpack.c.l.b16 %v1490
        %v1559 = vunpack.c.l.b16 %v1491
        %v1560 = vunpack.c.l.b16 %v1492
        %v1561 = vunpack.c.l.b16 %v1493
        %v1562 = vunpack.c.l.b16 %v1494
        %v1563 = vunpack.c.l.b16 %v1495
        %v1564 = vunpack.c.l.b16 %v1496
        %v1565 = vunpack.c.l.b16 %v1497
        %v1566 = vunpack.c.l.b16 %v1498
        %v1567 = vunpack.c.l.b16 %v1499
        %v1568 = vunpack.c.l.b16 %v1500
        %v1569 = vunpack.c.l.b16 %v1501
        %v1570 = vunpack.c.l.b16 %v1502
        %v1571 = vunpack.c.l.b16 %v1503
        %v1572 = vunpack.c.l.b16 %v1504
        %v1573 = vunpack.c.l.b16 %v1505
        %v1574 = vunpack.c.l.b16 %v1506
        %v1575 = vpack.c.b16 %v1543, %v1542
        %v1576 = vpack.c.b16 %v1545, %v1544
        %v1577 = vpack.c.b16 %v1547, %v1546
        %v1578 = vpack.c.b16 %v1549, %v1548
        %v1579 = vpack.c.b16 %v1551, %v1550
        %v1580 = vpack.c.b16 %v1553, %v1552
        %v1581 = vpack.c.b16 %v1555, %v1554
        %v1582 = vpack.c.b16 %v1557, %v1556
        %v1583 = vpack.c.b16 %v1559, %v1558
        %v1584 = vpack.c.b16 %v1561, %v1560
        %v1585 = vpack.c.b16 %v1563, %v1562
        %v1586 = vpack.c.b16 %v1565, %v1564
        %v1587 = vpack.c.b16 %v1567, %v1566
        %v1588 = vpack.c.b16 %v1569, %v1568
        %v1589 = vpack.c.b16 %v1571, %v1570
        %v1590 = vpack.c.b16 %v1573, %v1572
        %v1591 = vpack.c.b16 %v1574, %v1574
        %v1593 = vshrl.u32 %v1575, 16
        %v1595 = vshll.u32 %v1575, 16
        %v1597 = vrot.slane %v1595, 1
        %v1598 = vor.u32 %v1593, %v1597
        %v1600 = vshll.u32 %v1576, 16
        %v1602 = vrot.slane %v1600, 1
        %v1603 = vsel %vm289, %v1598, %v1602
        %v1604 = vshrl.u32 %v1576, 16
        %v1606 = vor.u32 %v1604, %v1602
        %v1608 = vshll.u32 %v1577, 16
        %v1610 = vrot.slane %v1608, 1
        %v1611 = vsel %vm289, %v1606, %v1610
        %v1612 = vshrl.u32 %v1577, 16
        %v1614 = vor.u32 %v1612, %v1610
        %v1616 = vshll.u32 %v1578, 16
        %v1618 = vrot.slane %v1616, 1
        %v1619 = vsel %vm289, %v1614, %v1618
        %v1620 = vshrl.u32 %v1578, 16
        %v1622 = vor.u32 %v1620, %v1618
        %v1624 = vshll.u32 %v1579, 16
        %v1626 = vrot.slane %v1624, 1
        %v1627 = vsel %vm289, %v1622, %v1626
        %v1628 = vshrl.u32 %v1579, 16
        %v1630 = vor.u32 %v1628, %v1626
        %v1632 = vshll.u32 %v1580, 16
        %v1634 = vrot.slane %v1632, 1
        %v1635 = vsel %vm289, %v1630, %v1634
        %v1636 = vshrl.u32 %v1580, 16
        %v1638 = vor.u32 %v1636, %v1634
        %v1640 = vshll.u32 %v1581, 16
        %v1642 = vrot.slane %v1640, 1
        %v1643 = vsel %vm289, %v1638, %v1642
        %v1644 = vshrl.u32 %v1581, 16
        %v1646 = vor.u32 %v1644, %v1642
        %v1648 = vshll.u32 %v1582, 16
        %v1650 = vrot.slane %v1648, 1
        %v1651 = vsel %vm289, %v1646, %v1650
        %v1652 = vshrl.u32 %v1582, 16
        %v1654 = vor.u32 %v1652, %v1650
        %v1656 = vshll.u32 %v1583, 16
        %v1658 = vrot.slane %v1656, 1
        %v1659 = vsel %vm289, %v1654, %v1658
        %v1660 = vshrl.u32 %v1583, 16
        %v1662 = vor.u32 %v1660, %v1658
        %v1664 = vshll.u32 %v1584, 16
        %v1666 = vrot.slane %v1664, 1
        %v1667 = vsel %vm289, %v1662, %v1666
        %v1668 = vshrl.u32 %v1584, 16
        %v1670 = vor.u32 %v1668, %v1666
        %v1672 = vshll.u32 %v1585, 16
        %v1674 = vrot.slane %v1672, 1
        %v1675 = vsel %vm289, %v1670, %v1674
        %v1676 = vshrl.u32 %v1585, 16
        %v1678 = vor.u32 %v1676, %v1674
        %v1680 = vshll.u32 %v1586, 16
        %v1682 = vrot.slane %v1680, 1
        %v1683 = vsel %vm289, %v1678, %v1682
        %v1684 = vshrl.u32 %v1586, 16
        %v1686 = vor.u32 %v1684, %v1682
        %v1688 = vshll.u32 %v1587, 16
        %v1690 = vrot.slane %v1688, 1
        %v1691 = vsel %vm289, %v1686, %v1690
        %v1692 = vshrl.u32 %v1587, 16
        %v1694 = vor.u32 %v1692, %v1690
        %v1696 = vshll.u32 %v1588, 16
        %v1698 = vrot.slane %v1696, 1
        %v1699 = vsel %vm289, %v1694, %v1698
        %v1700 = vshrl.u32 %v1588, 16
        %v1702 = vor.u32 %v1700, %v1698
        %v1704 = vshll.u32 %v1589, 16
        %v1706 = vrot.slane %v1704, 1
        %v1707 = vsel %vm289, %v1702, %v1706
        %v1708 = vshrl.u32 %v1589, 16
        %v1710 = vor.u32 %v1708, %v1706
        %v1712 = vshll.u32 %v1590, 16
        %v1714 = vrot.slane %v1712, 1
        %v1715 = vsel %vm289, %v1710, %v1714
        %v1716 = vshrl.u32 %v1590, 16
        %v1718 = vor.u32 %v1716, %v1714
        %v1720 = vshll.u32 %v1591, 16
        %v1722 = vrot.slane %v1720, 1
        %v1723 = vsel %vm289, %v1718, %v1722
        %v1725 = vsel %vm422, %v1603, 0
        %v1728 = vsel %vm422, %v1611, 0
        %v1731 = vsel %vm422, %v1619, 0
        %v1734 = vsel %vm422, %v1627, 0
        %v1737 = vsel %vm422, %v1635, 0
        %v1740 = vsel %vm422, %v1643, 0
        %v1743 = vsel %vm422, %v1651, 0
        %v1746 = vsel %vm422, %v1659, 0
        %v1749 = vsel %vm422, %v1667, 0
        %v1752 = vsel %vm422, %v1675, 0
        %v1755 = vsel %vm422, %v1683, 0
        %v1758 = vsel %vm422, %v1691, 0
        %v1761 = vsel %vm422, %v1699, 0
        %v1764 = vsel %vm422, %v1707, 0
        %v1767 = vsel %vm422, %v1715, 0
        %v1770 = vsel %vm422, %v1723, 0
        %v1773 = vsel %vm471, %v1508, 0
        %1775 = vmatprep.subr.bf16.mxu0 0
        %1776 = vmatpush1.bf16.msra.mxu0 %v1773
        %1777 = vmatprep.subr.bf16.mxu0 0
        %1778 = vmatpush1.bf16.msra.mxu0 0
        %1779 = vmatprep.subr.bf16.mxu0 0
        %1780 = vmatpush1.bf16.msra.mxu0 0
        %1781 = vmatprep.subr.bf16.mxu0 0
        %1782 = vmatpush1.bf16.msra.mxu0 0
        %1783 = vmatprep.subr.bf16.mxu0 0
        %1784 = vmatpush1.bf16.msra.mxu0 0
        %1785 = vmatprep.subr.bf16.mxu0 0
        %1786 = vmatpush1.bf16.msra.mxu0 0
        %1787 = vmatprep.subr.bf16.mxu0 0
        %1788 = vmatpush1.bf16.msra.mxu0 0
        %1789 = vmatprep.subr.bf16.mxu0 0
        %1790 = vmatpush1.bf16.msra.mxu0 0
        %1791 = vmatprep.subr.bf16.mxu0 0
        %1792 = vmatpush1.bf16.msra.mxu0 0
        %1793 = vmatprep.subr.bf16.mxu0 0
        %1794 = vmatpush1.bf16.msra.mxu0 0
        %1795 = vmatprep.subr.bf16.mxu0 0
        %1796 = vmatpush1.bf16.msra.mxu0 0
        %1797 = vmatprep.subr.bf16.mxu0 0
        %1798 = vmatpush1.bf16.msra.mxu0 0
        %1799 = vmatprep.subr.bf16.mxu0 0
        %1800 = vmatpush1.bf16.msra.mxu0 0
        %1801 = vmatprep.subr.bf16.mxu0 0
        %1802 = vmatpush1.bf16.msra.mxu0 0
        %1803 = vmatprep.subr.bf16.mxu0 0
        %1804 = vmatpush1.bf16.msra.mxu0 0
        %1805 = vmatprep.subr.bf16.mxu0 0
        %1806 = vmatpush1.bf16.msra.mxu0 0
        %1807 = vmatprep.mubr.bf16.mxu0 0
        %1808 = vmatmul.mubr.bf16.gmra.mrb[0].mxu0 %v1725
        %v1809 = vpop.f32.mrb[0].mxu0
        %v1810 = vadd.f32 0.0, %v1809
        %v1811 = vpop.f32.mrb[0].mxu0
        %v1812 = vpop.f32.mrb[0].mxu0
        %v1813 = vadd.f32 0.0, %v1812
        %v1814 = vpop.f32.mrb[0].mxu0
        %1815 = vmatprep.mubr.bf16.mxu0 0
        %1816 = vmatmul.mubr.bf16.gmra.mrb[0].mxu0 %v1728
        %v1817 = vpop.f32.mrb[0].mxu0
        %v1818 = vadd.f32 0.0, %v1817
        %v1819 = vpop.f32.mrb[0].mxu0
        %v1820 = vpop.f32.mrb[0].mxu0
        %v1821 = vadd.f32 0.0, %v1820
        %v1822 = vpop.f32.mrb[0].mxu0
        %1823 = vmatprep.mubr.bf16.mxu0 0
        %1824 = vmatmul.mubr.bf16.gmra.mrb[0].mxu0 %v1731
        %v1825 = vpop.f32.mrb[0].mxu0
        %v1826 = vadd.f32 0.0, %v1825
        %v1827 = vpop.f32.mrb[0].mxu0
        %v1828 = vpop.f32.mrb[0].mxu0
        %v1829 = vadd.f32 0.0, %v1828
        %v1830 = vpop.f32.mrb[0].mxu0
        %1831 = vmatprep.mubr.bf16.mxu0 0
        %1832 = vmatmul.mubr.bf16.gmra.mrb[0].mxu0 %v1734
        %v1833 = vpop.f32.mrb[0].mxu0
        %v1834 = vadd.f32 0.0, %v1833
        %v1835 = vpop.f32.mrb[0].mxu0
        %v1836 = vpop.f32.mrb[0].mxu0
        %v1837 = vadd.f32 0.0, %v1836
        %v1838 = vpop.f32.mrb[0].mxu0
        %1839 = vmatprep.mubr.bf16.mxu0 0
        %1840 = vmatmul.mubr.bf16.gmra.mrb[0].mxu0 %v1737
        %v1841 = vpop.f32.mrb[0].mxu0
        %v1842 = vadd.f32 0.0, %v1841
        %v1843 = vpop.f32.mrb[0].mxu0
        %v1844 = vpop.f32.mrb[0].mxu0
        %v1845 = vadd.f32 0.0, %v1844
        %v1846 = vpop.f32.mrb[0].mxu0
        %1847 = vmatprep.mubr.bf16.mxu0 0
        %1848 = vmatmul.mubr.bf16.gmra.mrb[0].mxu0 %v1740
        %v1849 = vpop.f32.mrb[0].mxu0
        %v1850 = vadd.f32 0.0, %v1849
        %v1851 = vpop.f32.mrb[0].mxu0
        %v1852 = vpop.f32.mrb[0].mxu0
        %v1853 = vadd.f32 0.0, %v1852
        %v1854 = vpop.f32.mrb[0].mxu0
        %1855 = vmatprep.mubr.bf16.mxu0 0
        %1856 = vmatmul.mubr.bf16.gmra.mrb[0].mxu0 %v1743
        %v1857 = vpop.f32.mrb[0].mxu0
        %v1858 = vadd.f32 0.0, %v1857
        %v1859 = vpop.f32.mrb[0].mxu0
        %v1860 = vpop.f32.mrb[0].mxu0
        %v1861 = vadd.f32 0.0, %v1860
        %v1862 = vpop.f32.mrb[0].mxu0
        %1863 = vmatprep.mubr.bf16.mxu0 0
        %1864 = vmatmul.mubr.bf16.gmra.mrb[0].mxu0 %v1746
        %v1865 = vpop.f32.mrb[0].mxu0
        %v1866 = vadd.f32 0.0, %v1865
        %v1867 = vpop.f32.mrb[0].mxu0
        %v1868 = vpop.f32.mrb[0].mxu0
        %v1869 = vadd.f32 0.0, %v1868
        %v1870 = vpop.f32.mrb[0].mxu0
        %1871 = vmatprep.mubr.bf16.mxu0 0
        %1872 = vmatmul.mubr.bf16.gmra.mrb[0].mxu0 %v1749
        %v1873 = vpop.f32.mrb[0].mxu0
        %v1874 = vadd.f32 0.0, %v1873
        %v1875 = vpop.f32.mrb[0].mxu0
        %v1876 = vpop.f32.mrb[0].mxu0
        %v1877 = vadd.f32 0.0, %v1876
        %v1878 = vpop.f32.mrb[0].mxu0
        %1879 = vmatprep.mubr.bf16.mxu0 0
        %1880 = vmatmul.mubr.bf16.gmra.mrb[0].mxu0 %v1752
        %v1881 = vpop.f32.mrb[0].mxu0
        %v1882 = vadd.f32 0.0, %v1881
        %v1883 = vpop.f32.mrb[0].mxu0
        %v1884 = vpop.f32.mrb[0].mxu0
        %v1885 = vadd.f32 0.0, %v1884
        %v1886 = vpop.f32.mrb[0].mxu0
        %1887 = vmatprep.mubr.bf16.mxu0 0
        %1888 = vmatmul.mubr.bf16.gmra.mrb[0].mxu0 %v1755
        %v1889 = vpop.f32.mrb[0].mxu0
        %v1890 = vadd.f32 0.0, %v1889
        %v1891 = vpop.f32.mrb[0].mxu0
        %v1892 = vpop.f32.mrb[0].mxu0
        %v1893 = vadd.f32 0.0, %v1892
        %v1894 = vpop.f32.mrb[0].mxu0
        %1895 = vmatprep.mubr.bf16.mxu0 0
        %1896 = vmatmul.mubr.bf16.gmra.mrb[0].mxu0 %v1758
        %v1897 = vpop.f32.mrb[0].mxu0
        %v1898 = vadd.f32 0.0, %v1897
        %v1899 = vpop.f32.mrb[0].mxu0
        %v1900 = vpop.f32.mrb[0].mxu0
        %v1901 = vadd.f32 0.0, %v1900
        %v1902 = vpop.f32.mrb[0].mxu0
        %1903 = vmatprep.mubr.bf16.mxu0 0
        %1904 = vmatmul.mubr.bf16.gmra.mrb[0].mxu0 %v1761
        %v1905 = vpop.f32.mrb[0].mxu0
        %v1906 = vadd.f32 0.0, %v1905
        %v1907 = vpop.f32.mrb[0].mxu0
        %v1908 = vpop.f32.mrb[0].mxu0
        %v1909 = vadd.f32 0.0, %v1908
        %v1910 = vpop.f32.mrb[0].mxu0
        %1911 = vmatprep.mubr.bf16.mxu0 0
        %1912 = vmatmul.mubr.bf16.gmra.mrb[0].mxu0 %v1764
        %v1913 = vpop.f32.mrb[0].mxu0
        %v1914 = vadd.f32 0.0, %v1913
        %v1915 = vpop.f32.mrb[0].mxu0
        %v1916 = vpop.f32.mrb[0].mxu0
        %v1917 = vadd.f32 0.0, %v1916
        %v1918 = vpop.f32.mrb[0].mxu0
        %1919 = vmatprep.mubr.bf16.mxu0 0
        %1920 = vmatmul.mubr.bf16.gmra.mrb[0].mxu0 %v1767
        %v1921 = vpop.f32.mrb[0].mxu0
        %v1922 = vadd.f32 0.0, %v1921
        %v1923 = vpop.f32.mrb[0].mxu0
        %v1924 = vpop.f32.mrb[0].mxu0
        %v1925 = vadd.f32 0.0, %v1924
        %v1926 = vpop.f32.mrb[0].mxu0
        %1927 = vmatprep.mubr.bf16.mxu0 0
        %1928 = vmatmul.mubr.bf16.gmra.mrb[0].mxu0 %v1770
        %v1929 = vpop.f32.mrb[0].mxu0
        %v1930 = vadd.f32 0.0, %v1929
        %v1931 = vpop.f32.mrb[0].mxu0
        %v1932 = vpop.f32.mrb[0].mxu0
        %v1933 = vadd.f32 0.0, %v1932
        %v1934 = vpop.f32.mrb[0].mxu0
        %1935 = vdwg.mxu0
        %v1936 = vadd.f32 %v1442, %v1810
        %v1937 = vadd.f32 %v1443, %v1813
        %v1938 = vadd.f32 %v1444, %v1818
        %v1939 = vadd.f32 %v1445, %v1821
        %v1940 = vadd.f32 %v1446, %v1826
        %v1941 = vadd.f32 %v1447, %v1829
        %v1942 = vadd.f32 %v1448, %v1834
        %v1943 = vadd.f32 %v1449, %v1837
        %v1944 = vadd.f32 %v1450, %v1842
        %v1945 = vadd.f32 %v1451, %v1845
        %v1946 = vadd.f32 %v1452, %v1850
        %v1947 = vadd.f32 %v1453, %v1853
        %v1948 = vadd.f32 %v1454, %v1858
        %v1949 = vadd.f32 %v1455, %v1861
        %v1950 = vadd.f32 %v1456, %v1866
        %v1951 = vadd.f32 %v1457, %v1869
        %v1952 = vadd.f32 %v1458, %v1874
        %v1953 = vadd.f32 %v1459, %v1877
        %v1954 = vadd.f32 %v1460, %v1882
        %v1955 = vadd.f32 %v1461, %v1885
        %v1956 = vadd.f32 %v1462, %v1890
        %v1957 = vadd.f32 %v1463, %v1893
        %v1958 = vadd.f32 %v1464, %v1898
        %v1959 = vadd.f32 %v1465, %v1901
        %v1960 = vadd.f32 %v1466, %v1906
        %v1961 = vadd.f32 %v1467, %v1909
        %v1962 = vadd.f32 %v1468, %v1914
        %v1963 = vadd.f32 %v1469, %v1917
        %v1964 = vadd.f32 %v1470, %v1922
        %v1965 = vadd.f32 %v1471, %v1925
        %v1966 = vadd.f32 %v1472, %v1930
        %v1967 = vadd.f32 %v1473, %v1933
        %v1968 = vld [vmem:[%s168 + $0x8] sm:$0xe]
        %s1969 = scalar_lea.vmem %s1, 20
        %v1970 = vld [vmem:[%s1969] sm:$0xf]
        %v1972 = vunpack.c.l.b16 %v1968
        %v1973 = vpack.c.b16 %v1543, %v1972
        %v1974 = vrot.slane %v1973, 1
        %v1975 = vrot.slane %v1576, 1
        %v1976 = vsel %vm838, %v1974, %v1975
        %v1977 = vrot.slane %v1577, 1
        %v1978 = vsel %vm838, %v1975, %v1977
        %v1979 = vrot.slane %v1578, 1
        %v1980 = vsel %vm838, %v1977, %v1979
        %v1981 = vrot.slane %v1579, 1
        %v1982 = vsel %vm838, %v1979, %v1981
        %v1983 = vrot.slane %v1580, 1
        %v1984 = vsel %vm838, %v1981, %v1983
        %v1985 = vrot.slane %v1581, 1
        %v1986 = vsel %vm838, %v1983, %v1985
        %v1987 = vrot.slane %v1582, 1
        %v1988 = vsel %vm838, %v1985, %v1987
        %v1989 = vrot.slane %v1583, 1
        %v1990 = vsel %vm838, %v1987, %v1989
        %v1991 = vrot.slane %v1584, 1
        %v1992 = vsel %vm838, %v1989, %v1991
        %v1993 = vrot.slane %v1585, 1
        %v1994 = vsel %vm838, %v1991, %v1993
        %v1995 = vrot.slane %v1586, 1
        %v1996 = vsel %vm838, %v1993, %v1995
        %v1997 = vrot.slane %v1587, 1
        %v1998 = vsel %vm838, %v1995, %v1997
        %v1999 = vrot.slane %v1588, 1
        %v2000 = vsel %vm838, %v1997, %v1999
        %v2001 = vrot.slane %v1589, 1
        %v2002 = vsel %vm838, %v1999, %v2001
        %v2003 = vrot.slane %v1590, 1
        %v2004 = vsel %vm838, %v2001, %v2003
        %v2005 = vrot.slane %v1591, 1
        %v2006 = vsel %vm838, %v2003, %v2005
        %v2008 = vsel %vm422, %v1976, 0
        %v2011 = vsel %vm422, %v1978, 0
        %v2014 = vsel %vm422, %v1980, 0
        %v2017 = vsel %vm422, %v1982, 0
        %v2020 = vsel %vm422, %v1984, 0
        %v2023 = vsel %vm422, %v1986, 0
        %v2026 = vsel %vm422, %v1988, 0
        %v2029 = vsel %vm422, %v1990, 0
        %v2032 = vsel %vm422, %v1992, 0
        %v2035 = vsel %vm422, %v1994, 0
        %v2038 = vsel %vm422, %v1996, 0
        %v2041 = vsel %vm422, %v1998, 0
        %v2044 = vsel %vm422, %v2000, 0
        %v2047 = vsel %vm422, %v2002, 0
        %v2050 = vsel %vm422, %v2004, 0
        %v2053 = vsel %vm422, %v2006, 0
        %v2056 = vsel %vm471, %v1970, 0
        %2058 = vmatprep.subr.bf16.mxu0 0
        %2059 = vmatpush1.bf16.msra.mxu0 %v2056
        %2060 = vmatprep.subr.bf16.mxu0 0
        %2061 = vmatpush1.bf16.msra.mxu0 0
        %2062 = vmatprep.subr.bf16.mxu0 0
        %2063 = vmatpush1.bf16.msra.mxu0 0
        %2064 = vmatprep.subr.bf16.mxu0 0
        %2065 = vmatpush1.bf16.msra.mxu0 0
        %2066 = vmatprep.subr.bf16.mxu0 0
        %2067 = vmatpush1.bf16.msra.mxu0 0
        %2068 = vmatprep.subr.bf16.mxu0 0
        %2069 = vmatpush1.bf16.msra.mxu0 0
        %2070 = vmatprep.subr.bf16.mxu0 0
        %2071 = vmatpush1.bf16.msra.mxu0 0
        %2072 = vmatprep.subr.bf16.mxu0 0
        %2073 = vmatpush1.bf16.msra.mxu0 0
        %2074 = vmatprep.subr.bf16.mxu0 0
        %2075 = vmatpush1.bf16.msra.mxu0 0
        %2076 = vmatprep.subr.bf16.mxu0 0
        %2077 = vmatpush1.bf16.msra.mxu0 0
        %2078 = vmatprep.subr.bf16.mxu0 0
        %2079 = vmatpush1.bf16.msra.mxu0 0
        %2080 = vmatprep.subr.bf16.mxu0 0
        %2081 = vmatpush1.bf16.msra.mxu0 0
        %2082 = vmatprep.subr.bf16.mxu0 0
        %2083 = vmatpush1.bf16.msra.mxu0 0
        %2084 = vmatprep.subr.bf16.mxu0 0
        %2085 = vmatpush1.bf16.msra.mxu0 0
        %2086 = vmatprep.subr.bf16.mxu0 0
        %2087 = vmatpush1.bf16.msra.mxu0 0
        %2088 = vmatprep.subr.bf16.mxu0 0
        %2089 = vmatpush1.bf16.msra.mxu0 0
        %2090 = vmatprep.mubr.bf16.mxu0 0
        %2091 = vmatmul.mubr.bf16.gmra.mrb[0].mxu0 %v2008
        %v2092 = vpop.f32.mrb[0].mxu0
        %v2093 = vadd.f32 0.0, %v2092
        %v2094 = vpop.f32.mrb[0].mxu0
        %v2095 = vpop.f32.mrb[0].mxu0
        %v2096 = vadd.f32 0.0, %v2095
        %v2097 = vpop.f32.mrb[0].mxu0
        %2098 = vmatprep.mubr.bf16.mxu0 0
        %2099 = vmatmul.mubr.bf16.gmra.mrb[0].mxu0 %v2011
        %v2100 = vpop.f32.mrb[0].mxu0
        %v2101 = vadd.f32 0.0, %v2100
        %v2102 = vpop.f32.mrb[0].mxu0
        %v2103 = vpop.f32.mrb[0].mxu0
        %v2104 = vadd.f32 0.0, %v2103
        %v2105 = vpop.f32.mrb[0].mxu0
        %2106 = vmatprep.mubr.bf16.mxu0 0
        %2107 = vmatmul.mubr.bf16.gmra.mrb[0].mxu0 %v2014
        %v2108 = vpop.f32.mrb[0].mxu0
        %v2109 = vadd.f32 0.0, %v2108
        %v2110 = vpop.f32.mrb[0].mxu0
        %v2111 = vpop.f32.mrb[0].mxu0
        %v2112 = vadd.f32 0.0, %v2111
        %v2113 = vpop.f32.mrb[0].mxu0
        %2114 = vmatprep.mubr.bf16.mxu0 0
        %2115 = vmatmul.mubr.bf16.gmra.mrb[0].mxu0 %v2017
        %v2116 = vpop.f32.mrb[0].mxu0
        %v2117 = vadd.f32 0.0, %v2116
        %v2118 = vpop.f32.mrb[0].mxu0
        %v2119 = vpop.f32.mrb[0].mxu0
        %v2120 = vadd.f32 0.0, %v2119
        %v2121 = vpop.f32.mrb[0].mxu0
        %2122 = vmatprep.mubr.bf16.mxu0 0
        %2123 = vmatmul.mubr.bf16.gmra.mrb[0].mxu0 %v2020
        %v2124 = vpop.f32.mrb[0].mxu0
        %v2125 = vadd.f32 0.0, %v2124
        %v2126 = vpop.f32.mrb[0].mxu0
        %v2127 = vpop.f32.mrb[0].mxu0
        %v2128 = vadd.f32 0.0, %v2127
        %v2129 = vpop.f32.mrb[0].mxu0
        %2130 = vmatprep.mubr.bf16.mxu0 0
        %2131 = vmatmul.mubr.bf16.gmra.mrb[0].mxu0 %v2023
        %v2132 = vpop.f32.mrb[0].mxu0
        %v2133 = vadd.f32 0.0, %v2132
        %v2134 = vpop.f32.mrb[0].mxu0
        %v2135 = vpop.f32.mrb[0].mxu0
        %v2136 = vadd.f32 0.0, %v2135
        %v2137 = vpop.f32.mrb[0].mxu0
        %2138 = vmatprep.mubr.bf16.mxu0 0
        %2139 = vmatmul.mubr.bf16.gmra.mrb[0].mxu0 %v2026
        %v2140 = vpop.f32.mrb[0].mxu0
        %v2141 = vadd.f32 0.0, %v2140
        %v2142 = vpop.f32.mrb[0].mxu0
        %v2143 = vpop.f32.mrb[0].mxu0
        %v2144 = vadd.f32 0.0, %v2143
        %v2145 = vpop.f32.mrb[0].mxu0
        %2146 = vmatprep.mubr.bf16.mxu0 0
        %2147 = vmatmul.mubr.bf16.gmra.mrb[0].mxu0 %v2029
        %v2148 = vpop.f32.mrb[0].mxu0
        %v2149 = vadd.f32 0.0, %v2148
        %v2150 = vpop.f32.mrb[0].mxu0
        %v2151 = vpop.f32.mrb[0].mxu0
        %v2152 = vadd.f32 0.0, %v2151
        %v2153 = vpop.f32.mrb[0].mxu0
        %2154 = vmatprep.mubr.bf16.mxu0 0
        %2155 = vmatmul.mubr.bf16.gmra.mrb[0].mxu0 %v2032
        %v2156 = vpop.f32.mrb[0].mxu0
        %v2157 = vadd.f32 0.0, %v2156
        %v2158 = vpop.f32.mrb[0].mxu0
        %v2159 = vpop.f32.mrb[0].mxu0
        %v2160 = vadd.f32 0.0, %v2159
        %v2161 = vpop.f32.mrb[0].mxu0
        %2162 = vmatprep.mubr.bf16.mxu0 0
        %2163 = vmatmul.mubr.bf16.gmra.mrb[0].mxu0 %v2035
        %v2164 = vpop.f32.mrb[0].mxu0
        %v2165 = vadd.f32 0.0, %v2164
        %v2166 = vpop.f32.mrb[0].mxu0
        %v2167 = vpop.f32.mrb[0].mxu0
        %v2168 = vadd.f32 0.0, %v2167
        %v2169 = vpop.f32.mrb[0].mxu0
        %2170 = vmatprep.mubr.bf16.mxu0 0
        %2171 = vmatmul.mubr.bf16.gmra.mrb[0].mxu0 %v2038
        %v2172 = vpop.f32.mrb[0].mxu0
        %v2173 = vadd.f32 0.0, %v2172
        %v2174 = vpop.f32.mrb[0].mxu0
        %v2175 = vpop.f32.mrb[0].mxu0
        %v2176 = vadd.f32 0.0, %v2175
        %v2177 = vpop.f32.mrb[0].mxu0
        %2178 = vmatprep.mubr.bf16.mxu0 0
        %2179 = vmatmul.mubr.bf16.gmra.mrb[0].mxu0 %v2041
        %v2180 = vpop.f32.mrb[0].mxu0
        %v2181 = vadd.f32 0.0, %v2180
        %v2182 = vpop.f32.mrb[0].mxu0
        %v2183 = vpop.f32.mrb[0].mxu0
        %v2184 = vadd.f32 0.0, %v2183
        %v2185 = vpop.f32.mrb[0].mxu0
        %2186 = vmatprep.mubr.bf16.mxu0 0
        %2187 = vmatmul.mubr.bf16.gmra.mrb[0].mxu0 %v2044
        %v2188 = vpop.f32.mrb[0].mxu0
        %v2189 = vadd.f32 0.0, %v2188
        %v2190 = vpop.f32.mrb[0].mxu0
        %v2191 = vpop.f32.mrb[0].mxu0
        %v2192 = vadd.f32 0.0, %v2191
        %v2193 = vpop.f32.mrb[0].mxu0
        %2194 = vmatprep.mubr.bf16.mxu0 0
        %2195 = vmatmul.mubr.bf16.gmra.mrb[0].mxu0 %v2047
        %v2196 = vpop.f32.mrb[0].mxu0
        %v2197 = vadd.f32 0.0, %v2196
        %v2198 = vpop.f32.mrb[0].mxu0
        %v2199 = vpop.f32.mrb[0].mxu0
        %v2200 = vadd.f32 0.0, %v2199
        %v2201 = vpop.f32.mrb[0].mxu0
        %2202 = vmatprep.mubr.bf16.mxu0 0
        %2203 = vmatmul.mubr.bf16.gmra.mrb[0].mxu0 %v2050
        %v2204 = vpop.f32.mrb[0].mxu0
        %v2205 = vadd.f32 0.0, %v2204
        %v2206 = vpop.f32.mrb[0].mxu0
        %v2207 = vpop.f32.mrb[0].mxu0
        %v2208 = vadd.f32 0.0, %v2207
        %v2209 = vpop.f32.mrb[0].mxu0
        %2210 = vmatprep.mubr.bf16.mxu0 0
        %2211 = vmatmul.mubr.bf16.gmra.mrb[0].mxu0 %v2053
        %v2212 = vpop.f32.mrb[0].mxu0
        %v2213 = vadd.f32 0.0, %v2212
        %v2214 = vpop.f32.mrb[0].mxu0
        %v2215 = vpop.f32.mrb[0].mxu0
        %v2216 = vadd.f32 0.0, %v2215
        %v2217 = vpop.f32.mrb[0].mxu0
        %2218 = vdwg.mxu0
        %v2219 = vadd.f32 %v1936, %v2093
        %v2220 = vadd.f32 %v1937, %v2096
        %v2221 = vadd.f32 %v1938, %v2101
        %v2222 = vadd.f32 %v1939, %v2104
        %v2223 = vadd.f32 %v1940, %v2109
        %v2224 = vadd.f32 %v1941, %v2112
        %v2225 = vadd.f32 %v1942, %v2117
        %v2226 = vadd.f32 %v1943, %v2120
        %v2227 = vadd.f32 %v1944, %v2125
        %v2228 = vadd.f32 %v1945, %v2128
        %v2229 = vadd.f32 %v1946, %v2133
        %v2230 = vadd.f32 %v1947, %v2136
        %v2231 = vadd.f32 %v1948, %v2141
        %v2232 = vadd.f32 %v1949, %v2144
        %v2233 = vadd.f32 %v1950, %v2149
        %v2234 = vadd.f32 %v1951, %v2152
        %v2235 = vadd.f32 %v1952, %v2157
        %v2236 = vadd.f32 %v1953, %v2160
        %v2237 = vadd.f32 %v1954, %v2165
        %v2238 = vadd.f32 %v1955, %v2168
        %v2239 = vadd.f32 %v1956, %v2173
        %v2240 = vadd.f32 %v1957, %v2176
        %v2241 = vadd.f32 %v1958, %v2181
        %v2242 = vadd.f32 %v1959, %v2184
        %v2243 = vadd.f32 %v1960, %v2189
        %v2244 = vadd.f32 %v1961, %v2192
        %v2245 = vadd.f32 %v1962, %v2197
        %v2246 = vadd.f32 %v1963, %v2200
        %v2247 = vadd.f32 %v1964, %v2205
        %v2248 = vadd.f32 %v1965, %v2208
        %v2249 = vadd.f32 %v1966, %v2213
        %v2250 = vadd.f32 %v1967, %v2216
        %v2251 = vld [vmem:[%s168 + $0x10] sm:$0xf]
        %v2252 = vld [vmem:[%s168 + $0x14] sm:$0xf]
        %v2253 = vld [vmem:[%s168 + $0x18] sm:$0xf]
        %v2254 = vld [vmem:[%s168 + $0x1c] sm:$0xf]
        %v2255 = vld [vmem:[%s168 + $0x20] sm:$0xf]
        %v2256 = vld [vmem:[%s168 + $0x24] sm:$0xf]
        %v2257 = vld [vmem:[%s168 + $0x28] sm:$0xf]
        %v2258 = vld [vmem:[%s168 + $0x2c] sm:$0xf]
        %v2259 = vld [vmem:[%s168 + $0x30] sm:$0xf]
        %v2260 = vld [vmem:[%s168 + $0x34] sm:$0xf]
        %v2261 = vld [vmem:[%s168 + $0x38] sm:$0xf]
        %v2262 = vld [vmem:[%s168 + $0x3c] sm:$0xf]
        %v2263 = vld [vmem:[%s168 + $0x40] sm:$0xf]
        %v2264 = vld [vmem:[%s168 + $0x44] sm:$0xf]
        %v2265 = vld [vmem:[%s168 + $0x48] sm:$0xf]
        %v2266 = vld [vmem:[%s168 + $0x4c] sm:$0xf]
        %v2267 = vld [vmem:[%s168 + $0x50] sm:$0xf]
        %v2268 = vld [vmem:[%s168 + $0x54] sm:$0xf]
        %v2269 = vld [vmem:[%s168 + $0x58] sm:$0xf]
        %v2270 = vld [vmem:[%s168 + $0x5c] sm:$0xf]
        %v2271 = vld [vmem:[%s168 + $0x60] sm:$0xf]
        %v2272 = vld [vmem:[%s168 + $0x64] sm:$0xf]
        %v2273 = vld [vmem:[%s168 + $0x68] sm:$0xf]
        %v2274 = vld [vmem:[%s168 + $0x6c] sm:$0xf]
        %v2275 = vld [vmem:[%s168 + $0x70] sm:$0xf]
        %v2276 = vld [vmem:[%s168 + $0x74] sm:$0xf]
        %v2277 = vld [vmem:[%s168 + $0x78] sm:$0xf]
        %v2278 = vld [vmem:[%s168 + $0x7c] sm:$0xf]
        %v2279 = vld [vmem:[%s168 + $0x80] sm:$0xf]
        %v2280 = vld [vmem:[%s168 + $0x84] sm:$0xf]
        %v2281 = vld [vmem:[%s168 + $0x88] sm:$0xf]
        %v2282 = vld [vmem:[%s168 + $0x8c] sm:$0xf]
        %s2283 = scalar_lea.vmem %s1, 24
        %v2284 = vld [vmem:[%s2283] sm:$0xf]
        %v2317 = vunpack.c.l.b16 %v2251
        %v2318 = vunpack.c.l.b16 %v2252
        %v2319 = vunpack.c.l.b16 %v2253
        %v2320 = vunpack.c.l.b16 %v2254
        %v2321 = vunpack.c.l.b16 %v2255
        %v2322 = vunpack.c.l.b16 %v2256
        %v2323 = vunpack.c.l.b16 %v2257
        %v2324 = vunpack.c.l.b16 %v2258
        %v2325 = vunpack.c.l.b16 %v2259
        %v2326 = vunpack.c.l.b16 %v2260
        %v2327 = vunpack.c.l.b16 %v2261
        %v2328 = vunpack.c.l.b16 %v2262
        %v2329 = vunpack.c.l.b16 %v2263
        %v2330 = vunpack.c.l.b16 %v2264
        %v2331 = vunpack.c.l.b16 %v2265
        %v2332 = vunpack.c.l.b16 %v2266
        %v2333 = vunpack.c.l.b16 %v2267
        %v2334 = vunpack.c.l.b16 %v2268
        %v2335 = vunpack.c.l.b16 %v2269
        %v2336 = vunpack.c.l.b16 %v2270
        %v2337 = vunpack.c.l.b16 %v2271
        %v2338 = vunpack.c.l.b16 %v2272
        %v2339 = vunpack.c.l.b16 %v2273
        %v2340 = vunpack.c.l.b16 %v2274
        %v2341 = vunpack.c.l.b16 %v2275
        %v2342 = vunpack.c.l.b16 %v2276
        %v2343 = vunpack.c.l.b16 %v2277
        %v2344 = vunpack.c.l.b16 %v2278
        %v2345 = vunpack.c.l.b16 %v2279
        %v2346 = vunpack.c.l.b16 %v2280
        %v2347 = vunpack.c.l.b16 %v2281
        %v2348 = vunpack.c.l.b16 %v2282
        %v2349 = vpack.c.b16 %v2318, %v2317
        %v2350 = vpack.c.b16 %v2320, %v2319
        %v2351 = vpack.c.b16 %v2322, %v2321
        %v2352 = vpack.c.b16 %v2324, %v2323
        %v2353 = vpack.c.b16 %v2326, %v2325
        %v2354 = vpack.c.b16 %v2328, %v2327
        %v2355 = vpack.c.b16 %v2330, %v2329
        %v2356 = vpack.c.b16 %v2332, %v2331
        %v2357 = vpack.c.b16 %v2334, %v2333
        %v2358 = vpack.c.b16 %v2336, %v2335
        %v2359 = vpack.c.b16 %v2338, %v2337
        %v2360 = vpack.c.b16 %v2340, %v2339
        %v2361 = vpack.c.b16 %v2342, %v2341
        %v2362 = vpack.c.b16 %v2344, %v2343
        %v2363 = vpack.c.b16 %v2346, %v2345
        %v2364 = vpack.c.b16 %v2348, %v2347
        %v2366 = vsel %vm422, %v2349, 0
        %v2369 = vsel %vm422, %v2350, 0
        %v2372 = vsel %vm422, %v2351, 0
        %v2375 = vsel %vm422, %v2352, 0
        %v2378 = vsel %vm422, %v2353, 0
        %v2381 = vsel %vm422, %v2354, 0
        %v2384 = vsel %vm422, %v2355, 0
        %v2387 = vsel %vm422, %v2356, 0
        %v2390 = vsel %vm422, %v2357, 0
        %v2393 = vsel %vm422, %v2358, 0
        %v2396 = vsel %vm422, %v2359, 0
        %v2399 = vsel %vm422, %v2360, 0
        %v2402 = vsel %vm422, %v2361, 0
        %v2405 = vsel %vm422, %v2362, 0
        %v2408 = vsel %vm422, %v2363, 0
        %v2411 = vsel %vm422, %v2364, 0
        %v2414 = vsel %vm471, %v2284, 0
        %2416 = vmatprep.subr.bf16.mxu0 0
        %2417 = vmatpush1.bf16.msra.mxu0 %v2414
        %2418 = vmatprep.subr.bf16.mxu0 0
        %2419 = vmatpush1.bf16.msra.mxu0 0
        %2420 = vmatprep.subr.bf16.mxu0 0
        %2421 = vmatpush1.bf16.msra.mxu0 0
        %2422 = vmatprep.subr.bf16.mxu0 0
        %2423 = vmatpush1.bf16.msra.mxu0 0
        %2424 = vmatprep.subr.bf16.mxu0 0
        %2425 = vmatpush1.bf16.msra.mxu0 0
        %2426 = vmatprep.subr.bf16.mxu0 0
        %2427 = vmatpush1.bf16.msra.mxu0 0
        %2428 = vmatprep.subr.bf16.mxu0 0
        %2429 = vmatpush1.bf16.msra.mxu0 0
        %2430 = vmatprep.subr.bf16.mxu0 0
        %2431 = vmatpush1.bf16.msra.mxu0 0
        %2432 = vmatprep.subr.bf16.mxu0 0
        %2433 = vmatpush1.bf16.msra.mxu0 0
        %2434 = vmatprep.subr.bf16.mxu0 0
        %2435 = vmatpush1.bf16.msra.mxu0 0
        %2436 = vmatprep.subr.bf16.mxu0 0
        %2437 = vmatpush1.bf16.msra.mxu0 0
        %2438 = vmatprep.subr.bf16.mxu0 0
        %2439 = vmatpush1.bf16.msra.mxu0 0
        %2440 = vmatprep.subr.bf16.mxu0 0
        %2441 = vmatpush1.bf16.msra.mxu0 0
        %2442 = vmatprep.subr.bf16.mxu0 0
        %2443 = vmatpush1.bf16.msra.mxu0 0
        %2444 = vmatprep.subr.bf16.mxu0 0
        %2445 = vmatpush1.bf16.msra.mxu0 0
        %2446 = vmatprep.subr.bf16.mxu0 0
        %2447 = vmatpush1.bf16.msra.mxu0 0
        %2448 = vmatprep.mubr.bf16.mxu0 0
        %2449 = vmatmul.mubr.bf16.gmra.mrb[0].mxu0 %v2366
        %v2450 = vpop.f32.mrb[0].mxu0
        %v2451 = vadd.f32 0.0, %v2450
        %v2452 = vpop.f32.mrb[0].mxu0
        %v2453 = vpop.f32.mrb[0].mxu0
        %v2454 = vadd.f32 0.0, %v2453
        %v2455 = vpop.f32.mrb[0].mxu0
        %2456 = vmatprep.mubr.bf16.mxu0 0
        %2457 = vmatmul.mubr.bf16.gmra.mrb[0].mxu0 %v2369
        %v2458 = vpop.f32.mrb[0].mxu0
        %v2459 = vadd.f32 0.0, %v2458
        %v2460 = vpop.f32.mrb[0].mxu0
        %v2461 = vpop.f32.mrb[0].mxu0
        %v2462 = vadd.f32 0.0, %v2461
        %v2463 = vpop.f32.mrb[0].mxu0
        %2464 = vmatprep.mubr.bf16.mxu0 0
        %2465 = vmatmul.mubr.bf16.gmra.mrb[0].mxu0 %v2372
        %v2466 = vpop.f32.mrb[0].mxu0
        %v2467 = vadd.f32 0.0, %v2466
        %v2468 = vpop.f32.mrb[0].mxu0
        %v2469 = vpop.f32.mrb[0].mxu0
        %v2470 = vadd.f32 0.0, %v2469
        %v2471 = vpop.f32.mrb[0].mxu0
        %2472 = vmatprep.mubr.bf16.mxu0 0
        %2473 = vmatmul.mubr.bf16.gmra.mrb[0].mxu0 %v2375
        %v2474 = vpop.f32.mrb[0].mxu0
        %v2475 = vadd.f32 0.0, %v2474
        %v2476 = vpop.f32.mrb[0].mxu0
        %v2477 = vpop.f32.mrb[0].mxu0
        %v2478 = vadd.f32 0.0, %v2477
        %v2479 = vpop.f32.mrb[0].mxu0
        %2480 = vmatprep.mubr.bf16.mxu0 0
        %2481 = vmatmul.mubr.bf16.gmra.mrb[0].mxu0 %v2378
        %v2482 = vpop.f32.mrb[0].mxu0
        %v2483 = vadd.f32 0.0, %v2482
        %v2484 = vpop.f32.mrb[0].mxu0
        %v2485 = vpop.f32.mrb[0].mxu0
        %v2486 = vadd.f32 0.0, %v2485
        %v2487 = vpop.f32.mrb[0].mxu0
        %2488 = vmatprep.mubr.bf16.mxu0 0
        %2489 = vmatmul.mubr.bf16.gmra.mrb[0].mxu0 %v2381
        %v2490 = vpop.f32.mrb[0].mxu0
        %v2491 = vadd.f32 0.0, %v2490
        %v2492 = vpop.f32.mrb[0].mxu0
        %v2493 = vpop.f32.mrb[0].mxu0
        %v2494 = vadd.f32 0.0, %v2493
        %v2495 = vpop.f32.mrb[0].mxu0
        %2496 = vmatprep.mubr.bf16.mxu0 0
        %2497 = vmatmul.mubr.bf16.gmra.mrb[0].mxu0 %v2384
        %v2498 = vpop.f32.mrb[0].mxu0
        %v2499 = vadd.f32 0.0, %v2498
        %v2500 = vpop.f32.mrb[0].mxu0
        %v2501 = vpop.f32.mrb[0].mxu0
        %v2502 = vadd.f32 0.0, %v2501
        %v2503 = vpop.f32.mrb[0].mxu0
        %2504 = vmatprep.mubr.bf16.mxu0 0
        %2505 = vmatmul.mubr.bf16.gmra.mrb[0].mxu0 %v2387
        %v2506 = vpop.f32.mrb[0].mxu0
        %v2507 = vadd.f32 0.0, %v2506
        %v2508 = vpop.f32.mrb[0].mxu0
        %v2509 = vpop.f32.mrb[0].mxu0
        %v2510 = vadd.f32 0.0, %v2509
        %v2511 = vpop.f32.mrb[0].mxu0
        %2512 = vmatprep.mubr.bf16.mxu0 0
        %2513 = vmatmul.mubr.bf16.gmra.mrb[0].mxu0 %v2390
        %v2514 = vpop.f32.mrb[0].mxu0
        %v2515 = vadd.f32 0.0, %v2514
        %v2516 = vpop.f32.mrb[0].mxu0
        %v2517 = vpop.f32.mrb[0].mxu0
        %v2518 = vadd.f32 0.0, %v2517
        %v2519 = vpop.f32.mrb[0].mxu0
        %2520 = vmatprep.mubr.bf16.mxu0 0
        %2521 = vmatmul.mubr.bf16.gmra.mrb[0].mxu0 %v2393
        %v2522 = vpop.f32.mrb[0].mxu0
        %v2523 = vadd.f32 0.0, %v2522
        %v2524 = vpop.f32.mrb[0].mxu0
        %v2525 = vpop.f32.mrb[0].mxu0
        %v2526 = vadd.f32 0.0, %v2525
        %v2527 = vpop.f32.mrb[0].mxu0
        %2528 = vmatprep.mubr.bf16.mxu0 0
        %2529 = vmatmul.mubr.bf16.gmra.mrb[0].mxu0 %v2396
        %v2530 = vpop.f32.mrb[0].mxu0
        %v2531 = vadd.f32 0.0, %v2530
        %v2532 = vpop.f32.mrb[0].mxu0
        %v2533 = vpop.f32.mrb[0].mxu0
        %v2534 = vadd.f32 0.0, %v2533
        %v2535 = vpop.f32.mrb[0].mxu0
        %2536 = vmatprep.mubr.bf16.mxu0 0
        %2537 = vmatmul.mubr.bf16.gmra.mrb[0].mxu0 %v2399
        %v2538 = vpop.f32.mrb[0].mxu0
        %v2539 = vadd.f32 0.0, %v2538
        %v2540 = vpop.f32.mrb[0].mxu0
        %v2541 = vpop.f32.mrb[0].mxu0
        %v2542 = vadd.f32 0.0, %v2541
        %v2543 = vpop.f32.mrb[0].mxu0
        %2544 = vmatprep.mubr.bf16.mxu0 0
        %2545 = vmatmul.mubr.bf16.gmra.mrb[0].mxu0 %v2402
        %v2546 = vpop.f32.mrb[0].mxu0
        %v2547 = vadd.f32 0.0, %v2546
        %v2548 = vpop.f32.mrb[0].mxu0
        %v2549 = vpop.f32.mrb[0].mxu0
        %v2550 = vadd.f32 0.0, %v2549
        %v2551 = vpop.f32.mrb[0].mxu0
        %2552 = vmatprep.mubr.bf16.mxu0 0
        %2553 = vmatmul.mubr.bf16.gmra.mrb[0].mxu0 %v2405
        %v2554 = vpop.f32.mrb[0].mxu0
        %v2555 = vadd.f32 0.0, %v2554
        %v2556 = vpop.f32.mrb[0].mxu0
        %v2557 = vpop.f32.mrb[0].mxu0
        %v2558 = vadd.f32 0.0, %v2557
        %v2559 = vpop.f32.mrb[0].mxu0
        %2560 = vmatprep.mubr.bf16.mxu0 0
        %2561 = vmatmul.mubr.bf16.gmra.mrb[0].mxu0 %v2408
        %v2562 = vpop.f32.mrb[0].mxu0
        %v2563 = vadd.f32 0.0, %v2562
        %v2564 = vpop.f32.mrb[0].mxu0
        %v2565 = vpop.f32.mrb[0].mxu0
        %v2566 = vadd.f32 0.0, %v2565
        %v2567 = vpop.f32.mrb[0].mxu0
        %2568 = vmatprep.mubr.bf16.mxu0 0
        %2569 = vmatmul.mubr.bf16.gmra.mrb[0].mxu0 %v2411
        %v2570 = vpop.f32.mrb[0].mxu0
        %v2571 = vadd.f32 0.0, %v2570
        %v2572 = vpop.f32.mrb[0].mxu0
        %v2573 = vpop.f32.mrb[0].mxu0
        %v2574 = vadd.f32 0.0, %v2573
        %v2575 = vpop.f32.mrb[0].mxu0
        %2576 = vdwg.mxu0
        %v2577 = vadd.f32 %v2219, %v2451
        %v2578 = vadd.f32 %v2220, %v2454
        %v2579 = vadd.f32 %v2221, %v2459
        %v2580 = vadd.f32 %v2222, %v2462
        %v2581 = vadd.f32 %v2223, %v2467
        %v2582 = vadd.f32 %v2224, %v2470
        %v2583 = vadd.f32 %v2225, %v2475
        %v2584 = vadd.f32 %v2226, %v2478
        %v2585 = vadd.f32 %v2227, %v2483
        %v2586 = vadd.f32 %v2228, %v2486
        %v2587 = vadd.f32 %v2229, %v2491
        %v2588 = vadd.f32 %v2230, %v2494
        %v2589 = vadd.f32 %v2231, %v2499
        %v2590 = vadd.f32 %v2232, %v2502
        %v2591 = vadd.f32 %v2233, %v2507
        %v2592 = vadd.f32 %v2234, %v2510
        %v2593 = vadd.f32 %v2235, %v2515
        %v2594 = vadd.f32 %v2236, %v2518
        %v2595 = vadd.f32 %v2237, %v2523
        %v2596 = vadd.f32 %v2238, %v2526
        %v2597 = vadd.f32 %v2239, %v2531
        %v2598 = vadd.f32 %v2240, %v2534
        %v2599 = vadd.f32 %v2241, %v2539
        %v2600 = vadd.f32 %v2242, %v2542
        %v2601 = vadd.f32 %v2243, %v2547
        %v2602 = vadd.f32 %v2244, %v2550
        %v2603 = vadd.f32 %v2245, %v2555
        %v2604 = vadd.f32 %v2246, %v2558
        %v2605 = vadd.f32 %v2247, %v2563
        %v2606 = vadd.f32 %v2248, %v2566
        %v2607 = vadd.f32 %v2249, %v2571
        %v2608 = vadd.f32 %v2250, %v2574
        %v2609 = vld [vmem:[%s168 + $0x10] sm:$0xf]
        %v2610 = vld [vmem:[%s168 + $0x14] sm:$0xf]
        %v2611 = vld [vmem:[%s168 + $0x18] sm:$0xf]
        %v2612 = vld [vmem:[%s168 + $0x1c] sm:$0xf]
        %v2613 = vld [vmem:[%s168 + $0x20] sm:$0xf]
        %v2614 = vld [vmem:[%s168 + $0x24] sm:$0xf]
        %v2615 = vld [vmem:[%s168 + $0x28] sm:$0xf]
        %v2616 = vld [vmem:[%s168 + $0x2c] sm:$0xf]
        %v2617 = vld [vmem:[%s168 + $0x30] sm:$0xf]
        %v2618 = vld [vmem:[%s168 + $0x34] sm:$0xf]
        %v2619 = vld [vmem:[%s168 + $0x38] sm:$0xf]
        %v2620 = vld [vmem:[%s168 + $0x3c] sm:$0xf]
        %v2621 = vld [vmem:[%s168 + $0x40] sm:$0xf]
        %v2622 = vld [vmem:[%s168 + $0x44] sm:$0xf]
        %v2623 = vld [vmem:[%s168 + $0x48] sm:$0xf]
        %v2624 = vld [vmem:[%s168 + $0x4c] sm:$0xf]
        %v2625 = vld [vmem:[%s168 + $0x50] sm:$0xf]
        %v2626 = vld [vmem:[%s168 + $0x54] sm:$0xf]
        %v2627 = vld [vmem:[%s168 + $0x58] sm:$0xf]
        %v2628 = vld [vmem:[%s168 + $0x5c] sm:$0xf]
        %v2629 = vld [vmem:[%s168 + $0x60] sm:$0xf]
        %v2630 = vld [vmem:[%s168 + $0x64] sm:$0xf]
        %v2631 = vld [vmem:[%s168 + $0x68] sm:$0xf]
        %v2632 = vld [vmem:[%s168 + $0x6c] sm:$0xf]
        %v2633 = vld [vmem:[%s168 + $0x70] sm:$0xf]
        %v2634 = vld [vmem:[%s168 + $0x74] sm:$0xf]
        %v2635 = vld [vmem:[%s168 + $0x78] sm:$0xf]
        %v2636 = vld [vmem:[%s168 + $0x7c] sm:$0xf]
        %v2637 = vld [vmem:[%s168 + $0x80] sm:$0xf]
        %v2638 = vld [vmem:[%s168 + $0x84] sm:$0xf]
        %v2639 = vld [vmem:[%s168 + $0x88] sm:$0xf]
        %v2640 = vld [vmem:[%s168 + $0x8c] sm:$0xf]
        %v2641 = vld [vmem:[%s168 + $0x90] sm:$0x1]
        %s2642 = scalar_lea.vmem %s1, 28
        %v2643 = vld [vmem:[%s2642] sm:$0xf]
        %v2677 = vunpack.c.l.b16 %v2609
        %v2678 = vunpack.c.l.b16 %v2610
        %v2679 = vunpack.c.l.b16 %v2611
        %v2680 = vunpack.c.l.b16 %v2612
        %v2681 = vunpack.c.l.b16 %v2613
        %v2682 = vunpack.c.l.b16 %v2614
        %v2683 = vunpack.c.l.b16 %v2615
        %v2684 = vunpack.c.l.b16 %v2616
        %v2685 = vunpack.c.l.b16 %v2617
        %v2686 = vunpack.c.l.b16 %v2618
        %v2687 = vunpack.c.l.b16 %v2619
        %v2688 = vunpack.c.l.b16 %v2620
        %v2689 = vunpack.c.l.b16 %v2621
        %v2690 = vunpack.c.l.b16 %v2622
        %v2691 = vunpack.c.l.b16 %v2623
        %v2692 = vunpack.c.l.b16 %v2624
        %v2693 = vunpack.c.l.b16 %v2625
        %v2694 = vunpack.c.l.b16 %v2626
        %v2695 = vunpack.c.l.b16 %v2627
        %v2696 = vunpack.c.l.b16 %v2628
        %v2697 = vunpack.c.l.b16 %v2629
        %v2698 = vunpack.c.l.b16 %v2630
        %v2699 = vunpack.c.l.b16 %v2631
        %v2700 = vunpack.c.l.b16 %v2632
        %v2701 = vunpack.c.l.b16 %v2633
        %v2702 = vunpack.c.l.b16 %v2634
        %v2703 = vunpack.c.l.b16 %v2635
        %v2704 = vunpack.c.l.b16 %v2636
        %v2705 = vunpack.c.l.b16 %v2637
        %v2706 = vunpack.c.l.b16 %v2638
        %v2707 = vunpack.c.l.b16 %v2639
        %v2708 = vunpack.c.l.b16 %v2640
        %v2709 = vunpack.c.l.b16 %v2641
        %v2710 = vpack.c.b16 %v2678, %v2677
        %v2711 = vpack.c.b16 %v2680, %v2679
        %v2712 = vpack.c.b16 %v2682, %v2681
        %v2713 = vpack.c.b16 %v2684, %v2683
        %v2714 = vpack.c.b16 %v2686, %v2685
        %v2715 = vpack.c.b16 %v2688, %v2687
        %v2716 = vpack.c.b16 %v2690, %v2689
        %v2717 = vpack.c.b16 %v2692, %v2691
        %v2718 = vpack.c.b16 %v2694, %v2693
        %v2719 = vpack.c.b16 %v2696, %v2695
        %v2720 = vpack.c.b16 %v2698, %v2697
        %v2721 = vpack.c.b16 %v2700, %v2699
        %v2722 = vpack.c.b16 %v2702, %v2701
        %v2723 = vpack.c.b16 %v2704, %v2703
        %v2724 = vpack.c.b16 %v2706, %v2705
        %v2725 = vpack.c.b16 %v2708, %v2707
        %v2726 = vpack.c.b16 %v2709, %v2709
        %v2728 = vshrl.u32 %v2710, 16
        %v2730 = vshll.u32 %v2710, 16
        %v2732 = vrot.slane %v2730, 1
        %v2733 = vor.u32 %v2728, %v2732
        %v2735 = vshll.u32 %v2711, 16
        %v2737 = vrot.slane %v2735, 1
        %v2738 = vsel %vm289, %v2733, %v2737
        %v2739 = vshrl.u32 %v2711, 16
        %v2741 = vor.u32 %v2739, %v2737
        %v2743 = vshll.u32 %v2712, 16
        %v2745 = vrot.slane %v2743, 1
        %v2746 = vsel %vm289, %v2741, %v2745
        %v2747 = vshrl.u32 %v2712, 16
        %v2749 = vor.u32 %v2747, %v2745
        %v2751 = vshll.u32 %v2713, 16
        %v2753 = vrot.slane %v2751, 1
        %v2754 = vsel %vm289, %v2749, %v2753
        %v2755 = vshrl.u32 %v2713, 16
        %v2757 = vor.u32 %v2755, %v2753
        %v2759 = vshll.u32 %v2714, 16
        %v2761 = vrot.slane %v2759, 1
        %v2762 = vsel %vm289, %v2757, %v2761
        %v2763 = vshrl.u32 %v2714, 16
        %v2765 = vor.u32 %v2763, %v2761
        %v2767 = vshll.u32 %v2715, 16
        %v2769 = vrot.slane %v2767, 1
        %v2770 = vsel %vm289, %v2765, %v2769
        %v2771 = vshrl.u32 %v2715, 16
        %v2773 = vor.u32 %v2771, %v2769
        %v2775 = vshll.u32 %v2716, 16
        %v2777 = vrot.slane %v2775, 1
        %v2778 = vsel %vm289, %v2773, %v2777
        %v2779 = vshrl.u32 %v2716, 16
        %v2781 = vor.u32 %v2779, %v2777
        %v2783 = vshll.u32 %v2717, 16
        %v2785 = vrot.slane %v2783, 1
        %v2786 = vsel %vm289, %v2781, %v2785
        %v2787 = vshrl.u32 %v2717, 16
        %v2789 = vor.u32 %v2787, %v2785
        %v2791 = vshll.u32 %v2718, 16
        %v2793 = vrot.slane %v2791, 1
        %v2794 = vsel %vm289, %v2789, %v2793
        %v2795 = vshrl.u32 %v2718, 16
        %v2797 = vor.u32 %v2795, %v2793
        %v2799 = vshll.u32 %v2719, 16
        %v2801 = vrot.slane %v2799, 1
        %v2802 = vsel %vm289, %v2797, %v2801
        %v2803 = vshrl.u32 %v2719, 16
        %v2805 = vor.u32 %v2803, %v2801
        %v2807 = vshll.u32 %v2720, 16
        %v2809 = vrot.slane %v2807, 1
        %v2810 = vsel %vm289, %v2805, %v2809
        %v2811 = vshrl.u32 %v2720, 16
        %v2813 = vor.u32 %v2811, %v2809
        %v2815 = vshll.u32 %v2721, 16
        %v2817 = vrot.slane %v2815, 1
        %v2818 = vsel %vm289, %v2813, %v2817
        %v2819 = vshrl.u32 %v2721, 16
        %v2821 = vor.u32 %v2819, %v2817
        %v2823 = vshll.u32 %v2722, 16
        %v2825 = vrot.slane %v2823, 1
        %v2826 = vsel %vm289, %v2821, %v2825
        %v2827 = vshrl.u32 %v2722, 16
        %v2829 = vor.u32 %v2827, %v2825
        %v2831 = vshll.u32 %v2723, 16
        %v2833 = vrot.slane %v2831, 1
        %v2834 = vsel %vm289, %v2829, %v2833
        %v2835 = vshrl.u32 %v2723, 16
        %v2837 = vor.u32 %v2835, %v2833
        %v2839 = vshll.u32 %v2724, 16
        %v2841 = vrot.slane %v2839, 1
        %v2842 = vsel %vm289, %v2837, %v2841
        %v2843 = vshrl.u32 %v2724, 16
        %v2845 = vor.u32 %v2843, %v2841
        %v2847 = vshll.u32 %v2725, 16
        %v2849 = vrot.slane %v2847, 1
        %v2850 = vsel %vm289, %v2845, %v2849
        %v2851 = vshrl.u32 %v2725, 16
        %v2853 = vor.u32 %v2851, %v2849
        %v2855 = vshll.u32 %v2726, 16
        %v2857 = vrot.slane %v2855, 1
        %v2858 = vsel %vm289, %v2853, %v2857
        %v2860 = vsel %vm422, %v2738, 0
        %v2863 = vsel %vm422, %v2746, 0
        %v2866 = vsel %vm422, %v2754, 0
        %v2869 = vsel %vm422, %v2762, 0
        %v2872 = vsel %vm422, %v2770, 0
        %v2875 = vsel %vm422, %v2778, 0
        %v2878 = vsel %vm422, %v2786, 0
        %v2881 = vsel %vm422, %v2794, 0
        %v2884 = vsel %vm422, %v2802, 0
        %v2887 = vsel %vm422, %v2810, 0
        %v2890 = vsel %vm422, %v2818, 0
        %v2893 = vsel %vm422, %v2826, 0
        %v2896 = vsel %vm422, %v2834, 0
        %v2899 = vsel %vm422, %v2842, 0
        %v2902 = vsel %vm422, %v2850, 0
        %v2905 = vsel %vm422, %v2858, 0
        %v2908 = vsel %vm471, %v2643, 0
        %2910 = vmatprep.subr.bf16.mxu0 0
        %2911 = vmatpush1.bf16.msra.mxu0 %v2908
        %2912 = vmatprep.subr.bf16.mxu0 0
        %2913 = vmatpush1.bf16.msra.mxu0 0
        %2914 = vmatprep.subr.bf16.mxu0 0
        %2915 = vmatpush1.bf16.msra.mxu0 0
        %2916 = vmatprep.subr.bf16.mxu0 0
        %2917 = vmatpush1.bf16.msra.mxu0 0
        %2918 = vmatprep.subr.bf16.mxu0 0
        %2919 = vmatpush1.bf16.msra.mxu0 0
        %2920 = vmatprep.subr.bf16.mxu0 0
        %2921 = vmatpush1.bf16.msra.mxu0 0
        %2922 = vmatprep.subr.bf16.mxu0 0
        %2923 = vmatpush1.bf16.msra.mxu0 0
        %2924 = vmatprep.subr.bf16.mxu0 0
        %2925 = vmatpush1.bf16.msra.mxu0 0
        %2926 = vmatprep.subr.bf16.mxu0 0
        %2927 = vmatpush1.bf16.msra.mxu0 0
        %2928 = vmatprep.subr.bf16.mxu0 0
        %2929 = vmatpush1.bf16.msra.mxu0 0
        %2930 = vmatprep.subr.bf16.mxu0 0
        %2931 = vmatpush1.bf16.msra.mxu0 0
        %2932 = vmatprep.subr.bf16.mxu0 0
        %2933 = vmatpush1.bf16.msra.mxu0 0
        %2934 = vmatprep.subr.bf16.mxu0 0
        %2935 = vmatpush1.bf16.msra.mxu0 0
        %2936 = vmatprep.subr.bf16.mxu0 0
        %2937 = vmatpush1.bf16.msra.mxu0 0
        %2938 = vmatprep.subr.bf16.mxu0 0
        %2939 = vmatpush1.bf16.msra.mxu0 0
        %2940 = vmatprep.subr.bf16.mxu0 0
        %2941 = vmatpush1.bf16.msra.mxu0 0
        %2942 = vmatprep.mubr.bf16.mxu0 0
        %2943 = vmatmul.mubr.bf16.gmra.mrb[0].mxu0 %v2860
        %v2944 = vpop.f32.mrb[0].mxu0
        %v2945 = vadd.f32 0.0, %v2944
        %v2946 = vpop.f32.mrb[0].mxu0
        %v2947 = vpop.f32.mrb[0].mxu0
        %v2948 = vadd.f32 0.0, %v2947
        %v2949 = vpop.f32.mrb[0].mxu0
        %2950 = vmatprep.mubr.bf16.mxu0 0
        %2951 = vmatmul.mubr.bf16.gmra.mrb[0].mxu0 %v2863
        %v2952 = vpop.f32.mrb[0].mxu0
        %v2953 = vadd.f32 0.0, %v2952
        %v2954 = vpop.f32.mrb[0].mxu0
        %v2955 = vpop.f32.mrb[0].mxu0
        %v2956 = vadd.f32 0.0, %v2955
        %v2957 = vpop.f32.mrb[0].mxu0
        %2958 = vmatprep.mubr.bf16.mxu0 0
        %2959 = vmatmul.mubr.bf16.gmra.mrb[0].mxu0 %v2866
        %v2960 = vpop.f32.mrb[0].mxu0
        %v2961 = vadd.f32 0.0, %v2960
        %v2962 = vpop.f32.mrb[0].mxu0
        %v2963 = vpop.f32.mrb[0].mxu0
        %v2964 = vadd.f32 0.0, %v2963
        %v2965 = vpop.f32.mrb[0].mxu0
        %2966 = vmatprep.mubr.bf16.mxu0 0
        %2967 = vmatmul.mubr.bf16.gmra.mrb[0].mxu0 %v2869
        %v2968 = vpop.f32.mrb[0].mxu0
        %v2969 = vadd.f32 0.0, %v2968
        %v2970 = vpop.f32.mrb[0].mxu0
        %v2971 = vpop.f32.mrb[0].mxu0
        %v2972 = vadd.f32 0.0, %v2971
        %v2973 = vpop.f32.mrb[0].mxu0
        %2974 = vmatprep.mubr.bf16.mxu0 0
        %2975 = vmatmul.mubr.bf16.gmra.mrb[0].mxu0 %v2872
        %v2976 = vpop.f32.mrb[0].mxu0
        %v2977 = vadd.f32 0.0, %v2976
        %v2978 = vpop.f32.mrb[0].mxu0
        %v2979 = vpop.f32.mrb[0].mxu0
        %v2980 = vadd.f32 0.0, %v2979
        %v2981 = vpop.f32.mrb[0].mxu0
        %2982 = vmatprep.mubr.bf16.mxu0 0
        %2983 = vmatmul.mubr.bf16.gmra.mrb[0].mxu0 %v2875
        %v2984 = vpop.f32.mrb[0].mxu0
        %v2985 = vadd.f32 0.0, %v2984
        %v2986 = vpop.f32.mrb[0].mxu0
        %v2987 = vpop.f32.mrb[0].mxu0
        %v2988 = vadd.f32 0.0, %v2987
        %v2989 = vpop.f32.mrb[0].mxu0
        %2990 = vmatprep.mubr.bf16.mxu0 0
        %2991 = vmatmul.mubr.bf16.gmra.mrb[0].mxu0 %v2878
        %v2992 = vpop.f32.mrb[0].mxu0
        %v2993 = vadd.f32 0.0, %v2992
        %v2994 = vpop.f32.mrb[0].mxu0
        %v2995 = vpop.f32.mrb[0].mxu0
        %v2996 = vadd.f32 0.0, %v2995
        %v2997 = vpop.f32.mrb[0].mxu0
        %2998 = vmatprep.mubr.bf16.mxu0 0
        %2999 = vmatmul.mubr.bf16.gmra.mrb[0].mxu0 %v2881
        %v3000 = vpop.f32.mrb[0].mxu0
        %v3001 = vadd.f32 0.0, %v3000
        %v3002 = vpop.f32.mrb[0].mxu0
        %v3003 = vpop.f32.mrb[0].mxu0
        %v3004 = vadd.f32 0.0, %v3003
        %v3005 = vpop.f32.mrb[0].mxu0
        %3006 = vmatprep.mubr.bf16.mxu0 0
        %3007 = vmatmul.mubr.bf16.gmra.mrb[0].mxu0 %v2884
        %v3008 = vpop.f32.mrb[0].mxu0
        %v3009 = vadd.f32 0.0, %v3008
        %v3010 = vpop.f32.mrb[0].mxu0
        %v3011 = vpop.f32.mrb[0].mxu0
        %v3012 = vadd.f32 0.0, %v3011
        %v3013 = vpop.f32.mrb[0].mxu0
        %3014 = vmatprep.mubr.bf16.mxu0 0
        %3015 = vmatmul.mubr.bf16.gmra.mrb[0].mxu0 %v2887
        %v3016 = vpop.f32.mrb[0].mxu0
        %v3017 = vadd.f32 0.0, %v3016
        %v3018 = vpop.f32.mrb[0].mxu0
        %v3019 = vpop.f32.mrb[0].mxu0
        %v3020 = vadd.f32 0.0, %v3019
        %v3021 = vpop.f32.mrb[0].mxu0
        %3022 = vmatprep.mubr.bf16.mxu0 0
        %3023 = vmatmul.mubr.bf16.gmra.mrb[0].mxu0 %v2890
        %v3024 = vpop.f32.mrb[0].mxu0
        %v3025 = vadd.f32 0.0, %v3024
        %v3026 = vpop.f32.mrb[0].mxu0
        %v3027 = vpop.f32.mrb[0].mxu0
        %v3028 = vadd.f32 0.0, %v3027
        %v3029 = vpop.f32.mrb[0].mxu0
        %3030 = vmatprep.mubr.bf16.mxu0 0
        %3031 = vmatmul.mubr.bf16.gmra.mrb[0].mxu0 %v2893
        %v3032 = vpop.f32.mrb[0].mxu0
        %v3033 = vadd.f32 0.0, %v3032
        %v3034 = vpop.f32.mrb[0].mxu0
        %v3035 = vpop.f32.mrb[0].mxu0
        %v3036 = vadd.f32 0.0, %v3035
        %v3037 = vpop.f32.mrb[0].mxu0
        %3038 = vmatprep.mubr.bf16.mxu0 0
        %3039 = vmatmul.mubr.bf16.gmra.mrb[0].mxu0 %v2896
        %v3040 = vpop.f32.mrb[0].mxu0
        %v3041 = vadd.f32 0.0, %v3040
        %v3042 = vpop.f32.mrb[0].mxu0
        %v3043 = vpop.f32.mrb[0].mxu0
        %v3044 = vadd.f32 0.0, %v3043
        %v3045 = vpop.f32.mrb[0].mxu0
        %3046 = vmatprep.mubr.bf16.mxu0 0
        %3047 = vmatmul.mubr.bf16.gmra.mrb[0].mxu0 %v2899
        %v3048 = vpop.f32.mrb[0].mxu0
        %v3049 = vadd.f32 0.0, %v3048
        %v3050 = vpop.f32.mrb[0].mxu0
        %v3051 = vpop.f32.mrb[0].mxu0
        %v3052 = vadd.f32 0.0, %v3051
        %v3053 = vpop.f32.mrb[0].mxu0
        %3054 = vmatprep.mubr.bf16.mxu0 0
        %3055 = vmatmul.mubr.bf16.gmra.mrb[0].mxu0 %v2902
        %v3056 = vpop.f32.mrb[0].mxu0
        %v3057 = vadd.f32 0.0, %v3056
        %v3058 = vpop.f32.mrb[0].mxu0
        %v3059 = vpop.f32.mrb[0].mxu0
        %v3060 = vadd.f32 0.0, %v3059
        %v3061 = vpop.f32.mrb[0].mxu0
        %3062 = vmatprep.mubr.bf16.mxu0 0
        %3063 = vmatmul.mubr.bf16.gmra.mrb[0].mxu0 %v2905
        %v3064 = vpop.f32.mrb[0].mxu0
        %v3065 = vadd.f32 0.0, %v3064
        %v3066 = vpop.f32.mrb[0].mxu0
        %v3067 = vpop.f32.mrb[0].mxu0
        %v3068 = vadd.f32 0.0, %v3067
        %v3069 = vpop.f32.mrb[0].mxu0
        %3070 = vdwg.mxu0
        %v3071 = vadd.f32 %v2577, %v2945
        %v3072 = vadd.f32 %v2578, %v2948
        %v3073 = vadd.f32 %v2579, %v2953
        %v3074 = vadd.f32 %v2580, %v2956
        %v3075 = vadd.f32 %v2581, %v2961
        %v3076 = vadd.f32 %v2582, %v2964
        %v3077 = vadd.f32 %v2583, %v2969
        %v3078 = vadd.f32 %v2584, %v2972
        %v3079 = vadd.f32 %v2585, %v2977
        %v3080 = vadd.f32 %v2586, %v2980
        %v3081 = vadd.f32 %v2587, %v2985
        %v3082 = vadd.f32 %v2588, %v2988
        %v3083 = vadd.f32 %v2589, %v2993
        %v3084 = vadd.f32 %v2590, %v2996
        %v3085 = vadd.f32 %v2591, %v3001
        %v3086 = vadd.f32 %v2592, %v3004
        %v3087 = vadd.f32 %v2593, %v3009
        %v3088 = vadd.f32 %v2594, %v3012
        %v3089 = vadd.f32 %v2595, %v3017
        %v3090 = vadd.f32 %v2596, %v3020
        %v3091 = vadd.f32 %v2597, %v3025
        %v3092 = vadd.f32 %v2598, %v3028
        %v3093 = vadd.f32 %v2599, %v3033
        %v3094 = vadd.f32 %v2600, %v3036
        %v3095 = vadd.f32 %v2601, %v3041
        %v3096 = vadd.f32 %v2602, %v3044
        %v3097 = vadd.f32 %v2603, %v3049
        %v3098 = vadd.f32 %v2604, %v3052
        %v3099 = vadd.f32 %v2605, %v3057
        %v3100 = vadd.f32 %v2606, %v3060
        %v3101 = vadd.f32 %v2607, %v3065
        %v3102 = vadd.f32 %v2608, %v3068
        %v3103 = vld [vmem:[%s168 + $0x10] sm:$0xe]
        %s3104 = scalar_lea.vmem %s1, 32
        %v3105 = vld [vmem:[%s3104] sm:$0xf]
        %v3107 = vunpack.c.l.b16 %v3103
        %v3108 = vpack.c.b16 %v2678, %v3107
        %v3109 = vrot.slane %v3108, 1
        %v3110 = vrot.slane %v2711, 1
        %v3111 = vsel %vm838, %v3109, %v3110
        %v3112 = vrot.slane %v2712, 1
        %v3113 = vsel %vm838, %v3110, %v3112
        %v3114 = vrot.slane %v2713, 1
        %v3115 = vsel %vm838, %v3112, %v3114
        %v3116 = vrot.slane %v2714, 1
        %v3117 = vsel %vm838, %v3114, %v3116
        %v3118 = vrot.slane %v2715, 1
        %v3119 = vsel %vm838, %v3116, %v3118
        %v3120 = vrot.slane %v2716, 1
        %v3121 = vsel %vm838, %v3118, %v3120
        %v3122 = vrot.slane %v2717, 1
        %v3123 = vsel %vm838, %v3120, %v3122
        %v3124 = vrot.slane %v2718, 1
        %v3125 = vsel %vm838, %v3122, %v3124
        %v3126 = vrot.slane %v2719, 1
        %v3127 = vsel %vm838, %v3124, %v3126
        %v3128 = vrot.slane %v2720, 1
        %v3129 = vsel %vm838, %v3126, %v3128
        %v3130 = vrot.slane %v2721, 1
        %v3131 = vsel %vm838, %v3128, %v3130
        %v3132 = vrot.slane %v2722, 1
        %v3133 = vsel %vm838, %v3130, %v3132
        %v3134 = vrot.slane %v2723, 1
        %v3135 = vsel %vm838, %v3132, %v3134
        %v3136 = vrot.slane %v2724, 1
        %v3137 = vsel %vm838, %v3134, %v3136
        %v3138 = vrot.slane %v2725, 1
        %v3139 = vsel %vm838, %v3136, %v3138
        %v3140 = vrot.slane %v2726, 1
        %v3141 = vsel %vm838, %v3138, %v3140
        %v3143 = vsel %vm422, %v3111, 0
        %v3146 = vsel %vm422, %v3113, 0
        %v3149 = vsel %vm422, %v3115, 0
        %v3152 = vsel %vm422, %v3117, 0
        %v3155 = vsel %vm422, %v3119, 0
        %v3158 = vsel %vm422, %v3121, 0
        %v3161 = vsel %vm422, %v3123, 0
        %v3164 = vsel %vm422, %v3125, 0
        %v3167 = vsel %vm422, %v3127, 0
        %v3170 = vsel %vm422, %v3129, 0
        %v3173 = vsel %vm422, %v3131, 0
        %v3176 = vsel %vm422, %v3133, 0
        %v3179 = vsel %vm422, %v3135, 0
        %v3182 = vsel %vm422, %v3137, 0
        %v3185 = vsel %vm422, %v3139, 0
        %v3188 = vsel %vm422, %v3141, 0
        %v3191 = vsel %vm471, %v3105, 0
        %3193 = vmatprep.subr.bf16.mxu0 0
        %3194 = vmatpush1.bf16.msra.mxu0 %v3191
        %3195 = vmatprep.subr.bf16.mxu0 0
        %3196 = vmatpush1.bf16.msra.mxu0 0
        %3197 = vmatprep.subr.bf16.mxu0 0
        %3198 = vmatpush1.bf16.msra.mxu0 0
        %3199 = vmatprep.subr.bf16.mxu0 0
        %3200 = vmatpush1.bf16.msra.mxu0 0
        %3201 = vmatprep.subr.bf16.mxu0 0
        %3202 = vmatpush1.bf16.msra.mxu0 0
        %3203 = vmatprep.subr.bf16.mxu0 0
        %3204 = vmatpush1.bf16.msra.mxu0 0
        %3205 = vmatprep.subr.bf16.mxu0 0
        %3206 = vmatpush1.bf16.msra.mxu0 0
        %3207 = vmatprep.subr.bf16.mxu0 0
        %3208 = vmatpush1.bf16.msra.mxu0 0
        %3209 = vmatprep.subr.bf16.mxu0 0
        %3210 = vmatpush1.bf16.msra.mxu0 0
        %3211 = vmatprep.subr.bf16.mxu0 0
        %3212 = vmatpush1.bf16.msra.mxu0 0
        %3213 = vmatprep.subr.bf16.mxu0 0
        %3214 = vmatpush1.bf16.msra.mxu0 0
        %3215 = vmatprep.subr.bf16.mxu0 0
        %3216 = vmatpush1.bf16.msra.mxu0 0
        %3217 = vmatprep.subr.bf16.mxu0 0
        %3218 = vmatpush1.bf16.msra.mxu0 0
        %3219 = vmatprep.subr.bf16.mxu0 0
        %3220 = vmatpush1.bf16.msra.mxu0 0
        %3221 = vmatprep.subr.bf16.mxu0 0
        %3222 = vmatpush1.bf16.msra.mxu0 0
        %3223 = vmatprep.subr.bf16.mxu0 0
        %3224 = vmatpush1.bf16.msra.mxu0 0
        %3225 = vmatprep.mubr.bf16.mxu0 0
        %3226 = vmatmul.mubr.bf16.gmra.mrb[0].mxu0 %v3143
        %v3227 = vpop.f32.mrb[0].mxu0
        %v3228 = vadd.f32 0.0, %v3227
        %v3229 = vpop.f32.mrb[0].mxu0
        %v3230 = vpop.f32.mrb[0].mxu0
        %v3231 = vadd.f32 0.0, %v3230
        %v3232 = vpop.f32.mrb[0].mxu0
        %3233 = vmatprep.mubr.bf16.mxu0 0
        %3234 = vmatmul.mubr.bf16.gmra.mrb[0].mxu0 %v3146
        %v3235 = vpop.f32.mrb[0].mxu0
        %v3236 = vadd.f32 0.0, %v3235
        %v3237 = vpop.f32.mrb[0].mxu0
        %v3238 = vpop.f32.mrb[0].mxu0
        %v3239 = vadd.f32 0.0, %v3238
        %v3240 = vpop.f32.mrb[0].mxu0
        %3241 = vmatprep.mubr.bf16.mxu0 0
        %3242 = vmatmul.mubr.bf16.gmra.mrb[0].mxu0 %v3149
        %v3243 = vpop.f32.mrb[0].mxu0
        %v3244 = vadd.f32 0.0, %v3243
        %v3245 = vpop.f32.mrb[0].mxu0
        %v3246 = vpop.f32.mrb[0].mxu0
        %v3247 = vadd.f32 0.0, %v3246
        %v3248 = vpop.f32.mrb[0].mxu0
        %3249 = vmatprep.mubr.bf16.mxu0 0
        %3250 = vmatmul.mubr.bf16.gmra.mrb[0].mxu0 %v3152
        %v3251 = vpop.f32.mrb[0].mxu0
        %v3252 = vadd.f32 0.0, %v3251
        %v3253 = vpop.f32.mrb[0].mxu0
        %v3254 = vpop.f32.mrb[0].mxu0
        %v3255 = vadd.f32 0.0, %v3254
        %v3256 = vpop.f32.mrb[0].mxu0
        %3257 = vmatprep.mubr.bf16.mxu0 0
        %3258 = vmatmul.mubr.bf16.gmra.mrb[0].mxu0 %v3155
        %v3259 = vpop.f32.mrb[0].mxu0
        %v3260 = vadd.f32 0.0, %v3259
        %v3261 = vpop.f32.mrb[0].mxu0
        %v3262 = vpop.f32.mrb[0].mxu0
        %v3263 = vadd.f32 0.0, %v3262
        %v3264 = vpop.f32.mrb[0].mxu0
        %3265 = vmatprep.mubr.bf16.mxu0 0
        %3266 = vmatmul.mubr.bf16.gmra.mrb[0].mxu0 %v3158
        %v3267 = vpop.f32.mrb[0].mxu0
        %v3268 = vadd.f32 0.0, %v3267
        %v3269 = vpop.f32.mrb[0].mxu0
        %v3270 = vpop.f32.mrb[0].mxu0
        %v3271 = vadd.f32 0.0, %v3270
        %v3272 = vpop.f32.mrb[0].mxu0
        %3273 = vmatprep.mubr.bf16.mxu0 0
        %3274 = vmatmul.mubr.bf16.gmra.mrb[0].mxu0 %v3161
        %v3275 = vpop.f32.mrb[0].mxu0
        %v3276 = vadd.f32 0.0, %v3275
        %v3277 = vpop.f32.mrb[0].mxu0
        %v3278 = vpop.f32.mrb[0].mxu0
        %v3279 = vadd.f32 0.0, %v3278
        %v3280 = vpop.f32.mrb[0].mxu0
        %3281 = vmatprep.mubr.bf16.mxu0 0
        %3282 = vmatmul.mubr.bf16.gmra.mrb[0].mxu0 %v3164
        %v3283 = vpop.f32.mrb[0].mxu0
        %v3284 = vadd.f32 0.0, %v3283
        %v3285 = vpop.f32.mrb[0].mxu0
        %v3286 = vpop.f32.mrb[0].mxu0
        %v3287 = vadd.f32 0.0, %v3286
        %v3288 = vpop.f32.mrb[0].mxu0
        %3289 = vmatprep.mubr.bf16.mxu0 0
        %3290 = vmatmul.mubr.bf16.gmra.mrb[0].mxu0 %v3167
        %v3291 = vpop.f32.mrb[0].mxu0
        %v3292 = vadd.f32 0.0, %v3291
        %v3293 = vpop.f32.mrb[0].mxu0
        %v3294 = vpop.f32.mrb[0].mxu0
        %v3295 = vadd.f32 0.0, %v3294
        %v3296 = vpop.f32.mrb[0].mxu0
        %3297 = vmatprep.mubr.bf16.mxu0 0
        %3298 = vmatmul.mubr.bf16.gmra.mrb[0].mxu0 %v3170
        %v3299 = vpop.f32.mrb[0].mxu0
        %v3300 = vadd.f32 0.0, %v3299
        %v3301 = vpop.f32.mrb[0].mxu0
        %v3302 = vpop.f32.mrb[0].mxu0
        %v3303 = vadd.f32 0.0, %v3302
        %v3304 = vpop.f32.mrb[0].mxu0
        %3305 = vmatprep.mubr.bf16.mxu0 0
        %3306 = vmatmul.mubr.bf16.gmra.mrb[0].mxu0 %v3173
        %v3307 = vpop.f32.mrb[0].mxu0
        %v3308 = vadd.f32 0.0, %v3307
        %v3309 = vpop.f32.mrb[0].mxu0
        %v3310 = vpop.f32.mrb[0].mxu0
        %v3311 = vadd.f32 0.0, %v3310
        %v3312 = vpop.f32.mrb[0].mxu0
        %3313 = vmatprep.mubr.bf16.mxu0 0
        %3314 = vmatmul.mubr.bf16.gmra.mrb[0].mxu0 %v3176
        %v3315 = vpop.f32.mrb[0].mxu0
        %v3316 = vadd.f32 0.0, %v3315
        %v3317 = vpop.f32.mrb[0].mxu0
        %v3318 = vpop.f32.mrb[0].mxu0
        %v3319 = vadd.f32 0.0, %v3318
        %v3320 = vpop.f32.mrb[0].mxu0
        %3321 = vmatprep.mubr.bf16.mxu0 0
        %3322 = vmatmul.mubr.bf16.gmra.mrb[0].mxu0 %v3179
        %v3323 = vpop.f32.mrb[0].mxu0
        %v3324 = vadd.f32 0.0, %v3323
        %v3325 = vpop.f32.mrb[0].mxu0
        %v3326 = vpop.f32.mrb[0].mxu0
        %v3327 = vadd.f32 0.0, %v3326
        %v3328 = vpop.f32.mrb[0].mxu0
        %3329 = vmatprep.mubr.bf16.mxu0 0
        %3330 = vmatmul.mubr.bf16.gmra.mrb[0].mxu0 %v3182
        %v3331 = vpop.f32.mrb[0].mxu0
        %v3332 = vadd.f32 0.0, %v3331
        %v3333 = vpop.f32.mrb[0].mxu0
        %v3334 = vpop.f32.mrb[0].mxu0
        %v3335 = vadd.f32 0.0, %v3334
        %v3336 = vpop.f32.mrb[0].mxu0
        %3337 = vmatprep.mubr.bf16.mxu0 0
        %3338 = vmatmul.mubr.bf16.gmra.mrb[0].mxu0 %v3185
        %v3339 = vpop.f32.mrb[0].mxu0
        %v3340 = vadd.f32 0.0, %v3339
        %v3341 = vpop.f32.mrb[0].mxu0
        %v3342 = vpop.f32.mrb[0].mxu0
        %v3343 = vadd.f32 0.0, %v3342
        %v3344 = vpop.f32.mrb[0].mxu0
        %3345 = vmatprep.mubr.bf16.mxu0 0
        %3346 = vmatmul.mubr.bf16.gmra.mrb[0].mxu0 %v3188
        %v3347 = vpop.f32.mrb[0].mxu0
        %v3348 = vadd.f32 0.0, %v3347
        %v3349 = vpop.f32.mrb[0].mxu0
        %v3350 = vpop.f32.mrb[0].mxu0
        %v3351 = vadd.f32 0.0, %v3350
        %v3352 = vpop.f32.mrb[0].mxu0
        %3353 = vdwg.mxu0
        %v3354 = vadd.f32 %v3071, %v3228
        %v3355 = vadd.f32 %v3072, %v3231
        %v3356 = vadd.f32 %v3073, %v3236
        %v3357 = vadd.f32 %v3074, %v3239
        %v3358 = vadd.f32 %v3075, %v3244
        %v3359 = vadd.f32 %v3076, %v3247
        %v3360 = vadd.f32 %v3077, %v3252
        %v3361 = vadd.f32 %v3078, %v3255
        %v3362 = vadd.f32 %v3079, %v3260
        %v3363 = vadd.f32 %v3080, %v3263
        %v3364 = vadd.f32 %v3081, %v3268
        %v3365 = vadd.f32 %v3082, %v3271
        %v3366 = vadd.f32 %v3083, %v3276
        %v3367 = vadd.f32 %v3084, %v3279
        %v3368 = vadd.f32 %v3085, %v3284
        %v3369 = vadd.f32 %v3086, %v3287
        %v3370 = vadd.f32 %v3087, %v3292
        %v3371 = vadd.f32 %v3088, %v3295
        %v3372 = vadd.f32 %v3089, %v3300
        %v3373 = vadd.f32 %v3090, %v3303
        %v3374 = vadd.f32 %v3091, %v3308
        %v3375 = vadd.f32 %v3092, %v3311
        %v3376 = vadd.f32 %v3093, %v3316
        %v3377 = vadd.f32 %v3094, %v3319
        %v3378 = vadd.f32 %v3095, %v3324
        %v3379 = vadd.f32 %v3096, %v3327
        %v3380 = vadd.f32 %v3097, %v3332
        %v3381 = vadd.f32 %v3098, %v3335
        %v3382 = vadd.f32 %v3099, %v3340
        %v3383 = vadd.f32 %v3100, %v3343
        %v3384 = vadd.f32 %v3101, %v3348
        %v3385 = vadd.f32 %v3102, %v3351
        %v3386 = vld [vmem:[%s2] sm:$0x1]
        %v3388 = vlaneseq
        %v3389 = vshrl.u32 %v3388, 7
        %v3390 = vsub.s32 0, %v3389
        %v3391 = vrot.slane %v3386, %v3390
        %v3393 = vadd.f32 %v3354, %v3391
        %v3394 = vadd.f32 %v3355, %v3391
        %v3395 = vadd.f32 %v3356, %v3391
        %v3396 = vadd.f32 %v3357, %v3391
        %v3397 = vadd.f32 %v3358, %v3391
        %v3398 = vadd.f32 %v3359, %v3391
        %v3399 = vadd.f32 %v3360, %v3391
        %v3400 = vadd.f32 %v3361, %v3391
        %v3401 = vadd.f32 %v3362, %v3391
        %v3402 = vadd.f32 %v3363, %v3391
        %v3403 = vadd.f32 %v3364, %v3391
        %v3404 = vadd.f32 %v3365, %v3391
        %v3405 = vadd.f32 %v3366, %v3391
        %v3406 = vadd.f32 %v3367, %v3391
        %v3407 = vadd.f32 %v3368, %v3391
        %v3408 = vadd.f32 %v3369, %v3391
        %v3409 = vadd.f32 %v3370, %v3391
        %v3410 = vadd.f32 %v3371, %v3391
        %v3411 = vadd.f32 %v3372, %v3391
        %v3412 = vadd.f32 %v3373, %v3391
        %v3413 = vadd.f32 %v3374, %v3391
        %v3414 = vadd.f32 %v3375, %v3391
        %v3415 = vadd.f32 %v3376, %v3391
        %v3416 = vadd.f32 %v3377, %v3391
        %v3417 = vadd.f32 %v3378, %v3391
        %v3418 = vadd.f32 %v3379, %v3391
        %v3419 = vadd.f32 %v3380, %v3391
        %v3420 = vadd.f32 %v3381, %v3391
        %v3421 = vadd.f32 %v3382, %v3391
        %v3422 = vadd.f32 %v3383, %v3391
        %v3423 = vadd.f32 %v3384, %v3391
        %v3424 = vadd.f32 %v3385, %v3391
        %v3425 = vmax.f32 %v3393, 0.0
        %v3426 = vmax.f32 %v3394, 0.0
        %v3427 = vmax.f32 %v3395, 0.0
        %v3428 = vmax.f32 %v3396, 0.0
        %v3429 = vmax.f32 %v3397, 0.0
        %v3430 = vmax.f32 %v3398, 0.0
        %v3431 = vmax.f32 %v3399, 0.0
        %v3432 = vmax.f32 %v3400, 0.0
        %v3433 = vmax.f32 %v3401, 0.0
        %v3434 = vmax.f32 %v3402, 0.0
        %v3435 = vmax.f32 %v3403, 0.0
        %v3436 = vmax.f32 %v3404, 0.0
        %v3437 = vmax.f32 %v3405, 0.0
        %v3438 = vmax.f32 %v3406, 0.0
        %v3439 = vmax.f32 %v3407, 0.0
        %v3440 = vmax.f32 %v3408, 0.0
        %v3441 = vmax.f32 %v3409, 0.0
        %v3442 = vmax.f32 %v3410, 0.0
        %v3443 = vmax.f32 %v3411, 0.0
        %v3444 = vmax.f32 %v3412, 0.0
        %v3445 = vmax.f32 %v3413, 0.0
        %v3446 = vmax.f32 %v3414, 0.0
        %v3447 = vmax.f32 %v3415, 0.0
        %v3448 = vmax.f32 %v3416, 0.0
        %v3449 = vmax.f32 %v3417, 0.0
        %v3450 = vmax.f32 %v3418, 0.0
        %v3451 = vmax.f32 %v3419, 0.0
        %v3452 = vmax.f32 %v3420, 0.0
        %v3453 = vmax.f32 %v3421, 0.0
        %v3454 = vmax.f32 %v3422, 0.0
        %v3455 = vmax.f32 %v3423, 0.0
        %v3456 = vmax.f32 %v3424, 0.0
        %3457 = vst [vmem:[%s163] sm:$0xff] %v3425
        %3458 = vst [vmem:[%s163 + $0x8] sm:$0xff] %v3426
        %3459 = vst [vmem:[%s163 + $0x10] sm:$0xff] %v3427
        %3460 = vst [vmem:[%s163 + $0x18] sm:$0xff] %v3428
        %3461 = vst [vmem:[%s163 + $0x20] sm:$0xff] %v3429
        %3462 = vst [vmem:[%s163 + $0x28] sm:$0xff] %v3430
        %3463 = vst [vmem:[%s163 + $0x30] sm:$0xff] %v3431
        %3464 = vst [vmem:[%s163 + $0x38] sm:$0xff] %v3432
        %3465 = vst [vmem:[%s163 + $0x40] sm:$0xff] %v3433
        %3466 = vst [vmem:[%s163 + $0x48] sm:$0xff] %v3434
        %3467 = vst [vmem:[%s163 + $0x50] sm:$0xff] %v3435
        %3468 = vst [vmem:[%s163 + $0x58] sm:$0xff] %v3436
        %3469 = vst [vmem:[%s163 + $0x60] sm:$0xff] %v3437
        %3470 = vst [vmem:[%s163 + $0x68] sm:$0xff] %v3438
        %3471 = vst [vmem:[%s163 + $0x70] sm:$0xff] %v3439
        %3472 = vst [vmem:[%s163 + $0x78] sm:$0xff] %v3440
        %3473 = vst [vmem:[%s163 + $0x80] sm:$0xff] %v3441
        %3474 = vst [vmem:[%s163 + $0x88] sm:$0xff] %v3442
        %3475 = vst [vmem:[%s163 + $0x90] sm:$0xff] %v3443
        %3476 = vst [vmem:[%s163 + $0x98] sm:$0xff] %v3444
        %3477 = vst [vmem:[%s163 + $0xa0] sm:$0xff] %v3445
        %3478 = vst [vmem:[%s163 + $0xa8] sm:$0xff] %v3446
        %3479 = vst [vmem:[%s163 + $0xb0] sm:$0xff] %v3447
        %3480 = vst [vmem:[%s163 + $0xb8] sm:$0xff] %v3448
        %3481 = vst [vmem:[%s163 + $0xc0] sm:$0xff] %v3449
        %3482 = vst [vmem:[%s163 + $0xc8] sm:$0xff] %v3450
        %3483 = vst [vmem:[%s163 + $0xd0] sm:$0xff] %v3451
        %3484 = vst [vmem:[%s163 + $0xd8] sm:$0xff] %v3452
        %3485 = vst [vmem:[%s163 + $0xe0] sm:$0xff] %v3453
        %3486 = vst [vmem:[%s163 + $0xe8] sm:$0xff] %v3454
        %3487 = vst [vmem:[%s163 + $0xf0] sm:$0xff] %v3455
        %3488 = vst [vmem:[%s163 + $0xf8] sm:$0xff] %v3456
        %s3489 = sand.u32 %s93, 1
        %s3490 = scalar_lea.sflag [#allocation3], %s3489
        %s3491 = sand.u32 %s93, 1
        %s3492 = smul.addr %s3491, 256
        %s3493 = scalar_lea.vmem [#allocation2], %s3492
        // Predicated region
        $region33: #{tpu_custom_call.1} parent=31 // pred_check
          %p3494 = pneg %p103
        $region34: #{tpu_custom_call.1} parent=31 // pred_check_branch
          %3496 = sbr.rel (%p3494) target = $region36
        $region35: #{tpu_custom_call.1} parent=31 // pred_region
          %s3498 = ssub.s32 4096, 4096
          %3499 = vsyncadd %s3490, %s3498
          %s3500 = smul.addr %s17, 32
          %s3501 = smul.addr %s3500, 128
          %s3502 = scalar_lea.hbm %s3, %s3501
          %s3503 = sshll.u32 %s3493, 4
          %s3504 = int_to_ptr.vmem [resolvable:$true] %s3503
          %3509 = dma.vmem_to_hbm [thread:$0]  %s3504, 4096, %s3502, %s3490, 128, 128, 8
        $region36: #{tpu_custom_call.1} parent=31 // pred_fallthru
          _
      $region32: #{tpu_custom_call.1} parent=5 // pred_fallthru
        _
      %p3510 = scmp.le.s32.totalorder 2, %s12
      // Predicated region
      $region37: #{tpu_custom_call.1} parent=5 // pred_check
        %p3511 = pneg %p3510
      $region38: #{tpu_custom_call.1} parent=5 // pred_check_branch
        %3513 = sbr.rel (%p3511) target = $region40
      $region39: #{tpu_custom_call.1} parent=5 // pred_region
        %s3514 = ssub.s32 %s12, 2
        // Predicated region
        $region41: #{tpu_custom_call.1} parent=39 // pred_check
          %p3515 = pneg %p109
        $region42: #{tpu_custom_call.1} parent=39 // pred_check_branch
          %3517 = sbr.rel (%p3515) target = $region44
        $region43: #{tpu_custom_call.1} parent=39 // pred_region
          %s3518 = sand.u32 %s94, 1
          %s3519 = scalar_lea.sflag [#allocation3], %s3518
          %s3520 = sand.u32 %s94, 1
          %s3521 = smul.addr %s3520, 256
          %s3522 = scalar_lea.vmem [#allocation2], %s3521
          %3523 = dma.done %s3519, 4096
        $region44: #{tpu_custom_call.1} parent=39 // pred_fallthru
          _
      $region40: #{tpu_custom_call.1} parent=5 // pred_fallthru
        _
    $region6: #{tpu_custom_call.1} parent=1 // loop_footer
      %s16 = sadd.s32 1, %s12
    $region7: #{tpu_custom_call.1} parent=1 // loop_footer_branch
      %11 = sbr.rel target = $region3
    $region8: #{tpu_custom_call.1} parent=1 // loop_exit
      _
    %3524 = vsyncpa [#allocation3], 1
    %s3525 = scalar_lea.sflag [#allocation3], 1
    %3526 = vsyncpa %s3525, 1

</llo_original>
